<compile_context>
chip_gen: v7x
topology: tpu7x:2x2x1
jax: 0.10.0
libtpu: 0.0.40
codegen_flags: <defaults>
</compile_context>

<pallas_src>
import functools
import math

import jax
import jax.numpy as jnp
from jax import lax
from jax.experimental import pallas as pl
from jax.experimental.pallas import tpu as pltpu

C_HIDDEN = 32  # fixed by the module (c_hidden = 32, no_heads = c_s // 32)


def _attn_pair_bias_kernel(
    # inputs
    sn_ref,     # [tq, c_s]     f32   RMSNorm'd s rows for this query block
    kT_ref,     # [H*D, tk]     bf16  K transposed (per-head rows are sublanes)
    v_ref,      # [tk, H*D]     bf16
    bias_ref,   # [H, tq, tk]   bf16  pair bias + mask bias (precomputed)
    wq_ref,     # [c_s, H*D]    bf16  (1/sqrt(D) folded in)
    wg_ref,     # [c_s, c_s]    bf16
    bg_ref,     # [1, c_s]      f32
    wo_ref,     # [H*D, c_s]    bf16
    bo_ref,     # [1, c_s]      f32
    # output
    out_ref,    # [tq, c_s]     f32
    # scratch
    q_sc,       # [tq, H*D]     bf16  pre-scaled q for this query block
    g_sc,       # [tq, c_s]     f32   gate
    m_sc,       # [tq, H*D]     f32   running max, broadcast across each head's D lanes
    l_sc,       # [tq, H*D]     f32   running denom, broadcast likewise
    acc_sc,     # [tq, H*D]     f32   output accumulator
    *,
    no_heads: int,
):
  H, D = no_heads, C_HIDDEN
  j = pl.program_id(1)

  # ---- per-query-block init: q projection (scale folded), gate, softmax state --
  @pl.when(j == 0)
  def _init():
    sn = sn_ref[...].astype(jnp.bfloat16)
    q_sc[...] = jnp.dot(sn, wq_ref[...],
                        preferred_element_type=jnp.float32).astype(jnp.bfloat16)
    # NOTE: gate is a plain linear (no sigmoid) per the reference forward.
    g_sc[...] = jnp.dot(sn, wg_ref[...],
                        preferred_element_type=jnp.float32) + bg_ref[...]
    m_sc[...] = jnp.full(m_sc.shape, -1e30, jnp.float32)
    l_sc[...] = jnp.zeros(l_sc.shape, jnp.float32)
    acc_sc[...] = jnp.zeros(acc_sc.shape, jnp.float32)

  q = q_sc[...]                     # [tq, H*D] bf16
  m_prev = m_sc[...]                # [tq, H*D] f32 (broadcast form)
  tq = q.shape[0]

  # ---- per-head online-softmax step (H static -> unrolled); all scratch writes
  #      are collected into ONE full-width lane-dense store per tensor ----------
  m_pieces, alpha_pieces, lsum_pieces, pv_pieces = [], [], [], []
  for h in range(H):
    sl = slice(h * D, (h + 1) * D)
    qh = q[:, sl]                                     # [tq, D] bf16
    kh = kT_ref[sl, :]                                # [D, tk] bf16 (sublane slice)
    vh = v_ref[:, sl]                                 # [tk, D] bf16

    logits = jnp.dot(qh, kh, preferred_element_type=jnp.float32)   # [tq, tk]
    logits = logits + bias_ref[h].astype(jnp.float32)               # bias incl. mask

    m_prev_h = m_prev[:, h * D:h * D + 1]                           # [tq, 1]
    m_new_h = jnp.maximum(m_prev_h, jnp.max(logits, axis=-1, keepdims=True))
    p = jnp.exp(logits - m_new_h)                                   # [tq, tk]
    alpha_h = jnp.exp(m_prev_h - m_new_h)                           # [tq, 1]
    lsum_h = jnp.sum(p, axis=-1, keepdims=True)                     # [tq, 1]
    pv_h = jnp.dot(p.astype(jnp.bfloat16), vh,
                   preferred_element_type=jnp.float32)              # [tq, D]

    m_pieces.append(jnp.broadcast_to(m_new_h, (tq, D)))
    alpha_pieces.append(jnp.broadcast_to(alpha_h, (tq, D)))
    lsum_pieces.append(jnp.broadcast_to(lsum_h, (tq, D)))
    pv_pieces.append(pv_h)

  alpha_all = jnp.concatenate(alpha_pieces, axis=1)                 # [tq, H*D]
  m_sc[...] = jnp.concatenate(m_pieces, axis=1)
  l_sc[...] = alpha_all * l_sc[...] + jnp.concatenate(lsum_pieces, axis=1)
  acc_sc[...] = alpha_all * acc_sc[...] + jnp.concatenate(pv_pieces, axis=1)

  # ---- finalize: normalize, one wide bf16 output projection, gate --------------
  @pl.when(j == pl.num_programs(1) - 1)
  def _finalize():
    attn = (acc_sc[...] / l_sc[...]).astype(jnp.bfloat16)           # [tq, H*D]
    o = jnp.dot(attn, wo_ref[...],
                preferred_element_type=jnp.float32) + bo_ref[...]
    out_ref[...] = (o * g_sc[...]).astype(out_ref.dtype)


def attention_with_pair_bias(s, z, z_mask, params, *, inf, eps,
                             block_q=128, block_k=128):
  """s: [S, c_s] f32, z: [S, S, c_z], z_mask: [S, S] f32, params: dict of raw weights."""
  S, c_s = s.shape
  assert c_s % C_HIDDEN == 0
  H, D = c_s // C_HIDDEN, C_HIDDEN

  tq = min(block_q, S)
  tk = min(block_k, S)
  assert S % tq == 0 and S % tk == 0, "S must be divisible by the block sizes"

  wns, wnz = params["wns"], params["wnz"]
  wq, wk, wv, wz = params["wq"], params["wk"], params["wv"], params["wz"]
  wg, bg, wo, bo = params["wg"], params["bg"], params["wo"], params["bo"]

  f32 = jnp.float32
  bf16 = jnp.bfloat16

  # ---------------- XLA-side precompute (one pass over s and z) ----------------
  s32 = s.astype(f32)
  s_norm = s32 * lax.rsqrt(jnp.mean(s32 * s32, -1, keepdims=True) + eps) * wns
  kT_all = jnp.transpose(s_norm @ wk.astype(f32)).astype(bf16)     # [H*D, S]
  v_all = (s_norm @ wv.astype(f32)).astype(bf16)                   # [S, H*D]

  # Pair bias (RMSNorm(z) weight folded into wz) + mask bias, bf16 [H, S, S].
  zf = z.astype(f32)
  inv_rms_z = lax.rsqrt(jnp.mean(zf * zf, -1, keepdims=True) + eps)
  wz_eff = wnz.astype(f32)[:, None] * wz.astype(f32)               # [c_z, H]
  bias = jnp.einsum("ijc,ch->hij", zf * inv_rms_z, wz_eff)
  bias = bias + jnp.where(z_mask == 0.0, -inf, 0.0)[None]
  bias = bias.astype(bf16)                                         # [H, S, S]

  wq_s = (wq.astype(f32) / math.sqrt(D)).astype(bf16)              # scale folded
  wg_b = wg.astype(bf16)
  wo_b = wo.astype(bf16)
  bg_r = bg.reshape(1, c_s).astype(f32)
  bo_r = bo.reshape(1, c_s).astype(f32)

  kernel = functools.partial(_attn_pair_bias_kernel, no_heads=H)
  grid = (S // tq, S // tk)

  # advisory cost hint for the XLA scheduler (kernel-side work only)
  flops = int(6 * S * c_s * c_s + 4 * S * S * c_s)
  transcendentals = int(S * S * H + 2 * S * H * (S // tk))
  bytes_accessed = int(H * S * S * 2                      # bias stream
                       + (S // tq) * 2 * S * c_s * 2      # kT/v re-streamed per i
                       + 2 * S * c_s * 4                  # s_norm in, out
                       + 3 * c_s * c_s * 2)               # bf16 weights

  grid_spec = pltpu.PrefetchScalarGridSpec(
      num_scalar_prefetch=0,
      grid=grid,
      in_specs=[
          pl.BlockSpec((tq, c_s), lambda i, j: (i, 0)),          # s_norm (q rows)
          pl.BlockSpec((H * D, tk), lambda i, j: (0, j)),        # K^T tile
          pl.BlockSpec((tk, H * D), lambda i, j: (j, 0)),        # V tile
          pl.BlockSpec((H, tq, tk), lambda i, j: (0, i, j)),     # bias tile
          pl.BlockSpec((c_s, H * D), lambda i, j: (0, 0)),       # wq (scaled, bf16)
          pl.BlockSpec((c_s, c_s), lambda i, j: (0, 0)),         # wg (bf16)
          pl.BlockSpec((1, c_s), lambda i, j: (0, 0)),           # bg
          pl.BlockSpec((H * D, c_s), lambda i, j: (0, 0)),       # wo (bf16)
          pl.BlockSpec((1, c_s), lambda i, j: (0, 0)),           # bo
      ],
      out_specs=pl.BlockSpec((tq, c_s), lambda i, j: (i, 0)),
      scratch_shapes=[
          pltpu.VMEM((tq, H * D), jnp.bfloat16),   # q (pre-scaled)
          pltpu.VMEM((tq, c_s), jnp.float32),      # gate
          pltpu.VMEM((tq, H * D), jnp.float32),    # running max (broadcast form)
          pltpu.VMEM((tq, H * D), jnp.float32),    # running denom (broadcast form)
          pltpu.VMEM((tq, H * D), jnp.float32),    # output accumulator
      ],
  )

  return pl.pallas_call(
      kernel,
      out_shape=jax.ShapeDtypeStruct((S, c_s), jnp.float32),
      grid_spec=grid_spec,
      compiler_params=pltpu.CompilerParams(
          # Query axis is data-parallel (megacore / 2-TC sharding on v7x; use
          # CORE_PARALLEL/core_map if plain "parallel" doesn't split it there);
          # kv axis carries the online-softmax reduction.
          dimension_semantics=("parallel", "arbitrary"),
          # Total live VMEM is now only a few MiB at 128x128 tiles, so this is
          # safe on v7x (64 MiB physical); on v6e raise block_k to 256 and the
          # limit toward ~96 MiB.
          vmem_limit_bytes=48 << 20,
      ),
      cost_estimate=pl.CostEstimate(
          flops=flops, transcendentals=transcendentals,
          bytes_accessed=bytes_accessed),
  )(s_norm, kT_all, v_all, bias, wq_s, wg_b, bg_r, wo_b, bo_r)


def _reference(s, z, z_mask, params, *, inf, eps):
  """Pure-JAX f32 reproduction of the PyTorch forward (weights as [in, out])."""
  wns, wnz = params["wns"], params["wnz"]
  wq, wk, wv, wz = params["wq"], params["wk"], params["wv"], params["wz"]
  wg, bg, wo, bo = params["wg"], params["bg"], params["wo"], params["bo"]
  S, c_s = s.shape
  H, D = c_s // C_HIDDEN, C_HIDDEN

  s_norm = s * lax.rsqrt(jnp.mean(s * s, -1, keepdims=True) + eps) * wns
  z_norm = z * lax.rsqrt(jnp.mean(z * z, -1, keepdims=True) + eps) * wnz

  q = (s_norm @ wq).reshape(S, H, D).transpose(1, 0, 2)
  k = (s_norm @ wk).reshape(S, H, D).transpose(1, 0, 2)
  v = (s_norm @ wv).reshape(S, H, D).transpose(1, 0, 2)
  g = s_norm @ wg + bg

  bias = jnp.einsum("ijc,ch->hij", z_norm, wz)
  bias = bias + jnp.where(z_mask == 0.0, -inf, 0.0)[None]

  logits = jnp.einsum("hqd,hkd->hqk", q, k) / math.sqrt(D) + bias
  p = jax.nn.softmax(logits, axis=-1)
  attn = jnp.einsum("hqk,hkd->hqd", p, v).transpose(1, 0, 2).reshape(S, H * D)
  return ((attn @ wo + bo) * g).astype(jnp.float32)


if __name__ == "__main__":
  # Small but TPU-friendly shapes: c_s multiple of 32 (H = 2 heads), S divisible
  # by the 128x128 tiles so both grid axes and the online softmax are exercised.
  S, c_s, c_z = 256, 64, 32
  H, D = c_s // C_HIDDEN, C_HIDDEN
  inf, eps = 1e9, 1e-5

  key = jax.random.PRNGKey(0)
  ks = jax.random.split(key, 13)

  s = jax.random.normal(ks[0], (S, c_s), jnp.float32)
  z = jax.random.normal(ks[1], (S, S, c_z), jnp.float32)
  z_mask = (jax.random.uniform(ks[2], (S, S)) < 0.8).astype(jnp.float32)
  z_mask = jnp.maximum(z_mask, jnp.eye(S, dtype=jnp.float32))  # no fully-masked rows

  scale = 0.05
  params = {
      "wns": 1.0 + scale * jax.random.normal(ks[3], (c_s,), jnp.float32),
      "wnz": 1.0 + scale * jax.random.normal(ks[4], (c_z,), jnp.float32),
      "wq": scale * jax.random.normal(ks[5], (c_s, H * D), jnp.float32),
      "wk": scale * jax.random.normal(ks[6], (c_s, H * D), jnp.float32),
      "wv": scale * jax.random.normal(ks[7], (c_s, H * D), jnp.float32),
      "wz": scale * jax.random.normal(ks[8], (c_z, H), jnp.float32),
      "wg": scale * jax.random.normal(ks[9], (c_s, c_s), jnp.float32),
      "bg": scale * jax.random.normal(ks[10], (c_s,), jnp.float32),
      "wo": scale * jax.random.normal(ks[11], (c_s, c_s), jnp.float32),
      "bo": scale * jax.random.normal(ks[12], (c_s,), jnp.float32),
  }

  fwd = jax.jit(functools.partial(attention_with_pair_bias,
                                  inf=inf, eps=eps, block_q=128, block_k=128))
  out = jax.block_until_ready(fwd(s, z, z_mask, params))

  ref = _reference(s, z, z_mask, params, inf=inf, eps=eps)
  assert out.shape == (S, c_s) and out.dtype == jnp.float32
  max_err = float(jnp.max(jnp.abs(out - ref)))
  assert jnp.allclose(out, ref, atol=1e-2, rtol=1e-2), max_err

  print("KERNEL_OK")
</pallas_src>

<mosaic_0001>
module attributes {stable_mosaic.version = 11 : i64} {
  func.func @_attn_pair_bias_kernel(%arg0: i32, %arg1: i32, %arg2: memref<128x64xf32, #tpu.memory_space<vmem>>, %arg3: memref<64x128xbf16, #tpu.memory_space<vmem>>, %arg4: memref<128x64xbf16, #tpu.memory_space<vmem>>, %arg5: memref<2x128x128xbf16, #tpu.memory_space<vmem>>, %arg6: memref<64x64xbf16, #tpu.memory_space<vmem>>, %arg7: memref<64x64xbf16, #tpu.memory_space<vmem>>, %arg8: memref<1x64xf32, #tpu.memory_space<vmem>>, %arg9: memref<64x64xbf16, #tpu.memory_space<vmem>>, %arg10: memref<1x64xf32, #tpu.memory_space<vmem>>, %arg11: memref<128x64xf32, #tpu.memory_space<vmem>>, %arg12: memref<128x64xbf16, #tpu.memory_space<vmem>>, %arg13: memref<128x64xf32, #tpu.memory_space<vmem>>, %arg14: memref<128x64xf32, #tpu.memory_space<vmem>>, %arg15: memref<128x64xf32, #tpu.memory_space<vmem>>, %arg16: memref<128x64xf32, #tpu.memory_space<vmem>>) attributes {dimension_semantics = [#tpu.dimension_semantics<parallel>, #tpu.dimension_semantics<arbitrary>], iteration_bounds = array<i64: 2, 2>, scalar_prefetch = 0 : i64, scratch_operands = 5 : i64, tpu.core_type = #tpu.core_type<tc>, window_params = [{transform_indices = @transform_0, window_bounds = array<i64: 128, 64>}, {transform_indices = @transform_1, window_bounds = array<i64: 64, 128>}, {transform_indices = @transform_2, window_bounds = array<i64: 128, 64>}, {transform_indices = @transform_3, window_bounds = array<i64: 2, 128, 128>}, {pipeline_mode = #tpu.pipeline_mode<synchronous>, transform_indices = @transform_4, window_bounds = array<i64: 64, 64>}, {pipeline_mode = #tpu.pipeline_mode<synchronous>, transform_indices = @transform_5, window_bounds = array<i64: 64, 64>}, {pipeline_mode = #tpu.pipeline_mode<synchronous>, transform_indices = @transform_6, window_bounds = array<i64: 1, 64>}, {pipeline_mode = #tpu.pipeline_mode<synchronous>, transform_indices = @transform_7, window_bounds = array<i64: 64, 64>}, {pipeline_mode = #tpu.pipeline_mode<synchronous>, transform_indices = @transform_8, window_bounds = array<i64: 1, 64>}, {transform_indices = @transform_9, window_bounds = array<i64: 128, 64>}]} {
    %c0_i32 = arith.constant 0 : i32
    %0 = arith.cmpi eq, %arg1, %c0_i32 : i32
    %1 = arith.extui %0 : i1 to i32
    %c0_i32_0 = arith.constant 0 : i32
    %2 = arith.cmpi ne, %1, %c0_i32_0 : i32
    scf.if %2 {
      %c0_34 = arith.constant 0 : index
      %c0_35 = arith.constant 0 : index
      %75 = vector.load %arg2[%c0_34, %c0_35] : memref<128x64xf32, #tpu.memory_space<vmem>>, vector<128x64xf32>
      %76 = arith.truncf %75 : vector<128x64xf32> to vector<128x64xbf16>
      %c0_36 = arith.constant 0 : index
      %c0_37 = arith.constant 0 : index
      %77 = vector.load %arg6[%c0_36, %c0_37] : memref<64x64xbf16, #tpu.memory_space<vmem>>, vector<64x64xbf16>
      %cst_38 = arith.constant dense<0.000000e+00> : vector<128x64xf32>
      %78 = tpu.matmul %76, %77, %cst_38 {dimension_numbers = #tpu.dot_dimension_numbers<[1], [0], [0], [1], [0, 0, 1, 1], [], []>} : vector<128x64xbf16>, vector<64x64xbf16>, vector<128x64xf32> -> vector<128x64xf32>
      %79 = arith.truncf %78 : vector<128x64xf32> to vector<128x64xbf16>
      %c0_39 = arith.constant 0 : index
      %c0_40 = arith.constant 0 : index
      %80 = vector.load %arg12[%c0_39, %c0_40] : memref<128x64xbf16, #tpu.memory_space<vmem>>, vector<128x64xbf16>
      tpu.vector_store %arg12[%c0_39, %c0_40], %79 {strides = array<i32>} : memref<128x64xbf16, #tpu.memory_space<vmem>>, vector<128x64xbf16>,
      %c0_41 = arith.constant 0 : index
      %c0_42 = arith.constant 0 : index
      %81 = vector.load %arg7[%c0_41, %c0_42] : memref<64x64xbf16, #tpu.memory_space<vmem>>, vector<64x64xbf16>
      %cst_43 = arith.constant dense<0.000000e+00> : vector<128x64xf32>
      %82 = tpu.matmul %76, %81, %cst_43 {dimension_numbers = #tpu.dot_dimension_numbers<[1], [0], [0], [1], [0, 0, 1, 1], [], []>} : vector<128x64xbf16>, vector<64x64xbf16>, vector<128x64xf32> -> vector<128x64xf32>
      %c0_44 = arith.constant 0 : index
      %c0_45 = arith.constant 0 : index
      %83 = vector.load %arg8[%c0_44, %c0_45] : memref<1x64xf32, #tpu.memory_space<vmem>>, vector<1x64xf32>
      %84 = vector.broadcast %83 : vector<1x64xf32> to vector<128x64xf32>
      %85 = arith.addf %82, %84 : vector<128x64xf32>
      %c0_46 = arith.constant 0 : index
      %c0_47 = arith.constant 0 : index
      %86 = vector.load %arg13[%c0_46, %c0_47] : memref<128x64xf32, #tpu.memory_space<vmem>>, vector<128x64xf32>
      tpu.vector_store %arg13[%c0_46, %c0_47], %85 {strides = array<i32>} : memref<128x64xf32, #tpu.memory_space<vmem>>, vector<128x64xf32>,
      %cst_48 = arith.constant -1.000000e+30 : f32
      %87 = vector.broadcast %cst_48 : f32 to vector<128x64xf32>
      %c0_49 = arith.constant 0 : index
      %c0_50 = arith.constant 0 : index
      %88 = vector.load %arg14[%c0_49, %c0_50] : memref<128x64xf32, #tpu.memory_space<vmem>>, vector<128x64xf32>
      tpu.vector_store %arg14[%c0_49, %c0_50], %87 {strides = array<i32>} : memref<128x64xf32, #tpu.memory_space<vmem>>, vector<128x64xf32>,
      %cst_51 = arith.constant 0.000000e+00 : f32
      %89 = vector.broadcast %cst_51 : f32 to vector<128x64xf32>
      %c0_52 = arith.constant 0 : index
      %c0_53 = arith.constant 0 : index
      %90 = vector.load %arg15[%c0_52, %c0_53] : memref<128x64xf32, #tpu.memory_space<vmem>>, vector<128x64xf32>
      tpu.vector_store %arg15[%c0_52, %c0_53], %89 {strides = array<i32>} : memref<128x64xf32, #tpu.memory_space<vmem>>, vector<128x64xf32>,
      %cst_54 = arith.constant 0.000000e+00 : f32
      %91 = vector.broadcast %cst_54 : f32 to vector<128x64xf32>
      %c0_55 = arith.constant 0 : index
      %c0_56 = arith.constant 0 : index
      %92 = vector.load %arg16[%c0_55, %c0_56] : memref<128x64xf32, #tpu.memory_space<vmem>>, vector<128x64xf32>
      tpu.vector_store %arg16[%c0_55, %c0_56], %91 {strides = array<i32>} : memref<128x64xf32, #tpu.memory_space<vmem>>, vector<128x64xf32>,
    } else {
    }
    %c0 = arith.constant 0 : index
    %c0_1 = arith.constant 0 : index
    %3 = vector.load %arg12[%c0, %c0_1] : memref<128x64xbf16, #tpu.memory_space<vmem>>, vector<128x64xbf16>
    %c0_2 = arith.constant 0 : index
    %c0_3 = arith.constant 0 : index
    %4 = vector.load %arg14[%c0_2, %c0_3] : memref<128x64xf32, #tpu.memory_space<vmem>>, vector<128x64xf32>
    %5 = vector.extract_strided_slice %3 {offsets = [0, 0], sizes = [128, 32], strides = [1, 1]} : vector<128x64xbf16> to vector<128x32xbf16>
    %c0_4 = arith.constant 0 : index
    %c0_5 = arith.constant 0 : index
    %6 = vector.load %arg3[%c0_4, %c0_5] : memref<64x128xbf16, #tpu.memory_space<vmem>>, vector<32x128xbf16>
    %c0_6 = arith.constant 0 : index
    %c0_7 = arith.constant 0 : index
    %7 = vector.load %arg4[%c0_6, %c0_7] : memref<128x64xbf16, #tpu.memory_space<vmem>>, vector<128x32xbf16>
    %cst = arith.constant dense<0.000000e+00> : vector<128x128xf32>
    %8 = tpu.matmul %5, %6, %cst {dimension_numbers = #tpu.dot_dimension_numbers<[1], [0], [0], [1], [0, 0, 1, 1], [], []>} : vector<128x32xbf16>, vector<32x128xbf16>, vector<128x128xf32> -> vector<128x128xf32>
    %c0_8 = arith.constant 0 : index
    %c0_9 = arith.constant 0 : index
    %c0_10 = arith.constant 0 : index
    %9 = vector.load %arg5[%c0_8, %c0_9, %c0_10] : memref<2x128x128xbf16, #tpu.memory_space<vmem>>, vector<1x128x128xbf16>
    %10 = vector.shape_cast %9 : vector<1x128x128xbf16> to vector<128x128xbf16>
    %11 = arith.extf %10 : vector<128x128xbf16> to vector<128x128xf32>
    %12 = arith.addf %8, %11 : vector<128x128xf32>
    %13 = vector.extract_strided_slice %4 {offsets = [0, 0], sizes = [128, 1], strides = [1, 1]} : vector<128x64xf32> to vector<128x1xf32>
    %cst_11 = arith.constant dense<0xFF800000> : vector<128xf32>
    %14 = vector.multi_reduction <maximumf>, %12, %cst_11 [1] : vector<128x128xf32> to vector<128xf32>
    %15 = vector.shape_cast %14 : vector<128xf32> to vector<128x1xf32>
    %16 = arith.maximumf %13, %15 : vector<128x1xf32>
    %17 = vector.broadcast %16 : vector<128x1xf32> to vector<128x128xf32>
    %18 = arith.subf %12, %17 : vector<128x128xf32>
    %19 = math.exp %18 : vector<128x128xf32>
    %20 = arith.subf %13, %16 : vector<128x1xf32>
    %21 = math.exp %20 : vector<128x1xf32>
    %cst_12 = arith.constant dense<0.000000e+00> : vector<128xf32>
    %22 = vector.multi_reduction <add>, %19, %cst_12 [1] : vector<128x128xf32> to vector<128xf32>
    %23 = vector.shape_cast %22 : vector<128xf32> to vector<128x1xf32>
    %24 = arith.truncf %19 : vector<128x128xf32> to vector<128x128xbf16>
    %cst_13 = arith.constant dense<0.000000e+00> : vector<128x32xf32>
    %25 = tpu.matmul %24, %7, %cst_13 {dimension_numbers = #tpu.dot_dimension_numbers<[1], [0], [0], [1], [0, 0, 1, 1], [], []>} : vector<128x128xbf16>, vector<128x32xbf16>, vector<128x32xf32> -> vector<128x32xf32>
    %26 = vector.shape_cast %16 : vector<128x1xf32> to vector<128x1xf32>
    %27 = vector.broadcast %26 : vector<128x1xf32> to vector<128x32xf32>
    %28 = vector.shape_cast %21 : vector<128x1xf32> to vector<128x1xf32>
    %29 = vector.broadcast %28 : vector<128x1xf32> to vector<128x32xf32>
    %30 = vector.shape_cast %23 : vector<128x1xf32> to vector<128x1xf32>
    %31 = vector.broadcast %30 : vector<128x1xf32> to vector<128x32xf32>
    %32 = vector.extract_strided_slice %3 {offsets = [0, 32], sizes = [128, 32], strides = [1, 1]} : vector<128x64xbf16> to vector<128x32xbf16>
    %c32 = arith.constant 32 : index
    %c0_14 = arith.constant 0 : index
    %33 = vector.load %arg3[%c32, %c0_14] : memref<64x128xbf16, #tpu.memory_space<vmem>>, vector<32x128xbf16>
    %c0_15 = arith.constant 0 : index
    %c32_16 = arith.constant 32 : index
    %34 = vector.load %arg4[%c0_15, %c32_16] : memref<128x64xbf16, #tpu.memory_space<vmem>>, vector<128x32xbf16>
    %cst_17 = arith.constant dense<0.000000e+00> : vector<128x128xf32>
    %35 = tpu.matmul %32, %33, %cst_17 {dimension_numbers = #tpu.dot_dimension_numbers<[1], [0], [0], [1], [0, 0, 1, 1], [], []>} : vector<128x32xbf16>, vector<32x128xbf16>, vector<128x128xf32> -> vector<128x128xf32>
    %c1 = arith.constant 1 : index
    %c0_18 = arith.constant 0 : index
    %c0_19 = arith.constant 0 : index
    %36 = vector.load %arg5[%c1, %c0_18, %c0_19] : memref<2x128x128xbf16, #tpu.memory_space<vmem>>, vector<1x128x128xbf16>
    %37 = vector.shape_cast %36 : vector<1x128x128xbf16> to vector<128x128xbf16>
    %38 = arith.extf %37 : vector<128x128xbf16> to vector<128x128xf32>
    %39 = arith.addf %35, %38 : vector<128x128xf32>
    %40 = vector.extract_strided_slice %4 {offsets = [0, 32], sizes = [128, 1], strides = [1, 1]} : vector<128x64xf32> to vector<128x1xf32>
    %cst_20 = arith.constant dense<0xFF800000> : vector<128xf32>
    %41 = vector.multi_reduction <maximumf>, %39, %cst_20 [1] : vector<128x128xf32> to vector<128xf32>
    %42 = vector.shape_cast %41 : vector<128xf32> to vector<128x1xf32>
    %43 = arith.maximumf %40, %42 : vector<128x1xf32>
    %44 = vector.broadcast %43 : vector<128x1xf32> to vector<128x128xf32>
    %45 = arith.subf %39, %44 : vector<128x128xf32>
    %46 = math.exp %45 : vector<128x128xf32>
    %47 = arith.subf %40, %43 : vector<128x1xf32>
    %48 = math.exp %47 : vector<128x1xf32>
    %cst_21 = arith.constant dense<0.000000e+00> : vector<128xf32>
    %49 = vector.multi_reduction <add>, %46, %cst_21 [1] : vector<128x128xf32> to vector<128xf32>
    %50 = vector.shape_cast %49 : vector<128xf32> to vector<128x1xf32>
    %51 = arith.truncf %46 : vector<128x128xf32> to vector<128x128xbf16>
    %cst_22 = arith.constant dense<0.000000e+00> : vector<128x32xf32>
    %52 = tpu.matmul %51, %34, %cst_22 {dimension_numbers = #tpu.dot_dimension_numbers<[1], [0], [0], [1], [0, 0, 1, 1], [], []>} : vector<128x128xbf16>, vector<128x32xbf16>, vector<128x32xf32> -> vector<128x32xf32>
    %53 = vector.shape_cast %43 : vector<128x1xf32> to vector<128x1xf32>
    %54 = vector.broadcast %53 : vector<128x1xf32> to vector<128x32xf32>
    %55 = vector.shape_cast %48 : vector<128x1xf32> to vector<128x1xf32>
    %56 = vector.broadcast %55 : vector<128x1xf32> to vector<128x32xf32>
    %57 = vector.shape_cast %50 : vector<128x1xf32> to vector<128x1xf32>
    %58 = vector.broadcast %57 : vector<128x1xf32> to vector<128x32xf32>
    %59 = tpu.concatenate %29, %56 in 1 : vector<128x32xf32>, vector<128x32xf32> -> vector<128x64xf32>
    %60 = tpu.concatenate %27, %54 in 1 : vector<128x32xf32>, vector<128x32xf32> -> vector<128x64xf32>
    %c0_23 = arith.constant 0 : index
    %c0_24 = arith.constant 0 : index
    %61 = vector.load %arg14[%c0_23, %c0_24] : memref<128x64xf32, #tpu.memory_space<vmem>>, vector<128x64xf32>
    tpu.vector_store %arg14[%c0_23, %c0_24], %60 {strides = array<i32>} : memref<128x64xf32, #tpu.memory_space<vmem>>, vector<128x64xf32>,
    %c0_25 = arith.constant 0 : index
    %c0_26 = arith.constant 0 : index
    %62 = vector.load %arg15[%c0_25, %c0_26] : memref<128x64xf32, #tpu.memory_space<vmem>>, vector<128x64xf32>
    %63 = arith.mulf %59, %62 : vector<128x64xf32>
    %64 = tpu.concatenate %31, %58 in 1 : vector<128x32xf32>, vector<128x32xf32> -> vector<128x64xf32>
    %65 = arith.addf %63, %64 : vector<128x64xf32>
    %c0_27 = arith.constant 0 : index
    %c0_28 = arith.constant 0 : index
    %66 = vector.load %arg15[%c0_27, %c0_28] : memref<128x64xf32, #tpu.memory_space<vmem>>, vector<128x64xf32>
    tpu.vector_store %arg15[%c0_27, %c0_28], %65 {strides = array<i32>} : memref<128x64xf32, #tpu.memory_space<vmem>>, vector<128x64xf32>,
    %c0_29 = arith.constant 0 : index
    %c0_30 = arith.constant 0 : index
    %67 = vector.load %arg16[%c0_29, %c0_30] : memref<128x64xf32, #tpu.memory_space<vmem>>, vector<128x64xf32>
    %68 = arith.mulf %59, %67 : vector<128x64xf32>
    %69 = tpu.concatenate %25, %52 in 1 : vector<128x32xf32>, vector<128x32xf32> -> vector<128x64xf32>
    %70 = arith.addf %68, %69 : vector<128x64xf32>
    %c0_31 = arith.constant 0 : index
    %c0_32 = arith.constant 0 : index
    %71 = vector.load %arg16[%c0_31, %c0_32] : memref<128x64xf32, #tpu.memory_space<vmem>>, vector<128x64xf32>
    tpu.vector_store %arg16[%c0_31, %c0_32], %70 {strides = array<i32>} : memref<128x64xf32, #tpu.memory_space<vmem>>, vector<128x64xf32>,
    %c1_i32 = arith.constant 1 : i32
    %72 = arith.cmpi eq, %arg1, %c1_i32 : i32
    %73 = arith.extui %72 : i1 to i32
    %c0_i32_33 = arith.constant 0 : i32
    %74 = arith.cmpi ne, %73, %c0_i32_33 : i32
    scf.if %74 {
      %c0_34 = arith.constant 0 : index
      %c0_35 = arith.constant 0 : index
      %75 = vector.load %arg16[%c0_34, %c0_35] : memref<128x64xf32, #tpu.memory_space<vmem>>, vector<128x64xf32>
      %c0_36 = arith.constant 0 : index
      %c0_37 = arith.constant 0 : index
      %76 = vector.load %arg15[%c0_36, %c0_37] : memref<128x64xf32, #tpu.memory_space<vmem>>, vector<128x64xf32>
      %77 = arith.divf %75, %76 : vector<128x64xf32>
      %78 = arith.truncf %77 : vector<128x64xf32> to vector<128x64xbf16>
      %c0_38 = arith.constant 0 : index
      %c0_39 = arith.constant 0 : index
      %79 = vector.load %arg9[%c0_38, %c0_39] : memref<64x64xbf16, #tpu.memory_space<vmem>>, vector<64x64xbf16>
      %cst_40 = arith.constant dense<0.000000e+00> : vector<128x64xf32>
      %80 = tpu.matmul %78, %79, %cst_40 {dimension_numbers = #tpu.dot_dimension_numbers<[1], [0], [0], [1], [0, 0, 1, 1], [], []>} : vector<128x64xbf16>, vector<64x64xbf16>, vector<128x64xf32> -> vector<128x64xf32>
      %c0_41 = arith.constant 0 : index
      %c0_42 = arith.constant 0 : index
      %81 = vector.load %arg10[%c0_41, %c0_42] : memref<1x64xf32, #tpu.memory_space<vmem>>, vector<1x64xf32>
      %82 = vector.broadcast %81 : vector<1x64xf32> to vector<128x64xf32>
      %83 = arith.addf %80, %82 : vector<128x64xf32>
      %c0_43 = arith.constant 0 : index
      %c0_44 = arith.constant 0 : index
      %84 = vector.load %arg13[%c0_43, %c0_44] : memref<128x64xf32, #tpu.memory_space<vmem>>, vector<128x64xf32>
      %85 = arith.mulf %83, %84 : vector<128x64xf32>
      %c0_45 = arith.constant 0 : index
      %c0_46 = arith.constant 0 : index
      %86 = vector.load %arg11[%c0_45, %c0_46] : memref<128x64xf32, #tpu.memory_space<vmem>>, vector<128x64xf32>
      tpu.vector_store %arg11[%c0_45, %c0_46], %85 {strides = array<i32>} : memref<128x64xf32, #tpu.memory_space<vmem>>, vector<128x64xf32>,
    } else {
    }
    return
  }
  func.func @transform_0(%arg0: i32, %arg1: i32) -> (i32, i32) {
    %c0_i32 = arith.constant 0 : i32
    %c0_i32_0 = arith.constant 0 : i32
    return %arg0, %c0_i32 : i32, i32
  }
  func.func @transform_1(%arg0: i32, %arg1: i32) -> (i32, i32) {
    %c0_i32 = arith.constant 0 : i32
    %c0_i32_0 = arith.constant 0 : i32
    return %c0_i32, %arg1 : i32, i32
  }
  func.func @transform_2(%arg0: i32, %arg1: i32) -> (i32, i32) {
    %c0_i32 = arith.constant 0 : i32
    %c0_i32_0 = arith.constant 0 : i32
    return %arg1, %c0_i32 : i32, i32
  }
  func.func @transform_3(%arg0: i32, %arg1: i32) -> (i32, i32, i32) {
    %c0_i32 = arith.constant 0 : i32
    %c0_i32_0 = arith.constant 0 : i32
    return %c0_i32, %arg0, %arg1 : i32, i32, i32
  }
  func.func @transform_4(%arg0: i32, %arg1: i32) -> (i32, i32) {
    %c0_i32 = arith.constant 0 : i32
    %c0_i32_0 = arith.constant 0 : i32
    %c0_i32_1 = arith.constant 0 : i32
    return %c0_i32, %c0_i32_0 : i32, i32
  }
  func.func @transform_5(%arg0: i32, %arg1: i32) -> (i32, i32) {
    %c0_i32 = arith.constant 0 : i32
    %c0_i32_0 = arith.constant 0 : i32
    %c0_i32_1 = arith.constant 0 : i32
    return %c0_i32, %c0_i32_0 : i32, i32
  }
  func.func @transform_6(%arg0: i32, %arg1: i32) -> (i32, i32) {
    %c0_i32 = arith.constant 0 : i32
    %c0_i32_0 = arith.constant 0 : i32
    %c0_i32_1 = arith.constant 0 : i32
    return %c0_i32, %c0_i32_0 : i32, i32
  }
  func.func @transform_7(%arg0: i32, %arg1: i32) -> (i32, i32) {
    %c0_i32 = arith.constant 0 : i32
    %c0_i32_0 = arith.constant 0 : i32
    %c0_i32_1 = arith.constant 0 : i32
    return %c0_i32, %c0_i32_0 : i32, i32
  }
  func.func @transform_8(%arg0: i32, %arg1: i32) -> (i32, i32) {
    %c0_i32 = arith.constant 0 : i32
    %c0_i32_0 = arith.constant 0 : i32
    %c0_i32_1 = arith.constant 0 : i32
    return %c0_i32, %c0_i32_0 : i32, i32
  }
  func.func @transform_9(%arg0: i32, %arg1: i32) -> (i32, i32) {
    %c0_i32 = arith.constant 0 : i32
    %c0_i32_0 = arith.constant 0 : i32
    return %arg0, %c0_i32 : i32, i32
  }
}

</mosaic_0001>

<llo_original>
// kernel: attention_with_pair_bias.1
$region0: #{attention_with_pair_bias.1}
  #allocation0 [shape = 'u32[]', space=smem, size = 0x4, offset = 0x4, fixed_abs, tag = 'smem constant byte address 0x4 - core index']
  #allocation1 [shape = 'u32[144,128]{1,0:T(1,128)}', space=vmem, size = 0x12000, scoped, tag = 'internal scratch']
  #allocation2 [shape = 'bf16[128,64]{1,0:T(16,128)(2,1)}', space=vmem, size = 0x8000, scoped, tag = 'scratch operand']
  #allocation3 [shape = 'f32[128,64]{1,0:T(8,128)}', space=vmem, size = 0x10000, scoped, tag = 'scratch operand']
  #allocation4 [shape = 'f32[128,64]{1,0:T(8,128)}', space=vmem, size = 0x10000, scoped, tag = 'scratch operand']
  #allocation5 [shape = 'f32[128,64]{1,0:T(8,128)}', space=vmem, size = 0x10000, scoped, tag = 'scratch operand']
  #allocation6 [shape = 'f32[128,64]{1,0:T(8,128)}', space=vmem, size = 0x10000, scoped, tag = 'scratch operand']
  %s0 = inlined_call_operand.vmem [shape: f32[256,64], index: 0, kind: input, shape index: {}]
  %s1 = inlined_call_operand.vmem [shape: bf16[64,256], index: 1, kind: input, shape index: {}]
  %s2 = inlined_call_operand.vmem [shape: bf16[256,64], index: 2, kind: input, shape index: {}]
  %s3 = inlined_call_operand.vmem [shape: bf16[2,256,256], index: 3, kind: input, shape index: {}]
  %s4 = inlined_call_operand.vmem [shape: bf16[64,64], index: 4, kind: input, shape index: {}]
  %s5 = inlined_call_operand.vmem [shape: bf16[64,64], index: 5, kind: input, shape index: {}]
  %s6 = inlined_call_operand.vmem [shape: f32[1,64], index: 6, kind: input, shape index: {}]
  %s7 = inlined_call_operand.vmem [shape: bf16[64,64], index: 7, kind: input, shape index: {}]
  %s8 = inlined_call_operand.vmem [shape: f32[1,64], index: 8, kind: input, shape index: {}]
  %s9 = inlined_call_operand.vmem [shape: f32[256,64], index: 9, kind: output, shape index: {}]
  %s10 = sld [smem:[#allocation0]]
  $region159: #{attention_with_pair_bias.1} parent=0
    _
  %s12 = ssub.s32 1, %s10
  %s13 = scalar_select 0, %s12, %s10
  $region1: #{attention_with_pair_bias.1} parent=0
    #allocation7 [shape = 'u8[32768]{0}', space=vmem, size = 0x8000, scoped, tag = 'input window, operand 1']
    #allocation8 [shape = 'u8[131072]{0}', space=vmem, size = 0x20000, scoped, tag = 'input window, operand 3']
    loop: start=0, step=1, limit=6
    $region2: #{attention_with_pair_bias.1} parent=1 // loop_pre_header
      _
    $region3: #{attention_with_pair_bias.1} parent=1 // loop_header
      %s15 = sphi 0, %s19
      %p16 = scmp.ge.s32.totalorder %s15, 6
      %s22 = sphi 0, %s34
      %s23 = sphi 0, %s30
      %s24 = sphi 0, %s22
      %s25 = sphi 0, %s23
      %s26 = sphi 0, %s24
      %s27 = sphi 0, %s25
      %s37 = sphi 0, %s39
      %s40 = sphi 0, %s37
      %s41 = sphi 0, %s40
      %s57 = sphi 0, %s41
      %s63 = sphi 0, %s65
      %s66 = sphi 0, %s63
      %s67 = sphi 0, %s66
      %s83 = sphi 0, %s67
      %s89 = sphi 0, %s91
      %s92 = sphi 0, %s89
      %s93 = sphi 0, %s92
      %s109 = sphi 0, %s93
      %s117 = sphi 0, %s119
      %s120 = sphi 0, %s117
      %s121 = sphi 0, %s120
      %s137 = sphi 0, %s121
      %s141 = sphi 0, %s141
      %s143 = sphi 0, %s141
      %s144 = sphi 0, %s143
      %s158 = sphi 0, %s144
      %s162 = sphi 0, %s162
      %s164 = sphi 0, %s162
      %s165 = sphi 0, %s164
      %s179 = sphi 0, %s165
      %s183 = sphi 0, %s183
      %s185 = sphi 0, %s183
      %s186 = sphi 0, %s185
      %s200 = sphi 0, %s186
      %s204 = sphi 0, %s204
      %s206 = sphi 0, %s204
      %s207 = sphi 0, %s206
      %s221 = sphi 0, %s207
      %s225 = sphi 0, %s225
      %s227 = sphi 0, %s225
      %s228 = sphi 0, %s227
      %s242 = sphi 0, %s228
      %s248 = sphi 0, %s250
      %s251 = sphi 0, %s248
      %s252 = sphi 0, %s251
      %s268 = sphi 0, %s252
    $region4: #{attention_with_pair_bias.1} parent=1 // loop_header_branch
      %18 = sbr.rel (%p16) target = $region8
    $region5: #{attention_with_pair_bias.1} parent=1 // loop_body
      %s20 = ssub.s32 %s15, 1
      %s21 = ssub.s32 %s15, 2
      %s28 = sadd.s32 1, %s23
      %p29 = scmp.ge.s32.totalorder %s28, 2
      %s30 = scalar_select %p29, 0, %s28
      %s31 = sadd.s32 1, %s22
      %s32 = scalar_select %p29, %s31, %s22
      %p33 = scmp.ge.s32.totalorder %s32, 2
      %s34 = scalar_select %p33, 0, %s32
      %s35 = ssub.s32 %s22, %s34
      %p36 = scmp.eq.s32.totalorder %s35, 0
      %s38 = sadd.s32 %s37, 1
      %s39 = scalar_select %p36, %s37, %s38
      %p42 = pneg %p36
      %p43 = scmp.eq.s32.totalorder %s15, 3
      %p44 = por %p42, %p43
      %p45 = scmp.ne.s32.totalorder %s37, %s40
      %p46 = scmp.eq.s32.totalorder %s15, 0
      %p47 = por %p45, %p46
      %p48 = scmp.ne.s32.totalorder %s37, %s40
      %p49 = scmp.eq.s32.totalorder %s20, 3
      %p50 = por %p48, %p49
      %p51 = scmp.ne.s32.totalorder %s40, %s41
      %p52 = scmp.eq.s32.totalorder %s20, 0
      %p53 = por %p51, %p52
      %p54 = scmp.ne.s32.totalorder %s40, %s41
      %p55 = scmp.eq.s32.totalorder %s21, 3
      %p56 = por %p54, %p55
      %p58 = scmp.ne.s32.totalorder %s41, %s57
      %p59 = scmp.eq.s32.totalorder %s21, 0
      %p60 = por %p58, %p59
      %s61 = ssub.s32 %s23, %s30
      %p62 = scmp.eq.s32.totalorder %s61, 0
      %s64 = sadd.s32 %s63, 1
      %s65 = scalar_select %p62, %s63, %s64
      %p68 = pneg %p62
      %p69 = scmp.eq.s32.totalorder %s15, 3
      %p70 = por %p68, %p69
      %p71 = scmp.ne.s32.totalorder %s63, %s66
      %p72 = scmp.eq.s32.totalorder %s15, 0
      %p73 = por %p71, %p72
      %p74 = scmp.ne.s32.totalorder %s63, %s66
      %p75 = scmp.eq.s32.totalorder %s20, 3
      %p76 = por %p74, %p75
      %p77 = scmp.ne.s32.totalorder %s66, %s67
      %p78 = scmp.eq.s32.totalorder %s20, 0
      %p79 = por %p77, %p78
      %p80 = scmp.ne.s32.totalorder %s66, %s67
      %p81 = scmp.eq.s32.totalorder %s21, 3
      %p82 = por %p80, %p81
      %p84 = scmp.ne.s32.totalorder %s67, %s83
      %p85 = scmp.eq.s32.totalorder %s21, 0
      %p86 = por %p84, %p85
      %s87 = ssub.s32 %s23, %s30
      %p88 = scmp.eq.s32.totalorder %s87, 0
      %s90 = sadd.s32 %s89, 1
      %s91 = scalar_select %p88, %s89, %s90
      %p94 = pneg %p88
      %p95 = scmp.eq.s32.totalorder %s15, 3
      %p96 = por %p94, %p95
      %p97 = scmp.ne.s32.totalorder %s89, %s92
      %p98 = scmp.eq.s32.totalorder %s15, 0
      %p99 = por %p97, %p98
      %p100 = scmp.ne.s32.totalorder %s89, %s92
      %p101 = scmp.eq.s32.totalorder %s20, 3
      %p102 = por %p100, %p101
      %p103 = scmp.ne.s32.totalorder %s92, %s93
      %p104 = scmp.eq.s32.totalorder %s20, 0
      %p105 = por %p103, %p104
      %p106 = scmp.ne.s32.totalorder %s92, %s93
      %p107 = scmp.eq.s32.totalorder %s21, 3
      %p108 = por %p106, %p107
      %p110 = scmp.ne.s32.totalorder %s93, %s109
      %p111 = scmp.eq.s32.totalorder %s21, 0
      %p112 = por %p110, %p111
      %s113 = ssub.s32 %s22, %s34
      %s114 = ssub.s32 %s23, %s30
      %s115 = sor.u32 %s113, %s114
      %p116 = scmp.eq.s32.totalorder %s115, 0
      %s118 = sadd.s32 %s117, 1
      %s119 = scalar_select %p116, %s117, %s118
      %p122 = pneg %p116
      %p123 = scmp.eq.s32.totalorder %s15, 3
      %p124 = por %p122, %p123
      %p125 = scmp.ne.s32.totalorder %s117, %s120
      %p126 = scmp.eq.s32.totalorder %s15, 0
      %p127 = por %p125, %p126
      %p128 = scmp.ne.s32.totalorder %s117, %s120
      %p129 = scmp.eq.s32.totalorder %s20, 3
      %p130 = por %p128, %p129
      %p131 = scmp.ne.s32.totalorder %s120, %s121
      %p132 = scmp.eq.s32.totalorder %s20, 0
      %p133 = por %p131, %p132
      %p134 = scmp.ne.s32.totalorder %s120, %s121
      %p135 = scmp.eq.s32.totalorder %s21, 3
      %p136 = por %p134, %p135
      %p138 = scmp.ne.s32.totalorder %s121, %s137
      %p139 = scmp.eq.s32.totalorder %s21, 0
      %p140 = por %p138, %p139
      %s142 = sadd.s32 %s141, 1
      %p145 = scmp.eq.s32.totalorder %s15, 3
      %p146 = scmp.ne.s32.totalorder %s141, %s143
      %p147 = scmp.eq.s32.totalorder %s15, 0
      %p148 = por %p146, %p147
      %p149 = scmp.ne.s32.totalorder %s141, %s143
      %p150 = scmp.eq.s32.totalorder %s20, 3
      %p151 = por %p149, %p150
      %p152 = scmp.ne.s32.totalorder %s143, %s144
      %p153 = scmp.eq.s32.totalorder %s20, 0
      %p154 = por %p152, %p153
      %p155 = scmp.ne.s32.totalorder %s143, %s144
      %p156 = scmp.eq.s32.totalorder %s21, 3
      %p157 = por %p155, %p156
      %p159 = scmp.ne.s32.totalorder %s144, %s158
      %p160 = scmp.eq.s32.totalorder %s21, 0
      %p161 = por %p159, %p160
      %s163 = sadd.s32 %s162, 1
      %p166 = scmp.eq.s32.totalorder %s15, 3
      %p167 = scmp.ne.s32.totalorder %s162, %s164
      %p168 = scmp.eq.s32.totalorder %s15, 0
      %p169 = por %p167, %p168
      %p170 = scmp.ne.s32.totalorder %s162, %s164
      %p171 = scmp.eq.s32.totalorder %s20, 3
      %p172 = por %p170, %p171
      %p173 = scmp.ne.s32.totalorder %s164, %s165
      %p174 = scmp.eq.s32.totalorder %s20, 0
      %p175 = por %p173, %p174
      %p176 = scmp.ne.s32.totalorder %s164, %s165
      %p177 = scmp.eq.s32.totalorder %s21, 3
      %p178 = por %p176, %p177
      %p180 = scmp.ne.s32.totalorder %s165, %s179
      %p181 = scmp.eq.s32.totalorder %s21, 0
      %p182 = por %p180, %p181
      %s184 = sadd.s32 %s183, 1
      %p187 = scmp.eq.s32.totalorder %s15, 3
      %p188 = scmp.ne.s32.totalorder %s183, %s185
      %p189 = scmp.eq.s32.totalorder %s15, 0
      %p190 = por %p188, %p189
      %p191 = scmp.ne.s32.totalorder %s183, %s185
      %p192 = scmp.eq.s32.totalorder %s20, 3
      %p193 = por %p191, %p192
      %p194 = scmp.ne.s32.totalorder %s185, %s186
      %p195 = scmp.eq.s32.totalorder %s20, 0
      %p196 = por %p194, %p195
      %p197 = scmp.ne.s32.totalorder %s185, %s186
      %p198 = scmp.eq.s32.totalorder %s21, 3
      %p199 = por %p197, %p198
      %p201 = scmp.ne.s32.totalorder %s186, %s200
      %p202 = scmp.eq.s32.totalorder %s21, 0
      %p203 = por %p201, %p202
      %s205 = sadd.s32 %s204, 1
      %p208 = scmp.eq.s32.totalorder %s15, 3
      %p209 = scmp.ne.s32.totalorder %s204, %s206
      %p210 = scmp.eq.s32.totalorder %s15, 0
      %p211 = por %p209, %p210
      %p212 = scmp.ne.s32.totalorder %s204, %s206
      %p213 = scmp.eq.s32.totalorder %s20, 3
      %p214 = por %p212, %p213
      %p215 = scmp.ne.s32.totalorder %s206, %s207
      %p216 = scmp.eq.s32.totalorder %s20, 0
      %p217 = por %p215, %p216
      %p218 = scmp.ne.s32.totalorder %s206, %s207
      %p219 = scmp.eq.s32.totalorder %s21, 3
      %p220 = por %p218, %p219
      %p222 = scmp.ne.s32.totalorder %s207, %s221
      %p223 = scmp.eq.s32.totalorder %s21, 0
      %p224 = por %p222, %p223
      %s226 = sadd.s32 %s225, 1
      %p229 = scmp.eq.s32.totalorder %s15, 3
      %p230 = scmp.ne.s32.totalorder %s225, %s227
      %p231 = scmp.eq.s32.totalorder %s15, 0
      %p232 = por %p230, %p231
      %p233 = scmp.ne.s32.totalorder %s225, %s227
      %p234 = scmp.eq.s32.totalorder %s20, 3
      %p235 = por %p233, %p234
      %p236 = scmp.ne.s32.totalorder %s227, %s228
      %p237 = scmp.eq.s32.totalorder %s20, 0
      %p238 = por %p236, %p237
      %p239 = scmp.ne.s32.totalorder %s227, %s228
      %p240 = scmp.eq.s32.totalorder %s21, 3
      %p241 = por %p239, %p240
      %p243 = scmp.ne.s32.totalorder %s228, %s242
      %p244 = scmp.eq.s32.totalorder %s21, 0
      %p245 = por %p243, %p244
      %s246 = ssub.s32 %s22, %s34
      %p247 = scmp.eq.s32.totalorder %s246, 0
      %s249 = sadd.s32 %s248, 1
      %s250 = scalar_select %p247, %s248, %s249
      %p253 = pneg %p247
      %p254 = scmp.eq.s32.totalorder %s15, 3
      %p255 = por %p253, %p254
      %p256 = scmp.ne.s32.totalorder %s248, %s251
      %p257 = scmp.eq.s32.totalorder %s15, 0
      %p258 = por %p256, %p257
      %p259 = scmp.ne.s32.totalorder %s248, %s251
      %p260 = scmp.eq.s32.totalorder %s20, 3
      %p261 = por %p259, %p260
      %p262 = scmp.ne.s32.totalorder %s251, %s252
      %p263 = scmp.eq.s32.totalorder %s20, 0
      %p264 = por %p262, %p263
      %p265 = scmp.ne.s32.totalorder %s251, %s252
      %p266 = scmp.eq.s32.totalorder %s21, 3
      %p267 = por %p265, %p266
      %p269 = scmp.ne.s32.totalorder %s252, %s268
      %p270 = scmp.eq.s32.totalorder %s21, 0
      %p271 = por %p269, %p270
      %p272 = scmp.le.s32.totalorder 1, %s15
      %p273 = scmp.lt.s32.totalorder %s15, 5
      %p274 = pnand %p272, %p273
      %p275 = pneg %p274
      // Predicated region
      $region9: #{attention_with_pair_bias.1} parent=5 // pred_check
        _
      $region10: #{attention_with_pair_bias.1} parent=5 // pred_check_branch
        %277 = sbr.rel (%p274) target = $region12
      $region11: #{attention_with_pair_bias.1} parent=5 // pred_region
        %s278 = ssub.s32 %s15, 1
        // Predicated region
        $region13: #{attention_with_pair_bias.1} parent=11 // pred_check
          %p279 = pneg %p154
        $region14: #{attention_with_pair_bias.1} parent=11 // pred_check_branch
          %281 = sbr.rel (%p279) target = $region16
        $region15: #{attention_with_pair_bias.1} parent=11 // pred_region
          _
        $region16: #{attention_with_pair_bias.1} parent=11 // pred_fallthru
          _
        // Predicated region
        $region17: #{attention_with_pair_bias.1} parent=11 // pred_check
          %p282 = pneg %p175
        $region18: #{attention_with_pair_bias.1} parent=11 // pred_check_branch
          %284 = sbr.rel (%p282) target = $region20
        $region19: #{attention_with_pair_bias.1} parent=11 // pred_region
          _
        $region20: #{attention_with_pair_bias.1} parent=11 // pred_fallthru
          _
        // Predicated region
        $region21: #{attention_with_pair_bias.1} parent=11 // pred_check
          %p285 = pneg %p196
        $region22: #{attention_with_pair_bias.1} parent=11 // pred_check_branch
          %287 = sbr.rel (%p285) target = $region24
        $region23: #{attention_with_pair_bias.1} parent=11 // pred_region
          _
        $region24: #{attention_with_pair_bias.1} parent=11 // pred_fallthru
          _
        // Predicated region
        $region25: #{attention_with_pair_bias.1} parent=11 // pred_check
          %p288 = pneg %p217
        $region26: #{attention_with_pair_bias.1} parent=11 // pred_check_branch
          %290 = sbr.rel (%p288) target = $region28
        $region27: #{attention_with_pair_bias.1} parent=11 // pred_region
          _
        $region28: #{attention_with_pair_bias.1} parent=11 // pred_fallthru
          _
        // Predicated region
        $region29: #{attention_with_pair_bias.1} parent=11 // pred_check
          %p291 = pneg %p238
        $region30: #{attention_with_pair_bias.1} parent=11 // pred_check_branch
          %293 = sbr.rel (%p291) target = $region32
        $region31: #{attention_with_pair_bias.1} parent=11 // pred_region
          _
        $region32: #{attention_with_pair_bias.1} parent=11 // pred_fallthru
          _
      $region12: #{attention_with_pair_bias.1} parent=5 // pred_fallthru
        _
      %p294 = scmp.lt.s32.totalorder %s15, 4
      // Predicated region
      $region33: #{attention_with_pair_bias.1} parent=5 // pred_check
        %p295 = pneg %p294
      $region34: #{attention_with_pair_bias.1} parent=5 // pred_check_branch
        %297 = sbr.rel (%p295) target = $region36
      $region35: #{attention_with_pair_bias.1} parent=5 // pred_region
        // Predicated region
        $region37: #{attention_with_pair_bias.1} parent=35 // pred_check
          %p298 = pneg %p47
        $region38: #{attention_with_pair_bias.1} parent=35 // pred_check_branch
          %300 = sbr.rel (%p298) target = $region40
        $region39: #{attention_with_pair_bias.1} parent=35 // pred_region
          %s301 = smul.u32 16, %s22
          %p302 = scmp.lt.s32.totalorder %s301, 31
          %s303 = scalar_select %p302, %s301, 31
          %s304 = smul.addr %s303, 8
          %s305 = scalar_lea.vmem %s0, %s304
          %s306 = smul.u32 16, %s22
        $region40: #{attention_with_pair_bias.1} parent=35 // pred_fallthru
          _
        // Predicated region
        $region41: #{attention_with_pair_bias.1} parent=35 // pred_check
          %p307 = pneg %p73
        $region42: #{attention_with_pair_bias.1} parent=35 // pred_check_branch
          %309 = sbr.rel (%p307) target = $region44
        $region43: #{attention_with_pair_bias.1} parent=35 // pred_region
          %s310 = sand.u32 %s63, 1
          %s311 = sand.u32 %s63, 1
          %s312 = smul.addr %s311, 32
          %s313 = scalar_lea.vmem [#allocation7], %s312
          %s314 = smul.addr %s23, 4
          %s315 = scalar_lea.vmem %s1, %s314
          // Predicated region
          $region45: #{attention_with_pair_bias.1} parent=43 // pred_check
            _
          $region46: #{attention_with_pair_bias.1} parent=43 // pred_check_branch
            %317 = sbr.rel (0) target = $region48
          $region47: #{attention_with_pair_bias.1} parent=43 // pred_region
            // Predicated region
            $region49: #{attention_with_pair_bias.1} parent=47 // pred_check
              _
            $region50: #{attention_with_pair_bias.1} parent=47 // pred_check_branch
              %319 = sbr.rel target = $region52
            $region51: #{attention_with_pair_bias.1} parent=47 // pred_region
              // Predicated region
              $region64: #{attention_with_pair_bias.1} parent=51 // pred_check
                _
              $region65: #{attention_with_pair_bias.1} parent=51 // pred_check_branch
                %348 = sbr.rel (0) target = $region67
              $region66: #{attention_with_pair_bias.1} parent=51 // pred_region
                loop: start=0, step=1, limit=1
                $region68: #{attention_with_pair_bias.1} parent=66 // loop_pre_header
                  _
                $region69: #{attention_with_pair_bias.1} parent=66 // loop_header
                  %s350 = sphi 0, %s354
                  %p351 = scmp.ge.s32.totalorder %s350, 1
                  %s355 = sphi %s315, %s315
                  %s356 = sphi %s313, %s313
                $region70: #{attention_with_pair_bias.1} parent=66 // loop_header_branch
                  %353 = sbr.rel (%p351) target = $region74
                $region71: #{attention_with_pair_bias.1} parent=66 // loop_body
                  _
                $region72: #{attention_with_pair_bias.1} parent=66 // loop_footer
                  %s354 = sadd.s32 1, %s350
                $region73: #{attention_with_pair_bias.1} parent=66 // loop_footer_branch
                  %349 = sbr.rel target = $region69
                $region74: #{attention_with_pair_bias.1} parent=66 // loop_exit
                  _
                loop: start=0, step=1, limit=1
                $region75: #{attention_with_pair_bias.1} parent=66 // loop_pre_header
                  _
                $region76: #{attention_with_pair_bias.1} parent=66 // loop_header
                  %s359 = sphi 0, %s363
                  %p360 = scmp.ge.s32.totalorder %s359, 1
                  %s364 = sphi %s315, %s315
                  %s365 = sphi %s313, %s313
                $region77: #{attention_with_pair_bias.1} parent=66 // loop_header_branch
                  %362 = sbr.rel (%p360) target = $region81
                $region78: #{attention_with_pair_bias.1} parent=66 // loop_body
                  %v366 = vld [vmem:[%s364] sm:$0xf]
                  %367 = vst [vmem:[%s365] sm:$0xf] %v366
                  %v368 = vld [vmem:[%s364 + $0x8] sm:$0xf]
                  %369 = vst [vmem:[%s365 + $0x4] sm:$0xf] %v368
                  %v370 = vld [vmem:[%s364 + $0x10] sm:$0xf]
                  %371 = vst [vmem:[%s365 + $0x8] sm:$0xf] %v370
                  %v372 = vld [vmem:[%s364 + $0x18] sm:$0xf]
                  %373 = vst [vmem:[%s365 + $0xc] sm:$0xf] %v372
                  %v374 = vld [vmem:[%s364 + $0x20] sm:$0xf]
                  %375 = vst [vmem:[%s365 + $0x10] sm:$0xf] %v374
                  %v376 = vld [vmem:[%s364 + $0x28] sm:$0xf]
                  %377 = vst [vmem:[%s365 + $0x14] sm:$0xf] %v376
                  %v378 = vld [vmem:[%s364 + $0x30] sm:$0xf]
                  %379 = vst [vmem:[%s365 + $0x18] sm:$0xf] %v378
                  %v380 = vld [vmem:[%s364 + $0x38] sm:$0xf]
                  %381 = vst [vmem:[%s365 + $0x1c] sm:$0xf] %v380
                $region79: #{attention_with_pair_bias.1} parent=66 // loop_footer
                  %s363 = sadd.s32 1, %s359
                $region80: #{attention_with_pair_bias.1} parent=66 // loop_footer_branch
                  %358 = sbr.rel target = $region76
                $region81: #{attention_with_pair_bias.1} parent=66 // loop_exit
                  _
              $region67: #{attention_with_pair_bias.1} parent=51 // pred_fallthru
                _
            $region52: #{attention_with_pair_bias.1} parent=47 // pred_fallthru
              _
            // Predicated region
            $region53: #{attention_with_pair_bias.1} parent=47 // pred_check
              _
            $region54: #{attention_with_pair_bias.1} parent=47 // pred_check_branch
              %321 = sbr.rel (0) target = $region56
            $region55: #{attention_with_pair_bias.1} parent=47 // pred_region
              loop: start=0, step=1, limit=1
              $region57: #{attention_with_pair_bias.1} parent=55 // loop_pre_header
                _
              $region58: #{attention_with_pair_bias.1} parent=55 // loop_header
                %s324 = sphi 0, %s328
                %p325 = scmp.ge.s32.totalorder %s324, 1
                %s329 = sphi %s315, %s315
                %s330 = sphi %s313, %s313
              $region59: #{attention_with_pair_bias.1} parent=55 // loop_header_branch
                %327 = sbr.rel (%p325) target = $region63
              $region60: #{attention_with_pair_bias.1} parent=55 // loop_body
                %v331 = vld [vmem:[%s329] sm:$0xf]
                %332 = vst [vmem:[%s330] sm:$0xf] %v331
                %v333 = vld [vmem:[%s329 + $0x8] sm:$0xf]
                %334 = vst [vmem:[%s330 + $0x4] sm:$0xf] %v333
                %v335 = vld [vmem:[%s329 + $0x10] sm:$0xf]
                %336 = vst [vmem:[%s330 + $0x8] sm:$0xf] %v335
                %v337 = vld [vmem:[%s329 + $0x18] sm:$0xf]
                %338 = vst [vmem:[%s330 + $0xc] sm:$0xf] %v337
                %v339 = vld [vmem:[%s329 + $0x20] sm:$0xf]
                %340 = vst [vmem:[%s330 + $0x10] sm:$0xf] %v339
                %v341 = vld [vmem:[%s329 + $0x28] sm:$0xf]
                %342 = vst [vmem:[%s330 + $0x14] sm:$0xf] %v341
                %v343 = vld [vmem:[%s329 + $0x30] sm:$0xf]
                %344 = vst [vmem:[%s330 + $0x18] sm:$0xf] %v343
                %v345 = vld [vmem:[%s329 + $0x38] sm:$0xf]
                %346 = vst [vmem:[%s330 + $0x1c] sm:$0xf] %v345
              $region61: #{attention_with_pair_bias.1} parent=55 // loop_footer
                %s328 = sadd.s32 1, %s324
              $region62: #{attention_with_pair_bias.1} parent=55 // loop_footer_branch
                %323 = sbr.rel target = $region58
              $region63: #{attention_with_pair_bias.1} parent=55 // loop_exit
                _
            $region56: #{attention_with_pair_bias.1} parent=47 // pred_fallthru
              _
          $region48: #{attention_with_pair_bias.1} parent=43 // pred_fallthru
            _
          %382 = vnop
        $region44: #{attention_with_pair_bias.1} parent=35 // pred_fallthru
          _
        // Predicated region
        $region82: #{attention_with_pair_bias.1} parent=35 // pred_check
          %p383 = pneg %p99
        $region83: #{attention_with_pair_bias.1} parent=35 // pred_check_branch
          %385 = sbr.rel (%p383) target = $region85
        $region84: #{attention_with_pair_bias.1} parent=35 // pred_region
          %s386 = smul.u32 16, %s23
          %p387 = scmp.lt.s32.totalorder %s386, 31
          %s388 = scalar_select %p387, %s386, 31
          %s389 = smul.addr %s388, 4
          %s390 = scalar_lea.vmem %s2, %s389
          %s391 = smul.u32 16, %s23
        $region85: #{attention_with_pair_bias.1} parent=35 // pred_fallthru
          _
        // Predicated region
        $region86: #{attention_with_pair_bias.1} parent=35 // pred_check
          %p392 = pneg %p127
        $region87: #{attention_with_pair_bias.1} parent=35 // pred_check_branch
          %394 = sbr.rel (%p392) target = $region89
        $region88: #{attention_with_pair_bias.1} parent=35 // pred_region
          %s395 = sand.u32 %s117, 1
          %s396 = sand.u32 %s117, 1
          %s397 = smul.addr %s396, 128
          %s398 = scalar_lea.vmem [#allocation8], %s397
          %s399 = smul.u32 16, %s22
          %s400 = smul.addr %s399, 2
          %s401 = sadd.s32 %s23, %s400
          %s402 = smul.addr %s401, 4
          %s403 = scalar_lea.vmem %s3, %s402
          // Predicated region
          $region90: #{attention_with_pair_bias.1} parent=88 // pred_check
            _
          $region91: #{attention_with_pair_bias.1} parent=88 // pred_check_branch
            %405 = sbr.rel (0) target = $region93
          $region92: #{attention_with_pair_bias.1} parent=88 // pred_region
            // Predicated region
            $region94: #{attention_with_pair_bias.1} parent=92 // pred_check
              _
            $region95: #{attention_with_pair_bias.1} parent=92 // pred_check_branch
              %407 = sbr.rel target = $region97
            $region96: #{attention_with_pair_bias.1} parent=92 // pred_region
              // Predicated region
              $region109: #{attention_with_pair_bias.1} parent=96 // pred_check
                _
              $region110: #{attention_with_pair_bias.1} parent=96 // pred_check_branch
                %484 = sbr.rel (0) target = $region112
              $region111: #{attention_with_pair_bias.1} parent=96 // pred_region
                loop: start=0, step=1, limit=1
                $region113: #{attention_with_pair_bias.1} parent=111 // loop_pre_header
                  _
                $region114: #{attention_with_pair_bias.1} parent=111 // loop_header
                  %s486 = sphi 0, %s490
                  %p487 = scmp.ge.s32.totalorder %s486, 1
                  %s491 = sphi %s403, %s403
                  %s492 = sphi %s398, %s398
                $region115: #{attention_with_pair_bias.1} parent=111 // loop_header_branch
                  %489 = sbr.rel (%p487) target = $region119
                $region116: #{attention_with_pair_bias.1} parent=111 // loop_body
                  _
                $region117: #{attention_with_pair_bias.1} parent=111 // loop_footer
                  %s490 = sadd.s32 1, %s486
                $region118: #{attention_with_pair_bias.1} parent=111 // loop_footer_branch
                  %485 = sbr.rel target = $region114
                $region119: #{attention_with_pair_bias.1} parent=111 // loop_exit
                  _
                loop: start=0, step=1, limit=1
                $region120: #{attention_with_pair_bias.1} parent=111 // loop_pre_header
                  _
                $region121: #{attention_with_pair_bias.1} parent=111 // loop_header
                  %s495 = sphi 0, %s499
                  %p496 = scmp.ge.s32.totalorder %s495, 1
                  %s500 = sphi %s403, %s403
                  %s501 = sphi %s398, %s398
                $region122: #{attention_with_pair_bias.1} parent=111 // loop_header_branch
                  %498 = sbr.rel (%p496) target = $region126
                $region123: #{attention_with_pair_bias.1} parent=111 // loop_body
                  %v502 = vld [vmem:[%s500] sm:$0xf]
                  %503 = vst [vmem:[%s501] sm:$0xf] %v502
                  %v504 = vld [vmem:[%s500 + $0x8] sm:$0xf]
                  %505 = vst [vmem:[%s501 + $0x4] sm:$0xf] %v504
                  %v506 = vld [vmem:[%s500 + $0x10] sm:$0xf]
                  %507 = vst [vmem:[%s501 + $0x8] sm:$0xf] %v506
                  %v508 = vld [vmem:[%s500 + $0x18] sm:$0xf]
                  %509 = vst [vmem:[%s501 + $0xc] sm:$0xf] %v508
                  %v510 = vld [vmem:[%s500 + $0x20] sm:$0xf]
                  %511 = vst [vmem:[%s501 + $0x10] sm:$0xf] %v510
                  %v512 = vld [vmem:[%s500 + $0x28] sm:$0xf]
                  %513 = vst [vmem:[%s501 + $0x14] sm:$0xf] %v512
                  %v514 = vld [vmem:[%s500 + $0x30] sm:$0xf]
                  %515 = vst [vmem:[%s501 + $0x18] sm:$0xf] %v514
                  %v516 = vld [vmem:[%s500 + $0x38] sm:$0xf]
                  %517 = vst [vmem:[%s501 + $0x1c] sm:$0xf] %v516
                  %v518 = vld [vmem:[%s500 + $0x40] sm:$0xf]
                  %519 = vst [vmem:[%s501 + $0x20] sm:$0xf] %v518
                  %v520 = vld [vmem:[%s500 + $0x48] sm:$0xf]
                  %521 = vst [vmem:[%s501 + $0x24] sm:$0xf] %v520
                  %v522 = vld [vmem:[%s500 + $0x50] sm:$0xf]
                  %523 = vst [vmem:[%s501 + $0x28] sm:$0xf] %v522
                  %v524 = vld [vmem:[%s500 + $0x58] sm:$0xf]
                  %525 = vst [vmem:[%s501 + $0x2c] sm:$0xf] %v524
                  %v526 = vld [vmem:[%s500 + $0x60] sm:$0xf]
                  %527 = vst [vmem:[%s501 + $0x30] sm:$0xf] %v526
                  %v528 = vld [vmem:[%s500 + $0x68] sm:$0xf]
                  %529 = vst [vmem:[%s501 + $0x34] sm:$0xf] %v528
                  %v530 = vld [vmem:[%s500 + $0x70] sm:$0xf]
                  %531 = vst [vmem:[%s501 + $0x38] sm:$0xf] %v530
                  %v532 = vld [vmem:[%s500 + $0x78] sm:$0xf]
                  %533 = vst [vmem:[%s501 + $0x3c] sm:$0xf] %v532
                  %v534 = vld [vmem:[%s500 + $0x100] sm:$0xf]
                  %535 = vst [vmem:[%s501 + $0x40] sm:$0xf] %v534
                  %v536 = vld [vmem:[%s500 + $0x108] sm:$0xf]
                  %537 = vst [vmem:[%s501 + $0x44] sm:$0xf] %v536
                  %v538 = vld [vmem:[%s500 + $0x110] sm:$0xf]
                  %539 = vst [vmem:[%s501 + $0x48] sm:$0xf] %v538
                  %v540 = vld [vmem:[%s500 + $0x118] sm:$0xf]
                  %541 = vst [vmem:[%s501 + $0x4c] sm:$0xf] %v540
                  %v542 = vld [vmem:[%s500 + $0x120] sm:$0xf]
                  %543 = vst [vmem:[%s501 + $0x50] sm:$0xf] %v542
                  %v544 = vld [vmem:[%s500 + $0x128] sm:$0xf]
                  %545 = vst [vmem:[%s501 + $0x54] sm:$0xf] %v544
                  %v546 = vld [vmem:[%s500 + $0x130] sm:$0xf]
                  %547 = vst [vmem:[%s501 + $0x58] sm:$0xf] %v546
                  %v548 = vld [vmem:[%s500 + $0x138] sm:$0xf]
                  %549 = vst [vmem:[%s501 + $0x5c] sm:$0xf] %v548
                  %v550 = vld [vmem:[%s500 + $0x140] sm:$0xf]
                  %551 = vst [vmem:[%s501 + $0x60] sm:$0xf] %v550
                  %v552 = vld [vmem:[%s500 + $0x148] sm:$0xf]
                  %553 = vst [vmem:[%s501 + $0x64] sm:$0xf] %v552
                  %v554 = vld [vmem:[%s500 + $0x150] sm:$0xf]
                  %555 = vst [vmem:[%s501 + $0x68] sm:$0xf] %v554
                  %v556 = vld [vmem:[%s500 + $0x158] sm:$0xf]
                  %557 = vst [vmem:[%s501 + $0x6c] sm:$0xf] %v556
                  %v558 = vld [vmem:[%s500 + $0x160] sm:$0xf]
                  %559 = vst [vmem:[%s501 + $0x70] sm:$0xf] %v558
                  %v560 = vld [vmem:[%s500 + $0x168] sm:$0xf]
                  %561 = vst [vmem:[%s501 + $0x74] sm:$0xf] %v560
                  %v562 = vld [vmem:[%s500 + $0x170] sm:$0xf]
                  %563 = vst [vmem:[%s501 + $0x78] sm:$0xf] %v562
                  %v564 = vld [vmem:[%s500 + $0x178] sm:$0xf]
                  %565 = vst [vmem:[%s501 + $0x7c] sm:$0xf] %v564
                $region124: #{attention_with_pair_bias.1} parent=111 // loop_footer
                  %s499 = sadd.s32 1, %s495
                $region125: #{attention_with_pair_bias.1} parent=111 // loop_footer_branch
                  %494 = sbr.rel target = $region121
                $region126: #{attention_with_pair_bias.1} parent=111 // loop_exit
                  _
              $region112: #{attention_with_pair_bias.1} parent=96 // pred_fallthru
                _
            $region97: #{attention_with_pair_bias.1} parent=92 // pred_fallthru
              _
            // Predicated region
            $region98: #{attention_with_pair_bias.1} parent=92 // pred_check
              _
            $region99: #{attention_with_pair_bias.1} parent=92 // pred_check_branch
              %409 = sbr.rel (0) target = $region101
            $region100: #{attention_with_pair_bias.1} parent=92 // pred_region
              loop: start=0, step=1, limit=1
              $region102: #{attention_with_pair_bias.1} parent=100 // loop_pre_header
                _
              $region103: #{attention_with_pair_bias.1} parent=100 // loop_header
                %s412 = sphi 0, %s416
                %p413 = scmp.ge.s32.totalorder %s412, 1
                %s417 = sphi %s403, %s403
                %s418 = sphi %s398, %s398
              $region104: #{attention_with_pair_bias.1} parent=100 // loop_header_branch
                %415 = sbr.rel (%p413) target = $region108
              $region105: #{attention_with_pair_bias.1} parent=100 // loop_body
                %v419 = vld [vmem:[%s417] sm:$0xf]
                %420 = vst [vmem:[%s418] sm:$0xf] %v419
                %v421 = vld [vmem:[%s417 + $0x8] sm:$0xf]
                %422 = vst [vmem:[%s418 + $0x4] sm:$0xf] %v421
                %v423 = vld [vmem:[%s417 + $0x10] sm:$0xf]
                %424 = vst [vmem:[%s418 + $0x8] sm:$0xf] %v423
                %v425 = vld [vmem:[%s417 + $0x18] sm:$0xf]
                %426 = vst [vmem:[%s418 + $0xc] sm:$0xf] %v425
                %v427 = vld [vmem:[%s417 + $0x20] sm:$0xf]
                %428 = vst [vmem:[%s418 + $0x10] sm:$0xf] %v427
                %v429 = vld [vmem:[%s417 + $0x28] sm:$0xf]
                %430 = vst [vmem:[%s418 + $0x14] sm:$0xf] %v429
                %v431 = vld [vmem:[%s417 + $0x30] sm:$0xf]
                %432 = vst [vmem:[%s418 + $0x18] sm:$0xf] %v431
                %v433 = vld [vmem:[%s417 + $0x38] sm:$0xf]
                %434 = vst [vmem:[%s418 + $0x1c] sm:$0xf] %v433
                %v435 = vld [vmem:[%s417 + $0x40] sm:$0xf]
                %436 = vst [vmem:[%s418 + $0x20] sm:$0xf] %v435
                %v437 = vld [vmem:[%s417 + $0x48] sm:$0xf]
                %438 = vst [vmem:[%s418 + $0x24] sm:$0xf] %v437
                %v439 = vld [vmem:[%s417 + $0x50] sm:$0xf]
                %440 = vst [vmem:[%s418 + $0x28] sm:$0xf] %v439
                %v441 = vld [vmem:[%s417 + $0x58] sm:$0xf]
                %442 = vst [vmem:[%s418 + $0x2c] sm:$0xf] %v441
                %v443 = vld [vmem:[%s417 + $0x60] sm:$0xf]
                %444 = vst [vmem:[%s418 + $0x30] sm:$0xf] %v443
                %v445 = vld [vmem:[%s417 + $0x68] sm:$0xf]
                %446 = vst [vmem:[%s418 + $0x34] sm:$0xf] %v445
                %v447 = vld [vmem:[%s417 + $0x70] sm:$0xf]
                %448 = vst [vmem:[%s418 + $0x38] sm:$0xf] %v447
                %v449 = vld [vmem:[%s417 + $0x78] sm:$0xf]
                %450 = vst [vmem:[%s418 + $0x3c] sm:$0xf] %v449
                %v451 = vld [vmem:[%s417 + $0x100] sm:$0xf]
                %452 = vst [vmem:[%s418 + $0x40] sm:$0xf] %v451
                %v453 = vld [vmem:[%s417 + $0x108] sm:$0xf]
                %454 = vst [vmem:[%s418 + $0x44] sm:$0xf] %v453
                %v455 = vld [vmem:[%s417 + $0x110] sm:$0xf]
                %456 = vst [vmem:[%s418 + $0x48] sm:$0xf] %v455
                %v457 = vld [vmem:[%s417 + $0x118] sm:$0xf]
                %458 = vst [vmem:[%s418 + $0x4c] sm:$0xf] %v457
                %v459 = vld [vmem:[%s417 + $0x120] sm:$0xf]
                %460 = vst [vmem:[%s418 + $0x50] sm:$0xf] %v459
                %v461 = vld [vmem:[%s417 + $0x128] sm:$0xf]
                %462 = vst [vmem:[%s418 + $0x54] sm:$0xf] %v461
                %v463 = vld [vmem:[%s417 + $0x130] sm:$0xf]
                %464 = vst [vmem:[%s418 + $0x58] sm:$0xf] %v463
                %v465 = vld [vmem:[%s417 + $0x138] sm:$0xf]
                %466 = vst [vmem:[%s418 + $0x5c] sm:$0xf] %v465
                %v467 = vld [vmem:[%s417 + $0x140] sm:$0xf]
                %468 = vst [vmem:[%s418 + $0x60] sm:$0xf] %v467
                %v469 = vld [vmem:[%s417 + $0x148] sm:$0xf]
                %470 = vst [vmem:[%s418 + $0x64] sm:$0xf] %v469
                %v471 = vld [vmem:[%s417 + $0x150] sm:$0xf]
                %472 = vst [vmem:[%s418 + $0x68] sm:$0xf] %v471
                %v473 = vld [vmem:[%s417 + $0x158] sm:$0xf]
                %474 = vst [vmem:[%s418 + $0x6c] sm:$0xf] %v473
                %v475 = vld [vmem:[%s417 + $0x160] sm:$0xf]
                %476 = vst [vmem:[%s418 + $0x70] sm:$0xf] %v475
                %v477 = vld [vmem:[%s417 + $0x168] sm:$0xf]
                %478 = vst [vmem:[%s418 + $0x74] sm:$0xf] %v477
                %v479 = vld [vmem:[%s417 + $0x170] sm:$0xf]
                %480 = vst [vmem:[%s418 + $0x78] sm:$0xf] %v479
                %v481 = vld [vmem:[%s417 + $0x178] sm:$0xf]
                %482 = vst [vmem:[%s418 + $0x7c] sm:$0xf] %v481
              $region106: #{attention_with_pair_bias.1} parent=100 // loop_footer
                %s416 = sadd.s32 1, %s412
              $region107: #{attention_with_pair_bias.1} parent=100 // loop_footer_branch
                %411 = sbr.rel target = $region103
              $region108: #{attention_with_pair_bias.1} parent=100 // loop_exit
                _
            $region101: #{attention_with_pair_bias.1} parent=92 // pred_fallthru
              _
          $region93: #{attention_with_pair_bias.1} parent=88 // pred_fallthru
            _
          %566 = vnop
        $region89: #{attention_with_pair_bias.1} parent=35 // pred_fallthru
          _
      $region36: #{attention_with_pair_bias.1} parent=5 // pred_fallthru
        _
      %p567 = scmp.le.s32.totalorder 1, %s15
      %p568 = scmp.lt.s32.totalorder %s15, 5
      %p569 = pnand %p567, %p568
      %p570 = pneg %p569
      // Predicated region
      $region127: #{attention_with_pair_bias.1} parent=5 // pred_check
        _
      $region128: #{attention_with_pair_bias.1} parent=5 // pred_check_branch
        %572 = sbr.rel (%p569) target = $region130
      $region129: #{attention_with_pair_bias.1} parent=5 // pred_region
        %s573 = ssub.s32 %s15, 1
        %s574 = sand.u32 %s66, 1
        %s575 = sand.u32 %s66, 1
        %s576 = smul.addr %s575, 32
        %s577 = scalar_lea.vmem [#allocation7], %s576
        // Predicated region
        $region131: #{attention_with_pair_bias.1} parent=129 // pred_check
          %p578 = pneg %p79
        $region132: #{attention_with_pair_bias.1} parent=129 // pred_check_branch
          %580 = sbr.rel (%p578) target = $region134
        $region133: #{attention_with_pair_bias.1} parent=129 // pred_region
          _
        $region134: #{attention_with_pair_bias.1} parent=129 // pred_fallthru
          _
        %s581 = sand.u32 %s120, 1
        %s582 = sand.u32 %s120, 1
        %s583 = smul.addr %s582, 128
        %s584 = scalar_lea.vmem [#allocation8], %s583
        // Predicated region
        $region135: #{attention_with_pair_bias.1} parent=129 // pred_check
          %p585 = pneg %p133
        $region136: #{attention_with_pair_bias.1} parent=129 // pred_check_branch
          %587 = sbr.rel (%p585) target = $region138
        $region137: #{attention_with_pair_bias.1} parent=129 // pred_region
          _
        $region138: #{attention_with_pair_bias.1} parent=129 // pred_fallthru
          _
        %s588 = smul.u32 16, %s24
        %p589 = scmp.lt.s32.totalorder %s588, 31
        %s590 = scalar_select %p589, %s588, 31
        %s591 = smul.addr %s590, 8
        %s592 = scalar_lea.vmem %s0, %s591
        %p593 = pneg %p53
        %p594 = pneg %p50
        %s595 = sand.u32 %s66, 1
        %s596 = sand.u32 %s66, 1
        %s597 = smul.addr %s596, 32
        %s598 = scalar_lea.vmem [#allocation7], %s597
        %p599 = pneg %p79
        %p600 = pneg %p76
        %s601 = smul.u32 16, %s25
        %p602 = scmp.lt.s32.totalorder %s601, 31
        %s603 = scalar_select %p602, %s601, 31
        %s604 = smul.addr %s603, 4
        %s605 = scalar_lea.vmem %s2, %s604
        %p606 = pneg %p105
        %p607 = pneg %p102
        %s608 = sand.u32 %s120, 1
        %s609 = sand.u32 %s120, 1
        %s610 = smul.addr %s609, 128
        %s611 = scalar_lea.vmem [#allocation8], %s610
        %p612 = pneg %p133
        %p613 = pneg %p130
        %p614 = pneg %p154
        %p615 = pneg %p151
        %p616 = pneg %p175
        %p617 = pneg %p172
        %p618 = pneg %p196
        %p619 = pneg %p193
        %p620 = pneg %p217
        %p621 = pneg %p214
        %p622 = pneg %p238
        %p623 = pneg %p235
        %p624 = pneg %p264
        %p625 = pneg %p261
        %s626 = smul.u32 16, %s24
        %p627 = scmp.lt.s32.totalorder %s626, 31
        %s628 = scalar_select %p627, %s626, 31
        %s629 = smul.addr %s628, 8
        %s630 = scalar_lea.vmem %s9, %s629
        %s631 = smul.u32 16, %s24
        %p632 = scmp.lt.s32.totalorder %s631, 31
        %s633 = scalar_select %p632, %s631, 31
        %s634 = smul.addr %s633, 8
        %s635 = scalar_lea.vmem %s0, %s634
        %s636 = smul.u32 16, %s24
        %s637 = smul.u32 16, %s25
        %p638 = scmp.lt.s32.totalorder %s637, 31
        %s639 = scalar_select %p638, %s637, 31
        %s640 = smul.addr %s639, 4
        %s641 = scalar_lea.vmem %s2, %s640
        %s642 = smul.u32 16, %s25
        %s643 = smul.u32 16, %s24
        %s644 = smul.u32 16, %s24
        %p645 = scmp.lt.s32.totalorder %s644, 31
        %s646 = scalar_select %p645, %s644, 31
        %s647 = smul.addr %s646, 8
        %s648 = scalar_lea.vmem %s9, %s647
        %s649 = smul.u32 16, %s24
        %p651 = scmp.eq.s32.totalorder %s25, 0
        // Predicated region
        $region139: #{attention_with_pair_bias.1} parent=129 // pred_check
          %p652 = pneg %p651
        $region140: #{attention_with_pair_bias.1} parent=129 // pred_check_branch
          %654 = sbr.rel (%p652) target = $region142
        $region141: #{attention_with_pair_bias.1} parent=129 // pred_region
          %v655 = vld [vmem:[%s635] sm:$0xff]
          %v656 = vld [vmem:[%s635 + $0x8] sm:$0xff]
          %v657 = vld [vmem:[%s635 + $0x10] sm:$0xff]
          %v658 = vld [vmem:[%s635 + $0x18] sm:$0xff]
          %v659 = vld [vmem:[%s635 + $0x20] sm:$0xff]
          %v660 = vld [vmem:[%s635 + $0x28] sm:$0xff]
          %v661 = vld [vmem:[%s635 + $0x30] sm:$0xff]
          %v662 = vld [vmem:[%s635 + $0x38] sm:$0xff]
          %v663 = vld [vmem:[%s635 + $0x40] sm:$0xff]
          %v664 = vld [vmem:[%s635 + $0x48] sm:$0xff]
          %v665 = vld [vmem:[%s635 + $0x50] sm:$0xff]
          %v666 = vld [vmem:[%s635 + $0x58] sm:$0xff]
          %v667 = vld [vmem:[%s635 + $0x60] sm:$0xff]
          %v668 = vld [vmem:[%s635 + $0x68] sm:$0xff]
          %v669 = vld [vmem:[%s635 + $0x70] sm:$0xff]
          %v670 = vld [vmem:[%s635 + $0x78] sm:$0xff]
          %v671 = vpack.c.bf16 %v656, %v655
          %v672 = vpack.c.bf16 %v658, %v657
          %v673 = vpack.c.bf16 %v660, %v659
          %v674 = vpack.c.bf16 %v662, %v661
          %v675 = vpack.c.bf16 %v664, %v663
          %v676 = vpack.c.bf16 %v666, %v665
          %v677 = vpack.c.bf16 %v668, %v667
          %v678 = vpack.c.bf16 %v670, %v669
          %v679 = vld [vmem:[%s4] sm:$0xf]
          %v680 = vld [vmem:[%s4 + $0x4] sm:$0xf]
          %v681 = vld [vmem:[%s4 + $0x8] sm:$0xf]
          %v682 = vld [vmem:[%s4 + $0xc] sm:$0xf]
          %v683 = vld [vmem:[%s4 + $0x10] sm:$0xf]
          %v684 = vld [vmem:[%s4 + $0x14] sm:$0xf]
          %v685 = vld [vmem:[%s4 + $0x18] sm:$0xf]
          %v686 = vld [vmem:[%s4 + $0x1c] sm:$0xf]
          %v695 = vunpack.c.l.b16 %v679
          %v696 = vunpack.c.l.b16 %v680
          %v697 = vunpack.c.l.b16 %v681
          %v698 = vunpack.c.l.b16 %v682
          %v699 = vunpack.c.l.b16 %v683
          %v700 = vunpack.c.l.b16 %v684
          %v701 = vunpack.c.l.b16 %v685
          %v702 = vunpack.c.l.b16 %v686
          %v703 = vpack.c.b16 %v696, %v695
          %v704 = vpack.c.b16 %v698, %v697
          %v705 = vpack.c.b16 %v700, %v699
          %v706 = vpack.c.b16 %v702, %v701
          %vm711 = vcmask 523264
          %v713 = vsel %vm711, %v671, 0
          %v716 = vsel %vm711, %v672, 0
          %v719 = vsel %vm711, %v673, 0
          %v722 = vsel %vm711, %v674, 0
          %v725 = vsel %vm711, %v675, 0
          %v728 = vsel %vm711, %v676, 0
          %v731 = vsel %vm711, %v677, 0
          %v734 = vsel %vm711, %v678, 0
          %736 = vmatprep.subr.bf16.mxu0 0
          %737 = vmatpush1.bf16.msra.mxu0 %v703
          %738 = vmatprep.subr.bf16.mxu0 0
          %739 = vmatpush1.bf16.msra.mxu0 %v704
          %740 = vmatprep.subr.bf16.mxu0 0
          %741 = vmatpush1.bf16.msra.mxu0 %v705
          %742 = vmatprep.subr.bf16.mxu0 0
          %743 = vmatpush1.bf16.msra.mxu0 %v706
          %744 = vmatprep.subr.bf16.mxu0 0
          %745 = vmatpush1.bf16.msra.mxu0 0
          %746 = vmatprep.subr.bf16.mxu0 0
          %747 = vmatpush1.bf16.msra.mxu0 0
          %748 = vmatprep.subr.bf16.mxu0 0
          %749 = vmatpush1.bf16.msra.mxu0 0
          %750 = vmatprep.subr.bf16.mxu0 0
          %751 = vmatpush1.bf16.msra.mxu0 0
          %752 = vmatprep.subr.bf16.mxu0 0
          %753 = vmatpush1.bf16.msra.mxu0 0
          %754 = vmatprep.subr.bf16.mxu0 0
          %755 = vmatpush1.bf16.msra.mxu0 0
          %756 = vmatprep.subr.bf16.mxu0 0
          %757 = vmatpush1.bf16.msra.mxu0 0
          %758 = vmatprep.subr.bf16.mxu0 0
          %759 = vmatpush1.bf16.msra.mxu0 0
          %760 = vmatprep.subr.bf16.mxu0 0
          %761 = vmatpush1.bf16.msra.mxu0 0
          %762 = vmatprep.subr.bf16.mxu0 0
          %763 = vmatpush1.bf16.msra.mxu0 0
          %764 = vmatprep.subr.bf16.mxu0 0
          %765 = vmatpush1.bf16.msra.mxu0 0
          %766 = vmatprep.subr.bf16.mxu0 0
          %767 = vmatpush1.bf16.msra.mxu0 0
          %768 = vmatprep.mubr.bf16.mxu0 0
          %769 = vmatmul.mubr.bf16.gmra.mrb[0].mxu0 %v713
          %v770 = vpop.f32.mrb[0].mxu0
          %v771 = vadd.f32 0.0, %v770
          %v772 = vpop.f32.mrb[0].mxu0
          %v773 = vpop.f32.mrb[0].mxu0
          %v774 = vadd.f32 0.0, %v773
          %v775 = vpop.f32.mrb[0].mxu0
          %776 = vmatprep.mubr.bf16.mxu0 0
          %777 = vmatmul.mubr.bf16.gmra.mrb[0].mxu0 %v716
          %v778 = vpop.f32.mrb[0].mxu0
          %v779 = vadd.f32 0.0, %v778
          %v780 = vpop.f32.mrb[0].mxu0
          %v781 = vpop.f32.mrb[0].mxu0
          %v782 = vadd.f32 0.0, %v781
          %v783 = vpop.f32.mrb[0].mxu0
          %784 = vmatprep.mubr.bf16.mxu0 0
          %785 = vmatmul.mubr.bf16.gmra.mrb[0].mxu0 %v719
          %v786 = vpop.f32.mrb[0].mxu0
          %v787 = vadd.f32 0.0, %v786
          %v788 = vpop.f32.mrb[0].mxu0
          %v789 = vpop.f32.mrb[0].mxu0
          %v790 = vadd.f32 0.0, %v789
          %v791 = vpop.f32.mrb[0].mxu0
          %792 = vmatprep.mubr.bf16.mxu0 0
          %793 = vmatmul.mubr.bf16.gmra.mrb[0].mxu0 %v722
          %v794 = vpop.f32.mrb[0].mxu0
          %v795 = vadd.f32 0.0, %v794
          %v796 = vpop.f32.mrb[0].mxu0
          %v797 = vpop.f32.mrb[0].mxu0
          %v798 = vadd.f32 0.0, %v797
          %v799 = vpop.f32.mrb[0].mxu0
          %800 = vmatprep.mubr.bf16.mxu0 0
          %801 = vmatmul.mubr.bf16.gmra.mrb[0].mxu0 %v725
          %v802 = vpop.f32.mrb[0].mxu0
          %v803 = vadd.f32 0.0, %v802
          %v804 = vpop.f32.mrb[0].mxu0
          %v805 = vpop.f32.mrb[0].mxu0
          %v806 = vadd.f32 0.0, %v805
          %v807 = vpop.f32.mrb[0].mxu0
          %808 = vmatprep.mubr.bf16.mxu0 0
          %809 = vmatmul.mubr.bf16.gmra.mrb[0].mxu0 %v728
          %v810 = vpop.f32.mrb[0].mxu0
          %v811 = vadd.f32 0.0, %v810
          %v812 = vpop.f32.mrb[0].mxu0
          %v813 = vpop.f32.mrb[0].mxu0
          %v814 = vadd.f32 0.0, %v813
          %v815 = vpop.f32.mrb[0].mxu0
          %816 = vmatprep.mubr.bf16.mxu0 0
          %817 = vmatmul.mubr.bf16.gmra.mrb[0].mxu0 %v731
          %v818 = vpop.f32.mrb[0].mxu0
          %v819 = vadd.f32 0.0, %v818
          %v820 = vpop.f32.mrb[0].mxu0
          %v821 = vpop.f32.mrb[0].mxu0
          %v822 = vadd.f32 0.0, %v821
          %v823 = vpop.f32.mrb[0].mxu0
          %824 = vmatprep.mubr.bf16.mxu0 0
          %825 = vmatmul.mubr.bf16.gmra.mrb[0].mxu0 %v734
          %v826 = vpop.f32.mrb[0].mxu0
          %v827 = vadd.f32 0.0, %v826
          %v828 = vpop.f32.mrb[0].mxu0
          %v829 = vpop.f32.mrb[0].mxu0
          %v830 = vadd.f32 0.0, %v829
          %v831 = vpop.f32.mrb[0].mxu0
          %832 = vdwg.mxu0
          %v833 = vpack.c.bf16 %v774, %v771
          %v834 = vpack.c.bf16 %v782, %v779
          %v835 = vpack.c.bf16 %v790, %v787
          %v836 = vpack.c.bf16 %v798, %v795
          %v837 = vpack.c.bf16 %v806, %v803
          %v838 = vpack.c.bf16 %v814, %v811
          %v839 = vpack.c.bf16 %v822, %v819
          %v840 = vpack.c.bf16 %v830, %v827
          %841 = vst.msk [vmem:[#allocation2] sm:$0xff] %vm711, %v833
          %842 = vst.msk [vmem:[#allocation2 + $0x8] sm:$0xff] %vm711, %v834
          %843 = vst.msk [vmem:[#allocation2 + $0x10] sm:$0xff] %vm711, %v835
          %844 = vst.msk [vmem:[#allocation2 + $0x18] sm:$0xff] %vm711, %v836
          %845 = vst.msk [vmem:[#allocation2 + $0x20] sm:$0xff] %vm711, %v837
          %846 = vst.msk [vmem:[#allocation2 + $0x28] sm:$0xff] %vm711, %v838
          %847 = vst.msk [vmem:[#allocation2 + $0x30] sm:$0xff] %vm711, %v839
          %848 = vst.msk [vmem:[#allocation2 + $0x38] sm:$0xff] %vm711, %v840
          %v849 = vld [vmem:[%s5] sm:$0xf]
          %v850 = vld [vmem:[%s5 + $0x4] sm:$0xf]
          %v851 = vld [vmem:[%s5 + $0x8] sm:$0xf]
          %v852 = vld [vmem:[%s5 + $0xc] sm:$0xf]
          %v853 = vld [vmem:[%s5 + $0x10] sm:$0xf]
          %v854 = vld [vmem:[%s5 + $0x14] sm:$0xf]
          %v855 = vld [vmem:[%s5 + $0x18] sm:$0xf]
          %v856 = vld [vmem:[%s5 + $0x1c] sm:$0xf]
          %v857 = vld [vmem:[%s6] sm:$0x1]
          %v859 = vlaneseq
          %v860 = vshrl.u32 %v859, 7
          %v861 = vsub.s32 0, %v860
          %v862 = vrot.slane %v857, %v861
          %v872 = vunpack.c.l.b16 %v849
          %v873 = vunpack.c.l.b16 %v850
          %v874 = vunpack.c.l.b16 %v851
          %v875 = vunpack.c.l.b16 %v852
          %v876 = vunpack.c.l.b16 %v853
          %v877 = vunpack.c.l.b16 %v854
          %v878 = vunpack.c.l.b16 %v855
          %v879 = vunpack.c.l.b16 %v856
          %v880 = vpack.c.b16 %v873, %v872
          %v881 = vpack.c.b16 %v875, %v874
          %v882 = vpack.c.b16 %v877, %v876
          %v883 = vpack.c.b16 %v879, %v878
          %888 = vmatprep.subr.bf16.mxu0 0
          %889 = vmatpush1.bf16.msra.mxu0 %v880
          %890 = vmatprep.subr.bf16.mxu0 0
          %891 = vmatpush1.bf16.msra.mxu0 %v881
          %892 = vmatprep.subr.bf16.mxu0 0
          %893 = vmatpush1.bf16.msra.mxu0 %v882
          %894 = vmatprep.subr.bf16.mxu0 0
          %895 = vmatpush1.bf16.msra.mxu0 %v883
          %896 = vmatprep.subr.bf16.mxu0 0
          %897 = vmatpush1.bf16.msra.mxu0 0
          %898 = vmatprep.subr.bf16.mxu0 0
          %899 = vmatpush1.bf16.msra.mxu0 0
          %900 = vmatprep.subr.bf16.mxu0 0
          %901 = vmatpush1.bf16.msra.mxu0 0
          %902 = vmatprep.subr.bf16.mxu0 0
          %903 = vmatpush1.bf16.msra.mxu0 0
          %904 = vmatprep.subr.bf16.mxu0 0
          %905 = vmatpush1.bf16.msra.mxu0 0
          %906 = vmatprep.subr.bf16.mxu0 0
          %907 = vmatpush1.bf16.msra.mxu0 0
          %908 = vmatprep.subr.bf16.mxu0 0
          %909 = vmatpush1.bf16.msra.mxu0 0
          %910 = vmatprep.subr.bf16.mxu0 0
          %911 = vmatpush1.bf16.msra.mxu0 0
          %912 = vmatprep.subr.bf16.mxu0 0
          %913 = vmatpush1.bf16.msra.mxu0 0
          %914 = vmatprep.subr.bf16.mxu0 0
          %915 = vmatpush1.bf16.msra.mxu0 0
          %916 = vmatprep.subr.bf16.mxu0 0
          %917 = vmatpush1.bf16.msra.mxu0 0
          %918 = vmatprep.subr.bf16.mxu0 0
          %919 = vmatpush1.bf16.msra.mxu0 0
          %920 = vmatprep.mubr.bf16.mxu0 0
          %921 = vmatmul.mubr.bf16.gmra.mrb[0].mxu0 %v713
          %v922 = vpop.f32.mrb[0].mxu0
          %v923 = vadd.f32 %v862, %v922
          %v924 = vpop.f32.mrb[0].mxu0
          %v925 = vpop.f32.mrb[0].mxu0
          %v926 = vadd.f32 %v862, %v925
          %v927 = vpop.f32.mrb[0].mxu0
          %928 = vmatprep.mubr.bf16.mxu0 0
          %929 = vmatmul.mubr.bf16.gmra.mrb[0].mxu0 %v716
          %v930 = vpop.f32.mrb[0].mxu0
          %v931 = vadd.f32 %v862, %v930
          %v932 = vpop.f32.mrb[0].mxu0
          %v933 = vpop.f32.mrb[0].mxu0
          %v934 = vadd.f32 %v862, %v933
          %v935 = vpop.f32.mrb[0].mxu0
          %936 = vmatprep.mubr.bf16.mxu0 0
          %937 = vmatmul.mubr.bf16.gmra.mrb[0].mxu0 %v719
          %v938 = vpop.f32.mrb[0].mxu0
          %v939 = vadd.f32 %v862, %v938
          %v940 = vpop.f32.mrb[0].mxu0
          %v941 = vpop.f32.mrb[0].mxu0
          %v942 = vadd.f32 %v862, %v941
          %v943 = vpop.f32.mrb[0].mxu0
          %944 = vmatprep.mubr.bf16.mxu0 0
          %945 = vmatmul.mubr.bf16.gmra.mrb[0].mxu0 %v722
          %v946 = vpop.f32.mrb[0].mxu0
          %v947 = vadd.f32 %v862, %v946
          %v948 = vpop.f32.mrb[0].mxu0
          %v949 = vpop.f32.mrb[0].mxu0
          %v950 = vadd.f32 %v862, %v949
          %v951 = vpop.f32.mrb[0].mxu0
          %952 = vmatprep.mubr.bf16.mxu0 0
          %953 = vmatmul.mubr.bf16.gmra.mrb[0].mxu0 %v725
          %v954 = vpop.f32.mrb[0].mxu0
          %v955 = vadd.f32 %v862, %v954
          %v956 = vpop.f32.mrb[0].mxu0
          %v957 = vpop.f32.mrb[0].mxu0
          %v958 = vadd.f32 %v862, %v957
          %v959 = vpop.f32.mrb[0].mxu0
          %960 = vmatprep.mubr.bf16.mxu0 0
          %961 = vmatmul.mubr.bf16.gmra.mrb[0].mxu0 %v728
          %v962 = vpop.f32.mrb[0].mxu0
          %v963 = vadd.f32 %v862, %v962
          %v964 = vpop.f32.mrb[0].mxu0
          %v965 = vpop.f32.mrb[0].mxu0
          %v966 = vadd.f32 %v862, %v965
          %v967 = vpop.f32.mrb[0].mxu0
          %968 = vmatprep.mubr.bf16.mxu0 0
          %969 = vmatmul.mubr.bf16.gmra.mrb[0].mxu0 %v731
          %v970 = vpop.f32.mrb[0].mxu0
          %v971 = vadd.f32 %v862, %v970
          %v972 = vpop.f32.mrb[0].mxu0
          %v973 = vpop.f32.mrb[0].mxu0
          %v974 = vadd.f32 %v862, %v973
          %v975 = vpop.f32.mrb[0].mxu0
          %976 = vmatprep.mubr.bf16.mxu0 0
          %977 = vmatmul.mubr.bf16.gmra.mrb[0].mxu0 %v734
          %v978 = vpop.f32.mrb[0].mxu0
          %v979 = vadd.f32 %v862, %v978
          %v980 = vpop.f32.mrb[0].mxu0
          %v981 = vpop.f32.mrb[0].mxu0
          %v982 = vadd.f32 %v862, %v981
          %v983 = vpop.f32.mrb[0].mxu0
          %984 = vdwg.mxu0
          %985 = vst.msk [vmem:[#allocation3] sm:$0xff] %vm711, %v923
          %986 = vst.msk [vmem:[#allocation3 + $0x8] sm:$0xff] %vm711, %v926
          %987 = vst.msk [vmem:[#allocation3 + $0x10] sm:$0xff] %vm711, %v931
          %988 = vst.msk [vmem:[#allocation3 + $0x18] sm:$0xff] %vm711, %v934
          %989 = vst.msk [vmem:[#allocation3 + $0x20] sm:$0xff] %vm711, %v939
          %990 = vst.msk [vmem:[#allocation3 + $0x28] sm:$0xff] %vm711, %v942
          %991 = vst.msk [vmem:[#allocation3 + $0x30] sm:$0xff] %vm711, %v947
          %992 = vst.msk [vmem:[#allocation3 + $0x38] sm:$0xff] %vm711, %v950
          %993 = vst.msk [vmem:[#allocation3 + $0x40] sm:$0xff] %vm711, %v955
          %994 = vst.msk [vmem:[#allocation3 + $0x48] sm:$0xff] %vm711, %v958
          %995 = vst.msk [vmem:[#allocation3 + $0x50] sm:$0xff] %vm711, %v963
          %996 = vst.msk [vmem:[#allocation3 + $0x58] sm:$0xff] %vm711, %v966
          %997 = vst.msk [vmem:[#allocation3 + $0x60] sm:$0xff] %vm711, %v971
          %998 = vst.msk [vmem:[#allocation3 + $0x68] sm:$0xff] %vm711, %v974
          %999 = vst.msk [vmem:[#allocation3 + $0x70] sm:$0xff] %vm711, %v979
          %1000 = vst.msk [vmem:[#allocation3 + $0x78] sm:$0xff] %vm711, %v982
          %1001 = vst.msk [vmem:[#allocation4] sm:$0xff] %vm711, -1e+30
          %1002 = vst.msk [vmem:[#allocation4 + $0x8] sm:$0xff] %vm711, -1e+30
          %1003 = vst.msk [vmem:[#allocation4 + $0x10] sm:$0xff] %vm711, -1e+30
          %1004 = vst.msk [vmem:[#allocation4 + $0x18] sm:$0xff] %vm711, -1e+30
          %1005 = vst.msk [vmem:[#allocation4 + $0x20] sm:$0xff] %vm711, -1e+30
          %1006 = vst.msk [vmem:[#allocation4 + $0x28] sm:$0xff] %vm711, -1e+30
          %1007 = vst.msk [vmem:[#allocation4 + $0x30] sm:$0xff] %vm711, -1e+30
          %1008 = vst.msk [vmem:[#allocation4 + $0x38] sm:$0xff] %vm711, -1e+30
          %1009 = vst.msk [vmem:[#allocation4 + $0x40] sm:$0xff] %vm711, -1e+30
          %1010 = vst.msk [vmem:[#allocation4 + $0x48] sm:$0xff] %vm711, -1e+30
          %1011 = vst.msk [vmem:[#allocation4 + $0x50] sm:$0xff] %vm711, -1e+30
          %1012 = vst.msk [vmem:[#allocation4 + $0x58] sm:$0xff] %vm711, -1e+30
          %1013 = vst.msk [vmem:[#allocation4 + $0x60] sm:$0xff] %vm711, -1e+30
          %1014 = vst.msk [vmem:[#allocation4 + $0x68] sm:$0xff] %vm711, -1e+30
          %1015 = vst.msk [vmem:[#allocation4 + $0x70] sm:$0xff] %vm711, -1e+30
          %1016 = vst.msk [vmem:[#allocation4 + $0x78] sm:$0xff] %vm711, -1e+30
          %1017 = vst.msk [vmem:[#allocation5] sm:$0xff] %vm711, 0.0
          %1018 = vst.msk [vmem:[#allocation5 + $0x8] sm:$0xff] %vm711, 0.0
          %1019 = vst.msk [vmem:[#allocation5 + $0x10] sm:$0xff] %vm711, 0.0
          %1020 = vst.msk [vmem:[#allocation5 + $0x18] sm:$0xff] %vm711, 0.0
          %1021 = vst.msk [vmem:[#allocation5 + $0x20] sm:$0xff] %vm711, 0.0
          %1022 = vst.msk [vmem:[#allocation5 + $0x28] sm:$0xff] %vm711, 0.0
          %1023 = vst.msk [vmem:[#allocation5 + $0x30] sm:$0xff] %vm711, 0.0
          %1024 = vst.msk [vmem:[#allocation5 + $0x38] sm:$0xff] %vm711, 0.0
          %1025 = vst.msk [vmem:[#allocation5 + $0x40] sm:$0xff] %vm711, 0.0
          %1026 = vst.msk [vmem:[#allocation5 + $0x48] sm:$0xff] %vm711, 0.0
          %1027 = vst.msk [vmem:[#allocation5 + $0x50] sm:$0xff] %vm711, 0.0
          %1028 = vst.msk [vmem:[#allocation5 + $0x58] sm:$0xff] %vm711, 0.0
          %1029 = vst.msk [vmem:[#allocation5 + $0x60] sm:$0xff] %vm711, 0.0
          %1030 = vst.msk [vmem:[#allocation5 + $0x68] sm:$0xff] %vm711, 0.0
          %1031 = vst.msk [vmem:[#allocation5 + $0x70] sm:$0xff] %vm711, 0.0
          %1032 = vst.msk [vmem:[#allocation5 + $0x78] sm:$0xff] %vm711, 0.0
          %1033 = vst.msk [vmem:[#allocation6] sm:$0xff] %vm711, 0.0
          %1034 = vst.msk [vmem:[#allocation6 + $0x8] sm:$0xff] %vm711, 0.0
          %1035 = vst.msk [vmem:[#allocation6 + $0x10] sm:$0xff] %vm711, 0.0
          %1036 = vst.msk [vmem:[#allocation6 + $0x18] sm:$0xff] %vm711, 0.0
          %1037 = vst.msk [vmem:[#allocation6 + $0x20] sm:$0xff] %vm711, 0.0
          %1038 = vst.msk [vmem:[#allocation6 + $0x28] sm:$0xff] %vm711, 0.0
          %1039 = vst.msk [vmem:[#allocation6 + $0x30] sm:$0xff] %vm711, 0.0
          %1040 = vst.msk [vmem:[#allocation6 + $0x38] sm:$0xff] %vm711, 0.0
          %1041 = vst.msk [vmem:[#allocation6 + $0x40] sm:$0xff] %vm711, 0.0
          %1042 = vst.msk [vmem:[#allocation6 + $0x48] sm:$0xff] %vm711, 0.0
          %1043 = vst.msk [vmem:[#allocation6 + $0x50] sm:$0xff] %vm711, 0.0
          %1044 = vst.msk [vmem:[#allocation6 + $0x58] sm:$0xff] %vm711, 0.0
          %1045 = vst.msk [vmem:[#allocation6 + $0x60] sm:$0xff] %vm711, 0.0
          %1046 = vst.msk [vmem:[#allocation6 + $0x68] sm:$0xff] %vm711, 0.0
          %1047 = vst.msk [vmem:[#allocation6 + $0x70] sm:$0xff] %vm711, 0.0
          %1048 = vst.msk [vmem:[#allocation6 + $0x78] sm:$0xff] %vm711, 0.0
        $region142: #{attention_with_pair_bias.1} parent=129 // pred_fallthru
          _
        %v1049 = vld [vmem:[#allocation2] sm:$0xff]
        %v1050 = vld [vmem:[#allocation2 + $0x8] sm:$0xff]
        %v1051 = vld [vmem:[#allocation2 + $0x10] sm:$0xff]
        %v1052 = vld [vmem:[#allocation2 + $0x18] sm:$0xff]
        %v1053 = vld [vmem:[#allocation2 + $0x20] sm:$0xff]
        %v1054 = vld [vmem:[#allocation2 + $0x28] sm:$0xff]
        %v1055 = vld [vmem:[#allocation2 + $0x30] sm:$0xff]
        %v1056 = vld [vmem:[#allocation2 + $0x38] sm:$0xff]
        %v1057 = vld [vmem:[#allocation4] sm:$0xff]
        %v1058 = vld [vmem:[#allocation4 + $0x8] sm:$0xff]
        %v1059 = vld [vmem:[#allocation4 + $0x10] sm:$0xff]
        %v1060 = vld [vmem:[#allocation4 + $0x18] sm:$0xff]
        %v1061 = vld [vmem:[#allocation4 + $0x20] sm:$0xff]
        %v1062 = vld [vmem:[#allocation4 + $0x28] sm:$0xff]
        %v1063 = vld [vmem:[#allocation4 + $0x30] sm:$0xff]
        %v1064 = vld [vmem:[#allocation4 + $0x38] sm:$0xff]
        %v1065 = vld [vmem:[#allocation4 + $0x40] sm:$0xff]
        %v1066 = vld [vmem:[#allocation4 + $0x48] sm:$0xff]
        %v1067 = vld [vmem:[#allocation4 + $0x50] sm:$0xff]
        %v1068 = vld [vmem:[#allocation4 + $0x58] sm:$0xff]
        %v1069 = vld [vmem:[#allocation4 + $0x60] sm:$0xff]
        %v1070 = vld [vmem:[#allocation4 + $0x68] sm:$0xff]
        %v1071 = vld [vmem:[#allocation4 + $0x70] sm:$0xff]
        %v1072 = vld [vmem:[#allocation4 + $0x78] sm:$0xff]
        %v1073 = vld [vmem:[%s577] sm:$0xf]
        %v1074 = vld [vmem:[%s577 + $0x4] sm:$0xf]
        %v1075 = vld [vmem:[%s577 + $0x8] sm:$0xf]
        %v1076 = vld [vmem:[%s577 + $0xc] sm:$0xf]
        %v1077 = vld [vmem:[%s641] sm:$0xf]
        %v1078 = vld [vmem:[%s641 + $0x4] sm:$0xf]
        %v1079 = vld [vmem:[%s641 + $0x8] sm:$0xf]
        %v1080 = vld [vmem:[%s641 + $0xc] sm:$0xf]
        %v1081 = vld [vmem:[%s641 + $0x10] sm:$0xf]
        %v1082 = vld [vmem:[%s641 + $0x14] sm:$0xf]
        %v1083 = vld [vmem:[%s641 + $0x18] sm:$0xf]
        %v1084 = vld [vmem:[%s641 + $0x1c] sm:$0xf]
        %v1085 = vld [vmem:[%s641 + $0x20] sm:$0xf]
        %v1086 = vld [vmem:[%s641 + $0x24] sm:$0xf]
        %v1087 = vld [vmem:[%s641 + $0x28] sm:$0xf]
        %v1088 = vld [vmem:[%s641 + $0x2c] sm:$0xf]
        %v1089 = vld [vmem:[%s641 + $0x30] sm:$0xf]
        %v1090 = vld [vmem:[%s641 + $0x34] sm:$0xf]
        %v1091 = vld [vmem:[%s641 + $0x38] sm:$0xf]
        %v1092 = vld [vmem:[%s641 + $0x3c] sm:$0xf]
        %v1093 = vld [vmem:[%s584] sm:$0xf]
        %v1094 = vld [vmem:[%s584 + $0x4] sm:$0xf]
        %v1095 = vld [vmem:[%s584 + $0x8] sm:$0xf]
        %v1096 = vld [vmem:[%s584 + $0xc] sm:$0xf]
        %v1097 = vld [vmem:[%s584 + $0x10] sm:$0xf]
        %v1098 = vld [vmem:[%s584 + $0x14] sm:$0xf]
        %v1099 = vld [vmem:[%s584 + $0x18] sm:$0xf]
        %v1100 = vld [vmem:[%s584 + $0x1c] sm:$0xf]
        %v1101 = vld [vmem:[%s584 + $0x20] sm:$0xf]
        %v1102 = vld [vmem:[%s584 + $0x24] sm:$0xf]
        %v1103 = vld [vmem:[%s584 + $0x28] sm:$0xf]
        %v1104 = vld [vmem:[%s584 + $0x2c] sm:$0xf]
        %v1105 = vld [vmem:[%s584 + $0x30] sm:$0xf]
        %v1106 = vld [vmem:[%s584 + $0x34] sm:$0xf]
        %v1107 = vld [vmem:[%s584 + $0x38] sm:$0xf]
        %v1108 = vld [vmem:[%s584 + $0x3c] sm:$0xf]
        %v1109 = vunpack.c.l.bf16 %v1093
        %v1110 = vunpack.c.l.bf16 %v1094
        %v1111 = vunpack.c.l.bf16 %v1095
        %v1112 = vunpack.c.l.bf16 %v1096
        %v1113 = vunpack.c.l.bf16 %v1097
        %v1114 = vunpack.c.l.bf16 %v1098
        %v1115 = vunpack.c.l.bf16 %v1099
        %v1116 = vunpack.c.l.bf16 %v1100
        %v1117 = vunpack.c.l.bf16 %v1101
        %v1118 = vunpack.c.l.bf16 %v1102
        %v1119 = vunpack.c.l.bf16 %v1103
        %v1120 = vunpack.c.l.bf16 %v1104
        %v1121 = vunpack.c.l.bf16 %v1105
        %v1122 = vunpack.c.l.bf16 %v1106
        %v1123 = vunpack.c.l.bf16 %v1107
        %v1124 = vunpack.c.l.bf16 %v1108
        %v1129 = vunpack.c.l.b16 %v1073
        %v1130 = vunpack.c.l.b16 %v1074
        %v1131 = vunpack.c.l.b16 %v1075
        %v1132 = vunpack.c.l.b16 %v1076
        %v1133 = vpack.c.b16 %v1130, %v1129
        %v1134 = vpack.c.b16 %v1132, %v1131
        %vm1137 = vcmask 261120
        %v1139 = vsel %vm1137, %v1049, 0
        %v1142 = vsel %vm1137, %v1050, 0
        %v1145 = vsel %vm1137, %v1051, 0
        %v1148 = vsel %vm1137, %v1052, 0
        %v1151 = vsel %vm1137, %v1053, 0
        %v1154 = vsel %vm1137, %v1054, 0
        %v1157 = vsel %vm1137, %v1055, 0
        %v1160 = vsel %vm1137, %v1056, 0
        %1162 = vmatprep.subr.bf16.mxu0 0
        %1163 = vmatpush1.bf16.msra.mxu0 %v1133
        %1164 = vmatprep.subr.bf16.mxu0 0
        %1165 = vmatpush1.bf16.msra.mxu0 %v1134
        %1166 = vmatprep.subr.bf16.mxu0 0
        %1167 = vmatpush1.bf16.msra.mxu0 0
        %1168 = vmatprep.subr.bf16.mxu0 0
        %1169 = vmatpush1.bf16.msra.mxu0 0
        %1170 = vmatprep.subr.bf16.mxu0 0
        %1171 = vmatpush1.bf16.msra.mxu0 0
        %1172 = vmatprep.subr.bf16.mxu0 0
        %1173 = vmatpush1.bf16.msra.mxu0 0
        %1174 = vmatprep.subr.bf16.mxu0 0
        %1175 = vmatpush1.bf16.msra.mxu0 0
        %1176 = vmatprep.subr.bf16.mxu0 0
        %1177 = vmatpush1.bf16.msra.mxu0 0
        %1178 = vmatprep.subr.bf16.mxu0 0
        %1179 = vmatpush1.bf16.msra.mxu0 0
        %1180 = vmatprep.subr.bf16.mxu0 0
        %1181 = vmatpush1.bf16.msra.mxu0 0
        %1182 = vmatprep.subr.bf16.mxu0 0
        %1183 = vmatpush1.bf16.msra.mxu0 0
        %1184 = vmatprep.subr.bf16.mxu0 0
        %1185 = vmatpush1.bf16.msra.mxu0 0
        %1186 = vmatprep.subr.bf16.mxu0 0
        %1187 = vmatpush1.bf16.msra.mxu0 0
        %1188 = vmatprep.subr.bf16.mxu0 0
        %1189 = vmatpush1.bf16.msra.mxu0 0
        %1190 = vmatprep.subr.bf16.mxu0 0
        %1191 = vmatpush1.bf16.msra.mxu0 0
        %1192 = vmatprep.subr.bf16.mxu0 0
        %1193 = vmatpush1.bf16.msra.mxu0 0
        %1194 = vmatprep.mubr.bf16.mxu0 0
        %1195 = vmatmul.mubr.bf16.gmra.mrb[0].mxu0 %v1139
        %v1196 = vpop.f32.mrb[0].mxu0
        %v1197 = vadd.f32 %v1109, %v1196
        %v1198 = vpop.f32.mrb[0].mxu0
        %v1199 = vpop.f32.mrb[0].mxu0
        %v1200 = vadd.f32 %v1110, %v1199
        %v1201 = vpop.f32.mrb[0].mxu0
        %1202 = vmatprep.mubr.bf16.mxu0 0
        %1203 = vmatmul.mubr.bf16.gmra.mrb[0].mxu0 %v1142
        %v1204 = vpop.f32.mrb[0].mxu0
        %v1205 = vadd.f32 %v1111, %v1204
        %v1206 = vpop.f32.mrb[0].mxu0
        %v1207 = vpop.f32.mrb[0].mxu0
        %v1208 = vadd.f32 %v1112, %v1207
        %v1209 = vpop.f32.mrb[0].mxu0
        %1210 = vmatprep.mubr.bf16.mxu0 0
        %1211 = vmatmul.mubr.bf16.gmra.mrb[0].mxu0 %v1145
        %v1212 = vpop.f32.mrb[0].mxu0
        %v1213 = vadd.f32 %v1113, %v1212
        %v1214 = vpop.f32.mrb[0].mxu0
        %v1215 = vpop.f32.mrb[0].mxu0
        %v1216 = vadd.f32 %v1114, %v1215
        %v1217 = vpop.f32.mrb[0].mxu0
        %1218 = vmatprep.mubr.bf16.mxu0 0
        %1219 = vmatmul.mubr.bf16.gmra.mrb[0].mxu0 %v1148
        %v1220 = vpop.f32.mrb[0].mxu0
        %v1221 = vadd.f32 %v1115, %v1220
        %v1222 = vpop.f32.mrb[0].mxu0
        %v1223 = vpop.f32.mrb[0].mxu0
        %v1224 = vadd.f32 %v1116, %v1223
        %v1225 = vpop.f32.mrb[0].mxu0
        %1226 = vmatprep.mubr.bf16.mxu0 0
        %1227 = vmatmul.mubr.bf16.gmra.mrb[0].mxu0 %v1151
        %v1228 = vpop.f32.mrb[0].mxu0
        %v1229 = vadd.f32 %v1117, %v1228
        %v1230 = vpop.f32.mrb[0].mxu0
        %v1231 = vpop.f32.mrb[0].mxu0
        %v1232 = vadd.f32 %v1118, %v1231
        %v1233 = vpop.f32.mrb[0].mxu0
        %1234 = vmatprep.mubr.bf16.mxu0 0
        %1235 = vmatmul.mubr.bf16.gmra.mrb[0].mxu0 %v1154
        %v1236 = vpop.f32.mrb[0].mxu0
        %v1237 = vadd.f32 %v1119, %v1236
        %v1238 = vpop.f32.mrb[0].mxu0
        %v1239 = vpop.f32.mrb[0].mxu0
        %v1240 = vadd.f32 %v1120, %v1239
        %v1241 = vpop.f32.mrb[0].mxu0
        %1242 = vmatprep.mubr.bf16.mxu0 0
        %1243 = vmatmul.mubr.bf16.gmra.mrb[0].mxu0 %v1157
        %v1244 = vpop.f32.mrb[0].mxu0
        %v1245 = vadd.f32 %v1121, %v1244
        %v1246 = vpop.f32.mrb[0].mxu0
        %v1247 = vpop.f32.mrb[0].mxu0
        %v1248 = vadd.f32 %v1122, %v1247
        %v1249 = vpop.f32.mrb[0].mxu0
        %1250 = vmatprep.mubr.bf16.mxu0 0
        %1251 = vmatmul.mubr.bf16.gmra.mrb[0].mxu0 %v1160
        %v1252 = vpop.f32.mrb[0].mxu0
        %v1253 = vadd.f32 %v1123, %v1252
        %v1254 = vpop.f32.mrb[0].mxu0
        %v1255 = vpop.f32.mrb[0].mxu0
        %v1256 = vadd.f32 %v1124, %v1255
        %v1257 = vpop.f32.mrb[0].mxu0
        %1258 = vdwg.mxu0
        %1259 = vmax.xlane.f32.xlu0 %v1197
        %v1260 = vpop.xlane.xlu0 %1259
        %1261 = vmax.xlane.f32.xlu0 %v1200
        %v1262 = vpop.xlane.xlu0 %1261
        %1263 = vmax.xlane.f32.xlu0 %v1205
        %v1264 = vpop.xlane.xlu0 %1263
        %1265 = vmax.xlane.f32.xlu0 %v1208
        %v1266 = vpop.xlane.xlu0 %1265
        %1267 = vmax.xlane.f32.xlu0 %v1213
        %v1268 = vpop.xlane.xlu0 %1267
        %1269 = vmax.xlane.f32.xlu0 %v1216
        %v1270 = vpop.xlane.xlu0 %1269
        %1271 = vmax.xlane.f32.xlu0 %v1221
        %v1272 = vpop.xlane.xlu0 %1271
        %1273 = vmax.xlane.f32.xlu0 %v1224
        %v1274 = vpop.xlane.xlu0 %1273
        %1275 = vmax.xlane.f32.xlu0 %v1229
        %v1276 = vpop.xlane.xlu0 %1275
        %1277 = vmax.xlane.f32.xlu0 %v1232
        %v1278 = vpop.xlane.xlu0 %1277
        %1279 = vmax.xlane.f32.xlu0 %v1237
        %v1280 = vpop.xlane.xlu0 %1279
        %1281 = vmax.xlane.f32.xlu0 %v1240
        %v1282 = vpop.xlane.xlu0 %1281
        %1283 = vmax.xlane.f32.xlu0 %v1245
        %v1284 = vpop.xlane.xlu0 %1283
        %1285 = vmax.xlane.f32.xlu0 %v1248
        %v1286 = vpop.xlane.xlu0 %1285
        %1287 = vmax.xlane.f32.xlu0 %v1253
        %v1288 = vpop.xlane.xlu0 %1287
        %1289 = vmax.xlane.f32.xlu0 %v1256
        %v1290 = vpop.xlane.xlu0 %1289
        %v1291 = vmax.f32 %v1057, %v1260
        %v1292 = vmax.f32 %v1058, %v1262
        %v1293 = vmax.f32 %v1059, %v1264
        %v1294 = vmax.f32 %v1060, %v1266
        %v1295 = vmax.f32 %v1061, %v1268
        %v1296 = vmax.f32 %v1062, %v1270
        %v1297 = vmax.f32 %v1063, %v1272
        %v1298 = vmax.f32 %v1064, %v1274
        %v1299 = vmax.f32 %v1065, %v1276
        %v1300 = vmax.f32 %v1066, %v1278
        %v1301 = vmax.f32 %v1067, %v1280
        %v1302 = vmax.f32 %v1068, %v1282
        %v1303 = vmax.f32 %v1069, %v1284
        %v1304 = vmax.f32 %v1070, %v1286
        %v1305 = vmax.f32 %v1071, %v1288
        %v1306 = vmax.f32 %v1072, %v1290
        %1308 = vset.pattern.permute.xlu0 0
        %1309 = vperm.xlu0 %1308, %v1291
        %v1310 = vpop.permute.xlu0 %1309
        %1313 = vset.pattern.permute.xlu0 0
        %1314 = vperm.xlu0 %1313, %v1292
        %v1315 = vpop.permute.xlu0 %1314
        %1318 = vset.pattern.permute.xlu0 0
        %1319 = vperm.xlu0 %1318, %v1293
        %v1320 = vpop.permute.xlu0 %1319
        %1323 = vset.pattern.permute.xlu0 0
        %1324 = vperm.xlu0 %1323, %v1294
        %v1325 = vpop.permute.xlu0 %1324
        %1328 = vset.pattern.permute.xlu0 0
        %1329 = vperm.xlu0 %1328, %v1295
        %v1330 = vpop.permute.xlu0 %1329
        %1333 = vset.pattern.permute.xlu0 0
        %1334 = vperm.xlu0 %1333, %v1296
        %v1335 = vpop.permute.xlu0 %1334
        %1338 = vset.pattern.permute.xlu0 0
        %1339 = vperm.xlu0 %1338, %v1297
        %v1340 = vpop.permute.xlu0 %1339
        %1343 = vset.pattern.permute.xlu0 0
        %1344 = vperm.xlu0 %1343, %v1298
        %v1345 = vpop.permute.xlu0 %1344
        %1348 = vset.pattern.permute.xlu0 0
        %1349 = vperm.xlu0 %1348, %v1299
        %v1350 = vpop.permute.xlu0 %1349
        %1353 = vset.pattern.permute.xlu0 0
        %1354 = vperm.xlu0 %1353, %v1300
        %v1355 = vpop.permute.xlu0 %1354
        %1358 = vset.pattern.permute.xlu0 0
        %1359 = vperm.xlu0 %1358, %v1301
        %v1360 = vpop.permute.xlu0 %1359
        %1363 = vset.pattern.permute.xlu0 0
        %1364 = vperm.xlu0 %1363, %v1302
        %v1365 = vpop.permute.xlu0 %1364
        %1368 = vset.pattern.permute.xlu0 0
        %1369 = vperm.xlu0 %1368, %v1303
        %v1370 = vpop.permute.xlu0 %1369
        %1373 = vset.pattern.permute.xlu0 0
        %1374 = vperm.xlu0 %1373, %v1304
        %v1375 = vpop.permute.xlu0 %1374
        %1378 = vset.pattern.permute.xlu0 0
        %1379 = vperm.xlu0 %1378, %v1305
        %v1380 = vpop.permute.xlu0 %1379
        %1383 = vset.pattern.permute.xlu0 0
        %1384 = vperm.xlu0 %1383, %v1306
        %v1385 = vpop.permute.xlu0 %1384
        %v1387 = vsub.f32 %v1197, %v1310
        %v1388 = vsub.f32 %v1200, %v1315
        %v1389 = vsub.f32 %v1205, %v1320
        %v1390 = vsub.f32 %v1208, %v1325
        %v1391 = vsub.f32 %v1213, %v1330
        %v1392 = vsub.f32 %v1216, %v1335
        %v1393 = vsub.f32 %v1221, %v1340
        %v1394 = vsub.f32 %v1224, %v1345
        %v1395 = vsub.f32 %v1229, %v1350
        %v1396 = vsub.f32 %v1232, %v1355
        %v1397 = vsub.f32 %v1237, %v1360
        %v1398 = vsub.f32 %v1240, %v1365
        %v1399 = vsub.f32 %v1245, %v1370
        %v1400 = vsub.f32 %v1248, %v1375
        %v1401 = vsub.f32 %v1253, %v1380
        %v1402 = vsub.f32 %v1256, %v1385
        %v1403 = vmul.f32 %v1387, 1.442695
        %v1404 = vpow.pop %v1403
        %v1405 = vmul.f32 %v1388, 1.442695
        %v1406 = vpow.pop %v1405
        %v1407 = vmul.f32 %v1389, 1.442695
        %v1408 = vpow.pop %v1407
        %v1409 = vmul.f32 %v1390, 1.442695
        %v1410 = vpow.pop %v1409
        %v1411 = vmul.f32 %v1391, 1.442695
        %v1412 = vpow.pop %v1411
        %v1413 = vmul.f32 %v1392, 1.442695
        %v1414 = vpow.pop %v1413
        %v1415 = vmul.f32 %v1393, 1.442695
        %v1416 = vpow.pop %v1415
        %v1417 = vmul.f32 %v1394, 1.442695
        %v1418 = vpow.pop %v1417
        %v1419 = vmul.f32 %v1395, 1.442695
        %v1420 = vpow.pop %v1419
        %v1421 = vmul.f32 %v1396, 1.442695
        %v1422 = vpow.pop %v1421
        %v1423 = vmul.f32 %v1397, 1.442695
        %v1424 = vpow.pop %v1423
        %v1425 = vmul.f32 %v1398, 1.442695
        %v1426 = vpow.pop %v1425
        %v1427 = vmul.f32 %v1399, 1.442695
        %v1428 = vpow.pop %v1427
        %v1429 = vmul.f32 %v1400, 1.442695
        %v1430 = vpow.pop %v1429
        %v1431 = vmul.f32 %v1401, 1.442695
        %v1432 = vpow.pop %v1431
        %v1433 = vmul.f32 %v1402, 1.442695
        %v1434 = vpow.pop %v1433
        %v1435 = vsub.f32 %v1057, %v1291
        %v1436 = vsub.f32 %v1058, %v1292
        %v1437 = vsub.f32 %v1059, %v1293
        %v1438 = vsub.f32 %v1060, %v1294
        %v1439 = vsub.f32 %v1061, %v1295
        %v1440 = vsub.f32 %v1062, %v1296
        %v1441 = vsub.f32 %v1063, %v1297
        %v1442 = vsub.f32 %v1064, %v1298
        %v1443 = vsub.f32 %v1065, %v1299
        %v1444 = vsub.f32 %v1066, %v1300
        %v1445 = vsub.f32 %v1067, %v1301
        %v1446 = vsub.f32 %v1068, %v1302
        %v1447 = vsub.f32 %v1069, %v1303
        %v1448 = vsub.f32 %v1070, %v1304
        %v1449 = vsub.f32 %v1071, %v1305
        %v1450 = vsub.f32 %v1072, %v1306
        %v1451 = vmul.f32 %v1435, 1.442695
        %v1452 = vpow.pop %v1451
        %v1453 = vmul.f32 %v1436, 1.442695
        %v1454 = vpow.pop %v1453
        %v1455 = vmul.f32 %v1437, 1.442695
        %v1456 = vpow.pop %v1455
        %v1457 = vmul.f32 %v1438, 1.442695
        %v1458 = vpow.pop %v1457
        %v1459 = vmul.f32 %v1439, 1.442695
        %v1460 = vpow.pop %v1459
        %v1461 = vmul.f32 %v1440, 1.442695
        %v1462 = vpow.pop %v1461
        %v1463 = vmul.f32 %v1441, 1.442695
        %v1464 = vpow.pop %v1463
        %v1465 = vmul.f32 %v1442, 1.442695
        %v1466 = vpow.pop %v1465
        %v1467 = vmul.f32 %v1443, 1.442695
        %v1468 = vpow.pop %v1467
        %v1469 = vmul.f32 %v1444, 1.442695
        %v1470 = vpow.pop %v1469
        %v1471 = vmul.f32 %v1445, 1.442695
        %v1472 = vpow.pop %v1471
        %v1473 = vmul.f32 %v1446, 1.442695
        %v1474 = vpow.pop %v1473
        %v1475 = vmul.f32 %v1447, 1.442695
        %v1476 = vpow.pop %v1475
        %v1477 = vmul.f32 %v1448, 1.442695
        %v1478 = vpow.pop %v1477
        %v1479 = vmul.f32 %v1449, 1.442695
        %v1480 = vpow.pop %v1479
        %v1481 = vmul.f32 %v1450, 1.442695
        %v1482 = vpow.pop %v1481
        %1483 = vadd.xlane.f32.xlu0 %v1404
        %v1484 = vpop.xlane.xlu0 %1483
        %1485 = vadd.xlane.f32.xlu0 %v1406
        %v1486 = vpop.xlane.xlu0 %1485
        %1487 = vadd.xlane.f32.xlu0 %v1408
        %v1488 = vpop.xlane.xlu0 %1487
        %1489 = vadd.xlane.f32.xlu0 %v1410
        %v1490 = vpop.xlane.xlu0 %1489
        %1491 = vadd.xlane.f32.xlu0 %v1412
        %v1492 = vpop.xlane.xlu0 %1491
        %1493 = vadd.xlane.f32.xlu0 %v1414
        %v1494 = vpop.xlane.xlu0 %1493
        %1495 = vadd.xlane.f32.xlu0 %v1416
        %v1496 = vpop.xlane.xlu0 %1495
        %1497 = vadd.xlane.f32.xlu0 %v1418
        %v1498 = vpop.xlane.xlu0 %1497
        %1499 = vadd.xlane.f32.xlu0 %v1420
        %v1500 = vpop.xlane.xlu0 %1499
        %1501 = vadd.xlane.f32.xlu0 %v1422
        %v1502 = vpop.xlane.xlu0 %1501
        %1503 = vadd.xlane.f32.xlu0 %v1424
        %v1504 = vpop.xlane.xlu0 %1503
        %1505 = vadd.xlane.f32.xlu0 %v1426
        %v1506 = vpop.xlane.xlu0 %1505
        %1507 = vadd.xlane.f32.xlu0 %v1428
        %v1508 = vpop.xlane.xlu0 %1507
        %1509 = vadd.xlane.f32.xlu0 %v1430
        %v1510 = vpop.xlane.xlu0 %1509
        %1511 = vadd.xlane.f32.xlu0 %v1432
        %v1512 = vpop.xlane.xlu0 %1511
        %1513 = vadd.xlane.f32.xlu0 %v1434
        %v1514 = vpop.xlane.xlu0 %1513
        %v1515 = vpack.c.bf16 %v1406, %v1404
        %v1516 = vpack.c.bf16 %v1410, %v1408
        %v1517 = vpack.c.bf16 %v1414, %v1412
        %v1518 = vpack.c.bf16 %v1418, %v1416
        %v1519 = vpack.c.bf16 %v1422, %v1420
        %v1520 = vpack.c.bf16 %v1426, %v1424
        %v1521 = vpack.c.bf16 %v1430, %v1428
        %v1522 = vpack.c.bf16 %v1434, %v1432
        %v1539 = vunpack.c.l.b16 %v1077
        %v1540 = vunpack.c.l.b16 %v1078
        %v1541 = vunpack.c.l.b16 %v1079
        %v1542 = vunpack.c.l.b16 %v1080
        %v1543 = vunpack.c.l.b16 %v1081
        %v1544 = vunpack.c.l.b16 %v1082
        %v1545 = vunpack.c.l.b16 %v1083
        %v1546 = vunpack.c.l.b16 %v1084
        %v1547 = vunpack.c.l.b16 %v1085
        %v1548 = vunpack.c.l.b16 %v1086
        %v1549 = vunpack.c.l.b16 %v1087
        %v1550 = vunpack.c.l.b16 %v1088
        %v1551 = vunpack.c.l.b16 %v1089
        %v1552 = vunpack.c.l.b16 %v1090
        %v1553 = vunpack.c.l.b16 %v1091
        %v1554 = vunpack.c.l.b16 %v1092
        %v1555 = vpack.c.b16 %v1540, %v1539
        %v1556 = vpack.c.b16 %v1542, %v1541
        %v1557 = vpack.c.b16 %v1544, %v1543
        %v1558 = vpack.c.b16 %v1546, %v1545
        %v1559 = vpack.c.b16 %v1548, %v1547
        %v1560 = vpack.c.b16 %v1550, %v1549
        %v1561 = vpack.c.b16 %v1552, %v1551
        %v1562 = vpack.c.b16 %v1554, %v1553
        %1571 = vmatprep.subr.bf16.mxu0 0
        %1572 = vmatpush1.bf16.msra.mxu0 %v1555
        %1573 = vmatprep.subr.bf16.mxu0 0
        %1574 = vmatpush1.bf16.msra.mxu0 %v1556
        %1575 = vmatprep.subr.bf16.mxu0 0
        %1576 = vmatpush1.bf16.msra.mxu0 %v1557
        %1577 = vmatprep.subr.bf16.mxu0 0
        %1578 = vmatpush1.bf16.msra.mxu0 %v1558
        %1579 = vmatprep.subr.bf16.mxu0 0
        %1580 = vmatpush1.bf16.msra.mxu0 %v1559
        %1581 = vmatprep.subr.bf16.mxu0 0
        %1582 = vmatpush1.bf16.msra.mxu0 %v1560
        %1583 = vmatprep.subr.bf16.mxu0 0
        %1584 = vmatpush1.bf16.msra.mxu0 %v1561
        %1585 = vmatprep.subr.bf16.mxu0 0
        %1586 = vmatpush1.bf16.msra.mxu0 %v1562
        %1587 = vmatprep.subr.bf16.mxu0 0
        %1588 = vmatpush1.bf16.msra.mxu0 0
        %1589 = vmatprep.subr.bf16.mxu0 0
        %1590 = vmatpush1.bf16.msra.mxu0 0
        %1591 = vmatprep.subr.bf16.mxu0 0
        %1592 = vmatpush1.bf16.msra.mxu0 0
        %1593 = vmatprep.subr.bf16.mxu0 0
        %1594 = vmatpush1.bf16.msra.mxu0 0
        %1595 = vmatprep.subr.bf16.mxu0 0
        %1596 = vmatpush1.bf16.msra.mxu0 0
        %1597 = vmatprep.subr.bf16.mxu0 0
        %1598 = vmatpush1.bf16.msra.mxu0 0
        %1599 = vmatprep.subr.bf16.mxu0 0
        %1600 = vmatpush1.bf16.msra.mxu0 0
        %1601 = vmatprep.subr.bf16.mxu0 0
        %1602 = vmatpush1.bf16.msra.mxu0 0
        %1603 = vmatprep.mubr.bf16.mxu0 0
        %1604 = vmatmul.mubr.bf16.gmra.mrb[0].mxu0 %v1515
        %v1605 = vpop.f32.mrb[0].mxu0
        %v1606 = vadd.f32 0.0, %v1605
        %v1607 = vpop.f32.mrb[0].mxu0
        %v1608 = vpop.f32.mrb[0].mxu0
        %v1609 = vadd.f32 0.0, %v1608
        %v1610 = vpop.f32.mrb[0].mxu0
        %1611 = vmatprep.mubr.bf16.mxu0 0
        %1612 = vmatmul.mubr.bf16.gmra.mrb[0].mxu0 %v1516
        %v1613 = vpop.f32.mrb[0].mxu0
        %v1614 = vadd.f32 0.0, %v1613
        %v1615 = vpop.f32.mrb[0].mxu0
        %v1616 = vpop.f32.mrb[0].mxu0
        %v1617 = vadd.f32 0.0, %v1616
        %v1618 = vpop.f32.mrb[0].mxu0
        %1619 = vmatprep.mubr.bf16.mxu0 0
        %1620 = vmatmul.mubr.bf16.gmra.mrb[0].mxu0 %v1517
        %v1621 = vpop.f32.mrb[0].mxu0
        %v1622 = vadd.f32 0.0, %v1621
        %v1623 = vpop.f32.mrb[0].mxu0
        %v1624 = vpop.f32.mrb[0].mxu0
        %v1625 = vadd.f32 0.0, %v1624
        %v1626 = vpop.f32.mrb[0].mxu0
        %1627 = vmatprep.mubr.bf16.mxu0 0
        %1628 = vmatmul.mubr.bf16.gmra.mrb[0].mxu0 %v1518
        %v1629 = vpop.f32.mrb[0].mxu0
        %v1630 = vadd.f32 0.0, %v1629
        %v1631 = vpop.f32.mrb[0].mxu0
        %v1632 = vpop.f32.mrb[0].mxu0
        %v1633 = vadd.f32 0.0, %v1632
        %v1634 = vpop.f32.mrb[0].mxu0
        %1635 = vmatprep.mubr.bf16.mxu0 0
        %1636 = vmatmul.mubr.bf16.gmra.mrb[0].mxu0 %v1519
        %v1637 = vpop.f32.mrb[0].mxu0
        %v1638 = vadd.f32 0.0, %v1637
        %v1639 = vpop.f32.mrb[0].mxu0
        %v1640 = vpop.f32.mrb[0].mxu0
        %v1641 = vadd.f32 0.0, %v1640
        %v1642 = vpop.f32.mrb[0].mxu0
        %1643 = vmatprep.mubr.bf16.mxu0 0
        %1644 = vmatmul.mubr.bf16.gmra.mrb[0].mxu0 %v1520
        %v1645 = vpop.f32.mrb[0].mxu0
        %v1646 = vadd.f32 0.0, %v1645
        %v1647 = vpop.f32.mrb[0].mxu0
        %v1648 = vpop.f32.mrb[0].mxu0
        %v1649 = vadd.f32 0.0, %v1648
        %v1650 = vpop.f32.mrb[0].mxu0
        %1651 = vmatprep.mubr.bf16.mxu0 0
        %1652 = vmatmul.mubr.bf16.gmra.mrb[0].mxu0 %v1521
        %v1653 = vpop.f32.mrb[0].mxu0
        %v1654 = vadd.f32 0.0, %v1653
        %v1655 = vpop.f32.mrb[0].mxu0
        %v1656 = vpop.f32.mrb[0].mxu0
        %v1657 = vadd.f32 0.0, %v1656
        %v1658 = vpop.f32.mrb[0].mxu0
        %1659 = vmatprep.mubr.bf16.mxu0 0
        %1660 = vmatmul.mubr.bf16.gmra.mrb[0].mxu0 %v1522
        %v1661 = vpop.f32.mrb[0].mxu0
        %v1662 = vadd.f32 0.0, %v1661
        %v1663 = vpop.f32.mrb[0].mxu0
        %v1664 = vpop.f32.mrb[0].mxu0
        %v1665 = vadd.f32 0.0, %v1664
        %v1666 = vpop.f32.mrb[0].mxu0
        %1667 = vdwg.mxu0
        %1669 = vset.pattern.permute.xlu0 0
        %1670 = vperm.xlu0 %1669, %v1452
        %v1671 = vpop.permute.xlu0 %1670
        %1674 = vset.pattern.permute.xlu0 0
        %1675 = vperm.xlu0 %1674, %v1454
        %v1676 = vpop.permute.xlu0 %1675
        %1679 = vset.pattern.permute.xlu0 0
        %1680 = vperm.xlu0 %1679, %v1456
        %v1681 = vpop.permute.xlu0 %1680
        %1684 = vset.pattern.permute.xlu0 0
        %1685 = vperm.xlu0 %1684, %v1458
        %v1686 = vpop.permute.xlu0 %1685
        %1689 = vset.pattern.permute.xlu0 0
        %1690 = vperm.xlu0 %1689, %v1460
        %v1691 = vpop.permute.xlu0 %1690
        %1694 = vset.pattern.permute.xlu0 0
        %1695 = vperm.xlu0 %1694, %v1462
        %v1696 = vpop.permute.xlu0 %1695
        %1699 = vset.pattern.permute.xlu0 0
        %1700 = vperm.xlu0 %1699, %v1464
        %v1701 = vpop.permute.xlu0 %1700
        %1704 = vset.pattern.permute.xlu0 0
        %1705 = vperm.xlu0 %1704, %v1466
        %v1706 = vpop.permute.xlu0 %1705
        %1709 = vset.pattern.permute.xlu0 0
        %1710 = vperm.xlu0 %1709, %v1468
        %v1711 = vpop.permute.xlu0 %1710
        %1714 = vset.pattern.permute.xlu0 0
        %1715 = vperm.xlu0 %1714, %v1470
        %v1716 = vpop.permute.xlu0 %1715
        %1719 = vset.pattern.permute.xlu0 0
        %1720 = vperm.xlu0 %1719, %v1472
        %v1721 = vpop.permute.xlu0 %1720
        %1724 = vset.pattern.permute.xlu0 0
        %1725 = vperm.xlu0 %1724, %v1474
        %v1726 = vpop.permute.xlu0 %1725
        %1729 = vset.pattern.permute.xlu0 0
        %1730 = vperm.xlu0 %1729, %v1476
        %v1731 = vpop.permute.xlu0 %1730
        %1734 = vset.pattern.permute.xlu0 0
        %1735 = vperm.xlu0 %1734, %v1478
        %v1736 = vpop.permute.xlu0 %1735
        %1739 = vset.pattern.permute.xlu0 0
        %1740 = vperm.xlu0 %1739, %v1480
        %v1741 = vpop.permute.xlu0 %1740
        %1744 = vset.pattern.permute.xlu0 0
        %1745 = vperm.xlu0 %1744, %v1482
        %v1746 = vpop.permute.xlu0 %1745
        %v1748 = vld [vmem:[%s577 + $0x10] sm:$0xf]
        %v1749 = vld [vmem:[%s577 + $0x14] sm:$0xf]
        %v1750 = vld [vmem:[%s577 + $0x18] sm:$0xf]
        %v1751 = vld [vmem:[%s577 + $0x1c] sm:$0xf]
        %s1752 = scalar_lea.vmem %s584, 64 [#allocation8]
        %v1753 = vld [vmem:[%s1752] sm:$0xf]
        %v1754 = vld [vmem:[%s1752 + $0x4] sm:$0xf]
        %v1755 = vld [vmem:[%s1752 + $0x8] sm:$0xf]
        %v1756 = vld [vmem:[%s1752 + $0xc] sm:$0xf]
        %v1757 = vld [vmem:[%s1752 + $0x10] sm:$0xf]
        %v1758 = vld [vmem:[%s1752 + $0x14] sm:$0xf]
        %v1759 = vld [vmem:[%s1752 + $0x18] sm:$0xf]
        %v1760 = vld [vmem:[%s1752 + $0x1c] sm:$0xf]
        %v1761 = vld [vmem:[%s1752 + $0x20] sm:$0xf]
        %v1762 = vld [vmem:[%s1752 + $0x24] sm:$0xf]
        %v1763 = vld [vmem:[%s1752 + $0x28] sm:$0xf]
        %v1764 = vld [vmem:[%s1752 + $0x2c] sm:$0xf]
        %v1765 = vld [vmem:[%s1752 + $0x30] sm:$0xf]
        %v1766 = vld [vmem:[%s1752 + $0x34] sm:$0xf]
        %v1767 = vld [vmem:[%s1752 + $0x38] sm:$0xf]
        %v1768 = vld [vmem:[%s1752 + $0x3c] sm:$0xf]
        %v1769 = vunpack.c.l.bf16 %v1753
        %v1770 = vunpack.c.l.bf16 %v1754
        %v1771 = vunpack.c.l.bf16 %v1755
        %v1772 = vunpack.c.l.bf16 %v1756
        %v1773 = vunpack.c.l.bf16 %v1757
        %v1774 = vunpack.c.l.bf16 %v1758
        %v1775 = vunpack.c.l.bf16 %v1759
        %v1776 = vunpack.c.l.bf16 %v1760
        %v1777 = vunpack.c.l.bf16 %v1761
        %v1778 = vunpack.c.l.bf16 %v1762
        %v1779 = vunpack.c.l.bf16 %v1763
        %v1780 = vunpack.c.l.bf16 %v1764
        %v1781 = vunpack.c.l.bf16 %v1765
        %v1782 = vunpack.c.l.bf16 %v1766
        %v1783 = vunpack.c.l.bf16 %v1767
        %v1784 = vunpack.c.l.bf16 %v1768
        %1793 = vrot.lane.b32.xlu0 %v1049, 96
        %v1794 = vpop.permute.xlu0 %1793
        %1795 = vrot.lane.b32.xlu0 %v1050, 96
        %v1796 = vpop.permute.xlu0 %1795
        %1797 = vrot.lane.b32.xlu0 %v1051, 96
        %v1798 = vpop.permute.xlu0 %1797
        %1799 = vrot.lane.b32.xlu0 %v1052, 96
        %v1800 = vpop.permute.xlu0 %1799
        %1801 = vrot.lane.b32.xlu0 %v1053, 96
        %v1802 = vpop.permute.xlu0 %1801
        %1803 = vrot.lane.b32.xlu0 %v1054, 96
        %v1804 = vpop.permute.xlu0 %1803
        %1805 = vrot.lane.b32.xlu0 %v1055, 96
        %v1806 = vpop.permute.xlu0 %1805
        %1807 = vrot.lane.b32.xlu0 %v1056, 96
        %v1808 = vpop.permute.xlu0 %1807
        %v1813 = vunpack.c.l.b16 %v1748
        %v1814 = vunpack.c.l.b16 %v1749
        %v1815 = vunpack.c.l.b16 %v1750
        %v1816 = vunpack.c.l.b16 %v1751
        %v1817 = vpack.c.b16 %v1814, %v1813
        %v1818 = vpack.c.b16 %v1816, %v1815
        %v1822 = vsel %vm1137, %v1794, 0
        %v1825 = vsel %vm1137, %v1796, 0
        %v1828 = vsel %vm1137, %v1798, 0
        %v1831 = vsel %vm1137, %v1800, 0
        %v1834 = vsel %vm1137, %v1802, 0
        %v1837 = vsel %vm1137, %v1804, 0
        %v1840 = vsel %vm1137, %v1806, 0
        %v1843 = vsel %vm1137, %v1808, 0
        %1845 = vmatprep.subr.bf16.mxu0 0
        %1846 = vmatpush1.bf16.msra.mxu0 %v1817
        %1847 = vmatprep.subr.bf16.mxu0 0
        %1848 = vmatpush1.bf16.msra.mxu0 %v1818
        %1849 = vmatprep.subr.bf16.mxu0 0
        %1850 = vmatpush1.bf16.msra.mxu0 0
        %1851 = vmatprep.subr.bf16.mxu0 0
        %1852 = vmatpush1.bf16.msra.mxu0 0
        %1853 = vmatprep.subr.bf16.mxu0 0
        %1854 = vmatpush1.bf16.msra.mxu0 0
        %1855 = vmatprep.subr.bf16.mxu0 0
        %1856 = vmatpush1.bf16.msra.mxu0 0
        %1857 = vmatprep.subr.bf16.mxu0 0
        %1858 = vmatpush1.bf16.msra.mxu0 0
        %1859 = vmatprep.subr.bf16.mxu0 0
        %1860 = vmatpush1.bf16.msra.mxu0 0
        %1861 = vmatprep.subr.bf16.mxu0 0
        %1862 = vmatpush1.bf16.msra.mxu0 0
        %1863 = vmatprep.subr.bf16.mxu0 0
        %1864 = vmatpush1.bf16.msra.mxu0 0
        %1865 = vmatprep.subr.bf16.mxu0 0
        %1866 = vmatpush1.bf16.msra.mxu0 0
        %1867 = vmatprep.subr.bf16.mxu0 0
        %1868 = vmatpush1.bf16.msra.mxu0 0
        %1869 = vmatprep.subr.bf16.mxu0 0
        %1870 = vmatpush1.bf16.msra.mxu0 0
        %1871 = vmatprep.subr.bf16.mxu0 0
        %1872 = vmatpush1.bf16.msra.mxu0 0
        %1873 = vmatprep.subr.bf16.mxu0 0
        %1874 = vmatpush1.bf16.msra.mxu0 0
        %1875 = vmatprep.subr.bf16.mxu0 0
        %1876 = vmatpush1.bf16.msra.mxu0 0
        %1877 = vmatprep.mubr.bf16.mxu0 0
        %1878 = vmatmul.mubr.bf16.gmra.mrb[0].mxu0 %v1822
        %v1879 = vpop.f32.mrb[0].mxu0
        %v1880 = vadd.f32 %v1769, %v1879
        %v1881 = vpop.f32.mrb[0].mxu0
        %v1882 = vpop.f32.mrb[0].mxu0
        %v1883 = vadd.f32 %v1770, %v1882
        %v1884 = vpop.f32.mrb[0].mxu0
        %1885 = vmatprep.mubr.bf16.mxu0 0
        %1886 = vmatmul.mubr.bf16.gmra.mrb[0].mxu0 %v1825
        %v1887 = vpop.f32.mrb[0].mxu0
        %v1888 = vadd.f32 %v1771, %v1887
        %v1889 = vpop.f32.mrb[0].mxu0
        %v1890 = vpop.f32.mrb[0].mxu0
        %v1891 = vadd.f32 %v1772, %v1890
        %v1892 = vpop.f32.mrb[0].mxu0
        %1893 = vmatprep.mubr.bf16.mxu0 0
        %1894 = vmatmul.mubr.bf16.gmra.mrb[0].mxu0 %v1828
        %v1895 = vpop.f32.mrb[0].mxu0
        %v1896 = vadd.f32 %v1773, %v1895
        %v1897 = vpop.f32.mrb[0].mxu0
        %v1898 = vpop.f32.mrb[0].mxu0
        %v1899 = vadd.f32 %v1774, %v1898
        %v1900 = vpop.f32.mrb[0].mxu0
        %1901 = vmatprep.mubr.bf16.mxu0 0
        %1902 = vmatmul.mubr.bf16.gmra.mrb[0].mxu0 %v1831
        %v1903 = vpop.f32.mrb[0].mxu0
        %v1904 = vadd.f32 %v1775, %v1903
        %v1905 = vpop.f32.mrb[0].mxu0
        %v1906 = vpop.f32.mrb[0].mxu0
        %v1907 = vadd.f32 %v1776, %v1906
        %v1908 = vpop.f32.mrb[0].mxu0
        %1909 = vmatprep.mubr.bf16.mxu0 0
        %1910 = vmatmul.mubr.bf16.gmra.mrb[0].mxu0 %v1834
        %v1911 = vpop.f32.mrb[0].mxu0
        %v1912 = vadd.f32 %v1777, %v1911
        %v1913 = vpop.f32.mrb[0].mxu0
        %v1914 = vpop.f32.mrb[0].mxu0
        %v1915 = vadd.f32 %v1778, %v1914
        %v1916 = vpop.f32.mrb[0].mxu0
        %1917 = vmatprep.mubr.bf16.mxu0 0
        %1918 = vmatmul.mubr.bf16.gmra.mrb[0].mxu0 %v1837
        %v1919 = vpop.f32.mrb[0].mxu0
        %v1920 = vadd.f32 %v1779, %v1919
        %v1921 = vpop.f32.mrb[0].mxu0
        %v1922 = vpop.f32.mrb[0].mxu0
        %v1923 = vadd.f32 %v1780, %v1922
        %v1924 = vpop.f32.mrb[0].mxu0
        %1925 = vmatprep.mubr.bf16.mxu0 0
        %1926 = vmatmul.mubr.bf16.gmra.mrb[0].mxu0 %v1840
        %v1927 = vpop.f32.mrb[0].mxu0
        %v1928 = vadd.f32 %v1781, %v1927
        %v1929 = vpop.f32.mrb[0].mxu0
        %v1930 = vpop.f32.mrb[0].mxu0
        %v1931 = vadd.f32 %v1782, %v1930
        %v1932 = vpop.f32.mrb[0].mxu0
        %1933 = vmatprep.mubr.bf16.mxu0 0
        %1934 = vmatmul.mubr.bf16.gmra.mrb[0].mxu0 %v1843
        %v1935 = vpop.f32.mrb[0].mxu0
        %v1936 = vadd.f32 %v1783, %v1935
        %v1937 = vpop.f32.mrb[0].mxu0
        %v1938 = vpop.f32.mrb[0].mxu0
        %v1939 = vadd.f32 %v1784, %v1938
        %v1940 = vpop.f32.mrb[0].mxu0
        %1941 = vdwg.mxu0
        %1942 = vmax.xlane.f32.xlu0 %v1880
        %v1943 = vpop.xlane.xlu0 %1942
        %1944 = vmax.xlane.f32.xlu0 %v1883
        %v1945 = vpop.xlane.xlu0 %1944
        %1946 = vmax.xlane.f32.xlu0 %v1888
        %v1947 = vpop.xlane.xlu0 %1946
        %1948 = vmax.xlane.f32.xlu0 %v1891
        %v1949 = vpop.xlane.xlu0 %1948
        %1950 = vmax.xlane.f32.xlu0 %v1896
        %v1951 = vpop.xlane.xlu0 %1950
        %1952 = vmax.xlane.f32.xlu0 %v1899
        %v1953 = vpop.xlane.xlu0 %1952
        %1954 = vmax.xlane.f32.xlu0 %v1904
        %v1955 = vpop.xlane.xlu0 %1954
        %1956 = vmax.xlane.f32.xlu0 %v1907
        %v1957 = vpop.xlane.xlu0 %1956
        %1958 = vmax.xlane.f32.xlu0 %v1912
        %v1959 = vpop.xlane.xlu0 %1958
        %1960 = vmax.xlane.f32.xlu0 %v1915
        %v1961 = vpop.xlane.xlu0 %1960
        %1962 = vmax.xlane.f32.xlu0 %v1920
        %v1963 = vpop.xlane.xlu0 %1962
        %1964 = vmax.xlane.f32.xlu0 %v1923
        %v1965 = vpop.xlane.xlu0 %1964
        %1966 = vmax.xlane.f32.xlu0 %v1928
        %v1967 = vpop.xlane.xlu0 %1966
        %1968 = vmax.xlane.f32.xlu0 %v1931
        %v1969 = vpop.xlane.xlu0 %1968
        %1970 = vmax.xlane.f32.xlu0 %v1936
        %v1971 = vpop.xlane.xlu0 %1970
        %1972 = vmax.xlane.f32.xlu0 %v1939
        %v1973 = vpop.xlane.xlu0 %1972
        %v1974 = vmax.f32 %v1057, %v1943
        %v1975 = vmax.f32 %v1058, %v1945
        %v1976 = vmax.f32 %v1059, %v1947
        %v1977 = vmax.f32 %v1060, %v1949
        %v1978 = vmax.f32 %v1061, %v1951
        %v1979 = vmax.f32 %v1062, %v1953
        %v1980 = vmax.f32 %v1063, %v1955
        %v1981 = vmax.f32 %v1064, %v1957
        %v1982 = vmax.f32 %v1065, %v1959
        %v1983 = vmax.f32 %v1066, %v1961
        %v1984 = vmax.f32 %v1067, %v1963
        %v1985 = vmax.f32 %v1068, %v1965
        %v1986 = vmax.f32 %v1069, %v1967
        %v1987 = vmax.f32 %v1070, %v1969
        %v1988 = vmax.f32 %v1071, %v1971
        %v1989 = vmax.f32 %v1072, %v1973
        %1991 = vset.pattern.permute.xlu0 32
        %1992 = vperm.xlu0 %1991, %v1974
        %v1993 = vpop.permute.xlu0 %1992
        %1996 = vset.pattern.permute.xlu0 32
        %1997 = vperm.xlu0 %1996, %v1975
        %v1998 = vpop.permute.xlu0 %1997
        %2001 = vset.pattern.permute.xlu0 32
        %2002 = vperm.xlu0 %2001, %v1976
        %v2003 = vpop.permute.xlu0 %2002
        %2006 = vset.pattern.permute.xlu0 32
        %2007 = vperm.xlu0 %2006, %v1977
        %v2008 = vpop.permute.xlu0 %2007
        %2011 = vset.pattern.permute.xlu0 32
        %2012 = vperm.xlu0 %2011, %v1978
        %v2013 = vpop.permute.xlu0 %2012
        %2016 = vset.pattern.permute.xlu0 32
        %2017 = vperm.xlu0 %2016, %v1979
        %v2018 = vpop.permute.xlu0 %2017
        %2021 = vset.pattern.permute.xlu0 32
        %2022 = vperm.xlu0 %2021, %v1980
        %v2023 = vpop.permute.xlu0 %2022
        %2026 = vset.pattern.permute.xlu0 32
        %2027 = vperm.xlu0 %2026, %v1981
        %v2028 = vpop.permute.xlu0 %2027
        %2031 = vset.pattern.permute.xlu0 32
        %2032 = vperm.xlu0 %2031, %v1982
        %v2033 = vpop.permute.xlu0 %2032
        %2036 = vset.pattern.permute.xlu0 32
        %2037 = vperm.xlu0 %2036, %v1983
        %v2038 = vpop.permute.xlu0 %2037
        %2041 = vset.pattern.permute.xlu0 32
        %2042 = vperm.xlu0 %2041, %v1984
        %v2043 = vpop.permute.xlu0 %2042
        %2046 = vset.pattern.permute.xlu0 32
        %2047 = vperm.xlu0 %2046, %v1985
        %v2048 = vpop.permute.xlu0 %2047
        %2051 = vset.pattern.permute.xlu0 32
        %2052 = vperm.xlu0 %2051, %v1986
        %v2053 = vpop.permute.xlu0 %2052
        %2056 = vset.pattern.permute.xlu0 32
        %2057 = vperm.xlu0 %2056, %v1987
        %v2058 = vpop.permute.xlu0 %2057
        %2061 = vset.pattern.permute.xlu0 32
        %2062 = vperm.xlu0 %2061, %v1988
        %v2063 = vpop.permute.xlu0 %2062
        %2066 = vset.pattern.permute.xlu0 32
        %2067 = vperm.xlu0 %2066, %v1989
        %v2068 = vpop.permute.xlu0 %2067
        %v2070 = vsub.f32 %v1880, %v1993
        %v2071 = vsub.f32 %v1883, %v1998
        %v2072 = vsub.f32 %v1888, %v2003
        %v2073 = vsub.f32 %v1891, %v2008
        %v2074 = vsub.f32 %v1896, %v2013
        %v2075 = vsub.f32 %v1899, %v2018
        %v2076 = vsub.f32 %v1904, %v2023
        %v2077 = vsub.f32 %v1907, %v2028
        %v2078 = vsub.f32 %v1912, %v2033
        %v2079 = vsub.f32 %v1915, %v2038
        %v2080 = vsub.f32 %v1920, %v2043
        %v2081 = vsub.f32 %v1923, %v2048
        %v2082 = vsub.f32 %v1928, %v2053
        %v2083 = vsub.f32 %v1931, %v2058
        %v2084 = vsub.f32 %v1936, %v2063
        %v2085 = vsub.f32 %v1939, %v2068
        %v2086 = vmul.f32 %v2070, 1.442695
        %v2087 = vpow.pop %v2086
        %v2088 = vmul.f32 %v2071, 1.442695
        %v2089 = vpow.pop %v2088
        %v2090 = vmul.f32 %v2072, 1.442695
        %v2091 = vpow.pop %v2090
        %v2092 = vmul.f32 %v2073, 1.442695
        %v2093 = vpow.pop %v2092
        %v2094 = vmul.f32 %v2074, 1.442695
        %v2095 = vpow.pop %v2094
        %v2096 = vmul.f32 %v2075, 1.442695
        %v2097 = vpow.pop %v2096
        %v2098 = vmul.f32 %v2076, 1.442695
        %v2099 = vpow.pop %v2098
        %v2100 = vmul.f32 %v2077, 1.442695
        %v2101 = vpow.pop %v2100
        %v2102 = vmul.f32 %v2078, 1.442695
        %v2103 = vpow.pop %v2102
        %v2104 = vmul.f32 %v2079, 1.442695
        %v2105 = vpow.pop %v2104
        %v2106 = vmul.f32 %v2080, 1.442695
        %v2107 = vpow.pop %v2106
        %v2108 = vmul.f32 %v2081, 1.442695
        %v2109 = vpow.pop %v2108
        %v2110 = vmul.f32 %v2082, 1.442695
        %v2111 = vpow.pop %v2110
        %v2112 = vmul.f32 %v2083, 1.442695
        %v2113 = vpow.pop %v2112
        %v2114 = vmul.f32 %v2084, 1.442695
        %v2115 = vpow.pop %v2114
        %v2116 = vmul.f32 %v2085, 1.442695
        %v2117 = vpow.pop %v2116
        %v2118 = vsub.f32 %v1057, %v1974
        %v2119 = vsub.f32 %v1058, %v1975
        %v2120 = vsub.f32 %v1059, %v1976
        %v2121 = vsub.f32 %v1060, %v1977
        %v2122 = vsub.f32 %v1061, %v1978
        %v2123 = vsub.f32 %v1062, %v1979
        %v2124 = vsub.f32 %v1063, %v1980
        %v2125 = vsub.f32 %v1064, %v1981
        %v2126 = vsub.f32 %v1065, %v1982
        %v2127 = vsub.f32 %v1066, %v1983
        %v2128 = vsub.f32 %v1067, %v1984
        %v2129 = vsub.f32 %v1068, %v1985
        %v2130 = vsub.f32 %v1069, %v1986
        %v2131 = vsub.f32 %v1070, %v1987
        %v2132 = vsub.f32 %v1071, %v1988
        %v2133 = vsub.f32 %v1072, %v1989
        %v2134 = vmul.f32 %v2118, 1.442695
        %v2135 = vpow.pop %v2134
        %v2136 = vmul.f32 %v2119, 1.442695
        %v2137 = vpow.pop %v2136
        %v2138 = vmul.f32 %v2120, 1.442695
        %v2139 = vpow.pop %v2138
        %v2140 = vmul.f32 %v2121, 1.442695
        %v2141 = vpow.pop %v2140
        %v2142 = vmul.f32 %v2122, 1.442695
        %v2143 = vpow.pop %v2142
        %v2144 = vmul.f32 %v2123, 1.442695
        %v2145 = vpow.pop %v2144
        %v2146 = vmul.f32 %v2124, 1.442695
        %v2147 = vpow.pop %v2146
        %v2148 = vmul.f32 %v2125, 1.442695
        %v2149 = vpow.pop %v2148
        %v2150 = vmul.f32 %v2126, 1.442695
        %v2151 = vpow.pop %v2150
        %v2152 = vmul.f32 %v2127, 1.442695
        %v2153 = vpow.pop %v2152
        %v2154 = vmul.f32 %v2128, 1.442695
        %v2155 = vpow.pop %v2154
        %v2156 = vmul.f32 %v2129, 1.442695
        %v2157 = vpow.pop %v2156
        %v2158 = vmul.f32 %v2130, 1.442695
        %v2159 = vpow.pop %v2158
        %v2160 = vmul.f32 %v2131, 1.442695
        %v2161 = vpow.pop %v2160
        %v2162 = vmul.f32 %v2132, 1.442695
        %v2163 = vpow.pop %v2162
        %v2164 = vmul.f32 %v2133, 1.442695
        %v2165 = vpow.pop %v2164
        %2166 = vadd.xlane.f32.xlu0 %v2087
        %v2167 = vpop.xlane.xlu0 %2166
        %2168 = vadd.xlane.f32.xlu0 %v2089
        %v2169 = vpop.xlane.xlu0 %2168
        %2170 = vadd.xlane.f32.xlu0 %v2091
        %v2171 = vpop.xlane.xlu0 %2170
        %2172 = vadd.xlane.f32.xlu0 %v2093
        %v2173 = vpop.xlane.xlu0 %2172
        %2174 = vadd.xlane.f32.xlu0 %v2095
        %v2175 = vpop.xlane.xlu0 %2174
        %2176 = vadd.xlane.f32.xlu0 %v2097
        %v2177 = vpop.xlane.xlu0 %2176
        %2178 = vadd.xlane.f32.xlu0 %v2099
        %v2179 = vpop.xlane.xlu0 %2178
        %2180 = vadd.xlane.f32.xlu0 %v2101
        %v2181 = vpop.xlane.xlu0 %2180
        %2182 = vadd.xlane.f32.xlu0 %v2103
        %v2183 = vpop.xlane.xlu0 %2182
        %2184 = vadd.xlane.f32.xlu0 %v2105
        %v2185 = vpop.xlane.xlu0 %2184
        %2186 = vadd.xlane.f32.xlu0 %v2107
        %v2187 = vpop.xlane.xlu0 %2186
        %2188 = vadd.xlane.f32.xlu0 %v2109
        %v2189 = vpop.xlane.xlu0 %2188
        %2190 = vadd.xlane.f32.xlu0 %v2111
        %v2191 = vpop.xlane.xlu0 %2190
        %2192 = vadd.xlane.f32.xlu0 %v2113
        %v2193 = vpop.xlane.xlu0 %2192
        %2194 = vadd.xlane.f32.xlu0 %v2115
        %v2195 = vpop.xlane.xlu0 %2194
        %2196 = vadd.xlane.f32.xlu0 %v2117
        %v2197 = vpop.xlane.xlu0 %2196
        %v2198 = vpack.c.bf16 %v2089, %v2087
        %v2199 = vpack.c.bf16 %v2093, %v2091
        %v2200 = vpack.c.bf16 %v2097, %v2095
        %v2201 = vpack.c.bf16 %v2101, %v2099
        %v2202 = vpack.c.bf16 %v2105, %v2103
        %v2203 = vpack.c.bf16 %v2109, %v2107
        %v2204 = vpack.c.bf16 %v2113, %v2111
        %v2205 = vpack.c.bf16 %v2117, %v2115
        %2206 = vrot.lane.b32.xlu0 %v1555, 96
        %v2207 = vpop.permute.xlu0 %2206
        %2208 = vrot.lane.b32.xlu0 %v1556, 96
        %v2209 = vpop.permute.xlu0 %2208
        %2210 = vrot.lane.b32.xlu0 %v1557, 96
        %v2211 = vpop.permute.xlu0 %2210
        %2212 = vrot.lane.b32.xlu0 %v1558, 96
        %v2213 = vpop.permute.xlu0 %2212
        %2214 = vrot.lane.b32.xlu0 %v1559, 96
        %v2215 = vpop.permute.xlu0 %2214
        %2216 = vrot.lane.b32.xlu0 %v1560, 96
        %v2217 = vpop.permute.xlu0 %2216
        %2218 = vrot.lane.b32.xlu0 %v1561, 96
        %v2219 = vpop.permute.xlu0 %2218
        %2220 = vrot.lane.b32.xlu0 %v1562, 96
        %v2221 = vpop.permute.xlu0 %2220
        %2230 = vmatprep.subr.bf16.mxu0 0
        %2231 = vmatpush1.bf16.msra.mxu0 %v2207
        %2232 = vmatprep.subr.bf16.mxu0 0
        %2233 = vmatpush1.bf16.msra.mxu0 %v2209
        %2234 = vmatprep.subr.bf16.mxu0 0
        %2235 = vmatpush1.bf16.msra.mxu0 %v2211
        %2236 = vmatprep.subr.bf16.mxu0 0
        %2237 = vmatpush1.bf16.msra.mxu0 %v2213
        %2238 = vmatprep.subr.bf16.mxu0 0
        %2239 = vmatpush1.bf16.msra.mxu0 %v2215
        %2240 = vmatprep.subr.bf16.mxu0 0
        %2241 = vmatpush1.bf16.msra.mxu0 %v2217
        %2242 = vmatprep.subr.bf16.mxu0 0
        %2243 = vmatpush1.bf16.msra.mxu0 %v2219
        %2244 = vmatprep.subr.bf16.mxu0 0
        %2245 = vmatpush1.bf16.msra.mxu0 %v2221
        %2246 = vmatprep.subr.bf16.mxu0 0
        %2247 = vmatpush1.bf16.msra.mxu0 0
        %2248 = vmatprep.subr.bf16.mxu0 0
        %2249 = vmatpush1.bf16.msra.mxu0 0
        %2250 = vmatprep.subr.bf16.mxu0 0
        %2251 = vmatpush1.bf16.msra.mxu0 0
        %2252 = vmatprep.subr.bf16.mxu0 0
        %2253 = vmatpush1.bf16.msra.mxu0 0
        %2254 = vmatprep.subr.bf16.mxu0 0
        %2255 = vmatpush1.bf16.msra.mxu0 0
        %2256 = vmatprep.subr.bf16.mxu0 0
        %2257 = vmatpush1.bf16.msra.mxu0 0
        %2258 = vmatprep.subr.bf16.mxu0 0
        %2259 = vmatpush1.bf16.msra.mxu0 0
        %2260 = vmatprep.subr.bf16.mxu0 0
        %2261 = vmatpush1.bf16.msra.mxu0 0
        %2262 = vmatprep.mubr.bf16.mxu0 0
        %2263 = vmatmul.mubr.bf16.gmra.mrb[0].mxu0 %v2198
        %v2264 = vpop.f32.mrb[0].mxu0
        %v2265 = vadd.f32 0.0, %v2264
        %v2266 = vpop.f32.mrb[0].mxu0
        %v2267 = vpop.f32.mrb[0].mxu0
        %v2268 = vadd.f32 0.0, %v2267
        %v2269 = vpop.f32.mrb[0].mxu0
        %2270 = vmatprep.mubr.bf16.mxu0 0
        %2271 = vmatmul.mubr.bf16.gmra.mrb[0].mxu0 %v2199
        %v2272 = vpop.f32.mrb[0].mxu0
        %v2273 = vadd.f32 0.0, %v2272
        %v2274 = vpop.f32.mrb[0].mxu0
        %v2275 = vpop.f32.mrb[0].mxu0
        %v2276 = vadd.f32 0.0, %v2275
        %v2277 = vpop.f32.mrb[0].mxu0
        %2278 = vmatprep.mubr.bf16.mxu0 0
        %2279 = vmatmul.mubr.bf16.gmra.mrb[0].mxu0 %v2200
        %v2280 = vpop.f32.mrb[0].mxu0
        %v2281 = vadd.f32 0.0, %v2280
        %v2282 = vpop.f32.mrb[0].mxu0
        %v2283 = vpop.f32.mrb[0].mxu0
        %v2284 = vadd.f32 0.0, %v2283
        %v2285 = vpop.f32.mrb[0].mxu0
        %2286 = vmatprep.mubr.bf16.mxu0 0
        %2287 = vmatmul.mubr.bf16.gmra.mrb[0].mxu0 %v2201
        %v2288 = vpop.f32.mrb[0].mxu0
        %v2289 = vadd.f32 0.0, %v2288
        %v2290 = vpop.f32.mrb[0].mxu0
        %v2291 = vpop.f32.mrb[0].mxu0
        %v2292 = vadd.f32 0.0, %v2291
        %v2293 = vpop.f32.mrb[0].mxu0
        %2294 = vmatprep.mubr.bf16.mxu0 0
        %2295 = vmatmul.mubr.bf16.gmra.mrb[0].mxu0 %v2202
        %v2296 = vpop.f32.mrb[0].mxu0
        %v2297 = vadd.f32 0.0, %v2296
        %v2298 = vpop.f32.mrb[0].mxu0
        %v2299 = vpop.f32.mrb[0].mxu0
        %v2300 = vadd.f32 0.0, %v2299
        %v2301 = vpop.f32.mrb[0].mxu0
        %2302 = vmatprep.mubr.bf16.mxu0 0
        %2303 = vmatmul.mubr.bf16.gmra.mrb[0].mxu0 %v2203
        %v2304 = vpop.f32.mrb[0].mxu0
        %v2305 = vadd.f32 0.0, %v2304
        %v2306 = vpop.f32.mrb[0].mxu0
        %v2307 = vpop.f32.mrb[0].mxu0
        %v2308 = vadd.f32 0.0, %v2307
        %v2309 = vpop.f32.mrb[0].mxu0
        %2310 = vmatprep.mubr.bf16.mxu0 0
        %2311 = vmatmul.mubr.bf16.gmra.mrb[0].mxu0 %v2204
        %v2312 = vpop.f32.mrb[0].mxu0
        %v2313 = vadd.f32 0.0, %v2312
        %v2314 = vpop.f32.mrb[0].mxu0
        %v2315 = vpop.f32.mrb[0].mxu0
        %v2316 = vadd.f32 0.0, %v2315
        %v2317 = vpop.f32.mrb[0].mxu0
        %2318 = vmatprep.mubr.bf16.mxu0 0
        %2319 = vmatmul.mubr.bf16.gmra.mrb[0].mxu0 %v2205
        %v2320 = vpop.f32.mrb[0].mxu0
        %v2321 = vadd.f32 0.0, %v2320
        %v2322 = vpop.f32.mrb[0].mxu0
        %v2323 = vpop.f32.mrb[0].mxu0
        %v2324 = vadd.f32 0.0, %v2323
        %v2325 = vpop.f32.mrb[0].mxu0
        %2326 = vdwg.mxu0
        %2328 = vset.pattern.permute.xlu0 32
        %2329 = vperm.xlu0 %2328, %v2135
        %v2330 = vpop.permute.xlu0 %2329
        %2333 = vset.pattern.permute.xlu0 32
        %2334 = vperm.xlu0 %2333, %v2137
        %v2335 = vpop.permute.xlu0 %2334
        %2338 = vset.pattern.permute.xlu0 32
        %2339 = vperm.xlu0 %2338, %v2139
        %v2340 = vpop.permute.xlu0 %2339
        %2343 = vset.pattern.permute.xlu0 32
        %2344 = vperm.xlu0 %2343, %v2141
        %v2345 = vpop.permute.xlu0 %2344
        %2348 = vset.pattern.permute.xlu0 32
        %2349 = vperm.xlu0 %2348, %v2143
        %v2350 = vpop.permute.xlu0 %2349
        %2353 = vset.pattern.permute.xlu0 32
        %2354 = vperm.xlu0 %2353, %v2145
        %v2355 = vpop.permute.xlu0 %2354
        %2358 = vset.pattern.permute.xlu0 32
        %2359 = vperm.xlu0 %2358, %v2147
        %v2360 = vpop.permute.xlu0 %2359
        %2363 = vset.pattern.permute.xlu0 32
        %2364 = vperm.xlu0 %2363, %v2149
        %v2365 = vpop.permute.xlu0 %2364
        %2368 = vset.pattern.permute.xlu0 32
        %2369 = vperm.xlu0 %2368, %v2151
        %v2370 = vpop.permute.xlu0 %2369
        %2373 = vset.pattern.permute.xlu0 32
        %2374 = vperm.xlu0 %2373, %v2153
        %v2375 = vpop.permute.xlu0 %2374
        %2378 = vset.pattern.permute.xlu0 32
        %2379 = vperm.xlu0 %2378, %v2155
        %v2380 = vpop.permute.xlu0 %2379
        %2383 = vset.pattern.permute.xlu0 32
        %2384 = vperm.xlu0 %2383, %v2157
        %v2385 = vpop.permute.xlu0 %2384
        %2388 = vset.pattern.permute.xlu0 32
        %2389 = vperm.xlu0 %2388, %v2159
        %v2390 = vpop.permute.xlu0 %2389
        %2393 = vset.pattern.permute.xlu0 32
        %2394 = vperm.xlu0 %2393, %v2161
        %v2395 = vpop.permute.xlu0 %2394
        %2398 = vset.pattern.permute.xlu0 32
        %2399 = vperm.xlu0 %2398, %v2163
        %v2400 = vpop.permute.xlu0 %2399
        %2403 = vset.pattern.permute.xlu0 32
        %2404 = vperm.xlu0 %2403, %v2165
        %v2405 = vpop.permute.xlu0 %2404
        %v2407 = vsel %vm1137, %v1671, %v2330
        %v2408 = vsel %vm1137, %v1676, %v2335
        %v2409 = vsel %vm1137, %v1681, %v2340
        %v2410 = vsel %vm1137, %v1686, %v2345
        %v2411 = vsel %vm1137, %v1691, %v2350
        %v2412 = vsel %vm1137, %v1696, %v2355
        %v2413 = vsel %vm1137, %v1701, %v2360
        %v2414 = vsel %vm1137, %v1706, %v2365
        %v2415 = vsel %vm1137, %v1711, %v2370
        %v2416 = vsel %vm1137, %v1716, %v2375
        %v2417 = vsel %vm1137, %v1721, %v2380
        %v2418 = vsel %vm1137, %v1726, %v2385
        %v2419 = vsel %vm1137, %v1731, %v2390
        %v2420 = vsel %vm1137, %v1736, %v2395
        %v2421 = vsel %vm1137, %v1741, %v2400
        %v2422 = vsel %vm1137, %v1746, %v2405
        %v2423 = vsel %vm1137, %v1310, %v1993
        %v2424 = vsel %vm1137, %v1315, %v1998
        %v2425 = vsel %vm1137, %v1320, %v2003
        %v2426 = vsel %vm1137, %v1325, %v2008
        %v2427 = vsel %vm1137, %v1330, %v2013
        %v2428 = vsel %vm1137, %v1335, %v2018
        %v2429 = vsel %vm1137, %v1340, %v2023
        %v2430 = vsel %vm1137, %v1345, %v2028
        %v2431 = vsel %vm1137, %v1350, %v2033
        %v2432 = vsel %vm1137, %v1355, %v2038
        %v2433 = vsel %vm1137, %v1360, %v2043
        %v2434 = vsel %vm1137, %v1365, %v2048
        %v2435 = vsel %vm1137, %v1370, %v2053
        %v2436 = vsel %vm1137, %v1375, %v2058
        %v2437 = vsel %vm1137, %v1380, %v2063
        %v2438 = vsel %vm1137, %v1385, %v2068
        %vm2439 = vcmask 523264
        %2440 = vst.msk [vmem:[#allocation4] sm:$0xff] %vm2439, %v2423
        %2441 = vst.msk [vmem:[#allocation4 + $0x8] sm:$0xff] %vm2439, %v2424
        %2442 = vst.msk [vmem:[#allocation4 + $0x10] sm:$0xff] %vm2439, %v2425
        %2443 = vst.msk [vmem:[#allocation4 + $0x18] sm:$0xff] %vm2439, %v2426
        %2444 = vst.msk [vmem:[#allocation4 + $0x20] sm:$0xff] %vm2439, %v2427
        %2445 = vst.msk [vmem:[#allocation4 + $0x28] sm:$0xff] %vm2439, %v2428
        %2446 = vst.msk [vmem:[#allocation4 + $0x30] sm:$0xff] %vm2439, %v2429
        %2447 = vst.msk [vmem:[#allocation4 + $0x38] sm:$0xff] %vm2439, %v2430
        %2448 = vst.msk [vmem:[#allocation4 + $0x40] sm:$0xff] %vm2439, %v2431
        %2449 = vst.msk [vmem:[#allocation4 + $0x48] sm:$0xff] %vm2439, %v2432
        %2450 = vst.msk [vmem:[#allocation4 + $0x50] sm:$0xff] %vm2439, %v2433
        %2451 = vst.msk [vmem:[#allocation4 + $0x58] sm:$0xff] %vm2439, %v2434
        %2452 = vst.msk [vmem:[#allocation4 + $0x60] sm:$0xff] %vm2439, %v2435
        %2453 = vst.msk [vmem:[#allocation4 + $0x68] sm:$0xff] %vm2439, %v2436
        %2454 = vst.msk [vmem:[#allocation4 + $0x70] sm:$0xff] %vm2439, %v2437
        %2455 = vst.msk [vmem:[#allocation4 + $0x78] sm:$0xff] %vm2439, %v2438
        %v2456 = vld [vmem:[#allocation5] sm:$0xff]
        %v2457 = vld [vmem:[#allocation5 + $0x8] sm:$0xff]
        %v2458 = vld [vmem:[#allocation5 + $0x10] sm:$0xff]
        %v2459 = vld [vmem:[#allocation5 + $0x18] sm:$0xff]
        %v2460 = vld [vmem:[#allocation5 + $0x20] sm:$0xff]
        %v2461 = vld [vmem:[#allocation5 + $0x28] sm:$0xff]
        %v2462 = vld [vmem:[#allocation5 + $0x30] sm:$0xff]
        %v2463 = vld [vmem:[#allocation5 + $0x38] sm:$0xff]
        %v2464 = vld [vmem:[#allocation5 + $0x40] sm:$0xff]
        %v2465 = vld [vmem:[#allocation5 + $0x48] sm:$0xff]
        %v2466 = vld [vmem:[#allocation5 + $0x50] sm:$0xff]
        %v2467 = vld [vmem:[#allocation5 + $0x58] sm:$0xff]
        %v2468 = vld [vmem:[#allocation5 + $0x60] sm:$0xff]
        %v2469 = vld [vmem:[#allocation5 + $0x68] sm:$0xff]
        %v2470 = vld [vmem:[#allocation5 + $0x70] sm:$0xff]
        %v2471 = vld [vmem:[#allocation5 + $0x78] sm:$0xff]
        %v2472 = vmul.f32 %v2407, %v2456
        %v2473 = vmul.f32 %v2408, %v2457
        %v2474 = vmul.f32 %v2409, %v2458
        %v2475 = vmul.f32 %v2410, %v2459
        %v2476 = vmul.f32 %v2411, %v2460
        %v2477 = vmul.f32 %v2412, %v2461
        %v2478 = vmul.f32 %v2413, %v2462
        %v2479 = vmul.f32 %v2414, %v2463
        %v2480 = vmul.f32 %v2415, %v2464
        %v2481 = vmul.f32 %v2416, %v2465
        %v2482 = vmul.f32 %v2417, %v2466
        %v2483 = vmul.f32 %v2418, %v2467
        %v2484 = vmul.f32 %v2419, %v2468
        %v2485 = vmul.f32 %v2420, %v2469
        %v2486 = vmul.f32 %v2421, %v2470
        %v2487 = vmul.f32 %v2422, %v2471
        %v2488 = vsel %vm1137, %v1484, %v2167
        %v2489 = vsel %vm1137, %v1486, %v2169
        %v2490 = vsel %vm1137, %v1488, %v2171
        %v2491 = vsel %vm1137, %v1490, %v2173
        %v2492 = vsel %vm1137, %v1492, %v2175
        %v2493 = vsel %vm1137, %v1494, %v2177
        %v2494 = vsel %vm1137, %v1496, %v2179
        %v2495 = vsel %vm1137, %v1498, %v2181
        %v2496 = vsel %vm1137, %v1500, %v2183
        %v2497 = vsel %vm1137, %v1502, %v2185
        %v2498 = vsel %vm1137, %v1504, %v2187
        %v2499 = vsel %vm1137, %v1506, %v2189
        %v2500 = vsel %vm1137, %v1508, %v2191
        %v2501 = vsel %vm1137, %v1510, %v2193
        %v2502 = vsel %vm1137, %v1512, %v2195
        %v2503 = vsel %vm1137, %v1514, %v2197
        %v2504 = vadd.f32 %v2472, %v2488
        %v2505 = vadd.f32 %v2473, %v2489
        %v2506 = vadd.f32 %v2474, %v2490
        %v2507 = vadd.f32 %v2475, %v2491
        %v2508 = vadd.f32 %v2476, %v2492
        %v2509 = vadd.f32 %v2477, %v2493
        %v2510 = vadd.f32 %v2478, %v2494
        %v2511 = vadd.f32 %v2479, %v2495
        %v2512 = vadd.f32 %v2480, %v2496
        %v2513 = vadd.f32 %v2481, %v2497
        %v2514 = vadd.f32 %v2482, %v2498
        %v2515 = vadd.f32 %v2483, %v2499
        %v2516 = vadd.f32 %v2484, %v2500
        %v2517 = vadd.f32 %v2485, %v2501
        %v2518 = vadd.f32 %v2486, %v2502
        %v2519 = vadd.f32 %v2487, %v2503
        %2520 = vst.msk [vmem:[#allocation5] sm:$0xff] %vm2439, %v2504
        %2521 = vst.msk [vmem:[#allocation5 + $0x8] sm:$0xff] %vm2439, %v2505
        %2522 = vst.msk [vmem:[#allocation5 + $0x10] sm:$0xff] %vm2439, %v2506
        %2523 = vst.msk [vmem:[#allocation5 + $0x18] sm:$0xff] %vm2439, %v2507
        %2524 = vst.msk [vmem:[#allocation5 + $0x20] sm:$0xff] %vm2439, %v2508
        %2525 = vst.msk [vmem:[#allocation5 + $0x28] sm:$0xff] %vm2439, %v2509
        %2526 = vst.msk [vmem:[#allocation5 + $0x30] sm:$0xff] %vm2439, %v2510
        %2527 = vst.msk [vmem:[#allocation5 + $0x38] sm:$0xff] %vm2439, %v2511
        %2528 = vst.msk [vmem:[#allocation5 + $0x40] sm:$0xff] %vm2439, %v2512
        %2529 = vst.msk [vmem:[#allocation5 + $0x48] sm:$0xff] %vm2439, %v2513
        %2530 = vst.msk [vmem:[#allocation5 + $0x50] sm:$0xff] %vm2439, %v2514
        %2531 = vst.msk [vmem:[#allocation5 + $0x58] sm:$0xff] %vm2439, %v2515
        %2532 = vst.msk [vmem:[#allocation5 + $0x60] sm:$0xff] %vm2439, %v2516
        %2533 = vst.msk [vmem:[#allocation5 + $0x68] sm:$0xff] %vm2439, %v2517
        %2534 = vst.msk [vmem:[#allocation5 + $0x70] sm:$0xff] %vm2439, %v2518
        %2535 = vst.msk [vmem:[#allocation5 + $0x78] sm:$0xff] %vm2439, %v2519
        %v2536 = vld [vmem:[#allocation6] sm:$0xff]
        %v2537 = vld [vmem:[#allocation6 + $0x8] sm:$0xff]
        %v2538 = vld [vmem:[#allocation6 + $0x10] sm:$0xff]
        %v2539 = vld [vmem:[#allocation6 + $0x18] sm:$0xff]
        %v2540 = vld [vmem:[#allocation6 + $0x20] sm:$0xff]
        %v2541 = vld [vmem:[#allocation6 + $0x28] sm:$0xff]
        %v2542 = vld [vmem:[#allocation6 + $0x30] sm:$0xff]
        %v2543 = vld [vmem:[#allocation6 + $0x38] sm:$0xff]
        %v2544 = vld [vmem:[#allocation6 + $0x40] sm:$0xff]
        %v2545 = vld [vmem:[#allocation6 + $0x48] sm:$0xff]
        %v2546 = vld [vmem:[#allocation6 + $0x50] sm:$0xff]
        %v2547 = vld [vmem:[#allocation6 + $0x58] sm:$0xff]
        %v2548 = vld [vmem:[#allocation6 + $0x60] sm:$0xff]
        %v2549 = vld [vmem:[#allocation6 + $0x68] sm:$0xff]
        %v2550 = vld [vmem:[#allocation6 + $0x70] sm:$0xff]
        %v2551 = vld [vmem:[#allocation6 + $0x78] sm:$0xff]
        %v2552 = vmul.f32 %v2407, %v2536
        %v2553 = vmul.f32 %v2408, %v2537
        %v2554 = vmul.f32 %v2409, %v2538
        %v2555 = vmul.f32 %v2410, %v2539
        %v2556 = vmul.f32 %v2411, %v2540
        %v2557 = vmul.f32 %v2412, %v2541
        %v2558 = vmul.f32 %v2413, %v2542
        %v2559 = vmul.f32 %v2414, %v2543
        %v2560 = vmul.f32 %v2415, %v2544
        %v2561 = vmul.f32 %v2416, %v2545
        %v2562 = vmul.f32 %v2417, %v2546
        %v2563 = vmul.f32 %v2418, %v2547
        %v2564 = vmul.f32 %v2419, %v2548
        %v2565 = vmul.f32 %v2420, %v2549
        %v2566 = vmul.f32 %v2421, %v2550
        %v2567 = vmul.f32 %v2422, %v2551
        %2584 = vrot.lane.b32.xlu0 %v2265, 32
        %v2585 = vpop.permute.xlu0 %2584
        %2586 = vrot.lane.b32.xlu0 %v2268, 32
        %v2587 = vpop.permute.xlu0 %2586
        %2588 = vrot.lane.b32.xlu0 %v2273, 32
        %v2589 = vpop.permute.xlu0 %2588
        %2590 = vrot.lane.b32.xlu0 %v2276, 32
        %v2591 = vpop.permute.xlu0 %2590
        %2592 = vrot.lane.b32.xlu0 %v2281, 32
        %v2593 = vpop.permute.xlu0 %2592
        %2594 = vrot.lane.b32.xlu0 %v2284, 32
        %v2595 = vpop.permute.xlu0 %2594
        %2596 = vrot.lane.b32.xlu0 %v2289, 32
        %v2597 = vpop.permute.xlu0 %2596
        %2598 = vrot.lane.b32.xlu0 %v2292, 32
        %v2599 = vpop.permute.xlu0 %2598
        %2600 = vrot.lane.b32.xlu0 %v2297, 32
        %v2601 = vpop.permute.xlu0 %2600
        %2602 = vrot.lane.b32.xlu0 %v2300, 32
        %v2603 = vpop.permute.xlu0 %2602
        %2604 = vrot.lane.b32.xlu0 %v2305, 32
        %v2605 = vpop.permute.xlu0 %2604
        %2606 = vrot.lane.b32.xlu0 %v2308, 32
        %v2607 = vpop.permute.xlu0 %2606
        %2608 = vrot.lane.b32.xlu0 %v2313, 32
        %v2609 = vpop.permute.xlu0 %2608
        %2610 = vrot.lane.b32.xlu0 %v2316, 32
        %v2611 = vpop.permute.xlu0 %2610
        %2612 = vrot.lane.b32.xlu0 %v2321, 32
        %v2613 = vpop.permute.xlu0 %2612
        %2614 = vrot.lane.b32.xlu0 %v2324, 32
        %v2615 = vpop.permute.xlu0 %2614
        %v2632 = vsel %vm1137, %v1606, %v2585
        %v2633 = vsel %vm1137, %v1609, %v2587
        %v2634 = vsel %vm1137, %v1614, %v2589
        %v2635 = vsel %vm1137, %v1617, %v2591
        %v2636 = vsel %vm1137, %v1622, %v2593
        %v2637 = vsel %vm1137, %v1625, %v2595
        %v2638 = vsel %vm1137, %v1630, %v2597
        %v2639 = vsel %vm1137, %v1633, %v2599
        %v2640 = vsel %vm1137, %v1638, %v2601
        %v2641 = vsel %vm1137, %v1641, %v2603
        %v2642 = vsel %vm1137, %v1646, %v2605
        %v2643 = vsel %vm1137, %v1649, %v2607
        %v2644 = vsel %vm1137, %v1654, %v2609
        %v2645 = vsel %vm1137, %v1657, %v2611
        %v2646 = vsel %vm1137, %v1662, %v2613
        %v2647 = vsel %vm1137, %v1665, %v2615
        %v2648 = vadd.f32 %v2552, %v2632
        %v2649 = vadd.f32 %v2553, %v2633
        %v2650 = vadd.f32 %v2554, %v2634
        %v2651 = vadd.f32 %v2555, %v2635
        %v2652 = vadd.f32 %v2556, %v2636
        %v2653 = vadd.f32 %v2557, %v2637
        %v2654 = vadd.f32 %v2558, %v2638
        %v2655 = vadd.f32 %v2559, %v2639
        %v2656 = vadd.f32 %v2560, %v2640
        %v2657 = vadd.f32 %v2561, %v2641
        %v2658 = vadd.f32 %v2562, %v2642
        %v2659 = vadd.f32 %v2563, %v2643
        %v2660 = vadd.f32 %v2564, %v2644
        %v2661 = vadd.f32 %v2565, %v2645
        %v2662 = vadd.f32 %v2566, %v2646
        %v2663 = vadd.f32 %v2567, %v2647
        %2664 = vst.msk [vmem:[#allocation6] sm:$0xff] %vm2439, %v2648
        %2665 = vst.msk [vmem:[#allocation6 + $0x8] sm:$0xff] %vm2439, %v2649
        %2666 = vst.msk [vmem:[#allocation6 + $0x10] sm:$0xff] %vm2439, %v2650
        %2667 = vst.msk [vmem:[#allocation6 + $0x18] sm:$0xff] %vm2439, %v2651
        %2668 = vst.msk [vmem:[#allocation6 + $0x20] sm:$0xff] %vm2439, %v2652
        %2669 = vst.msk [vmem:[#allocation6 + $0x28] sm:$0xff] %vm2439, %v2653
        %2670 = vst.msk [vmem:[#allocation6 + $0x30] sm:$0xff] %vm2439, %v2654
        %2671 = vst.msk [vmem:[#allocation6 + $0x38] sm:$0xff] %vm2439, %v2655
        %2672 = vst.msk [vmem:[#allocation6 + $0x40] sm:$0xff] %vm2439, %v2656
        %2673 = vst.msk [vmem:[#allocation6 + $0x48] sm:$0xff] %vm2439, %v2657
        %2674 = vst.msk [vmem:[#allocation6 + $0x50] sm:$0xff] %vm2439, %v2658
        %2675 = vst.msk [vmem:[#allocation6 + $0x58] sm:$0xff] %vm2439, %v2659
        %2676 = vst.msk [vmem:[#allocation6 + $0x60] sm:$0xff] %vm2439, %v2660
        %2677 = vst.msk [vmem:[#allocation6 + $0x68] sm:$0xff] %vm2439, %v2661
        %2678 = vst.msk [vmem:[#allocation6 + $0x70] sm:$0xff] %vm2439, %v2662
        %2679 = vst.msk [vmem:[#allocation6 + $0x78] sm:$0xff] %vm2439, %v2663
        %p2680 = scmp.eq.s32.totalorder %s25, 1
        // Predicated region
        $region143: #{attention_with_pair_bias.1} parent=129 // pred_check
          %p2681 = pneg %p2680
        $region144: #{attention_with_pair_bias.1} parent=129 // pred_check_branch
          %2683 = sbr.rel (%p2681) target = $region146
        $region145: #{attention_with_pair_bias.1} parent=129 // pred_region
          %v2684 = vld [vmem:[#allocation6] sm:$0xff]
          %v2685 = vld [vmem:[#allocation6 + $0x8] sm:$0xff]
          %v2686 = vld [vmem:[#allocation6 + $0x10] sm:$0xff]
          %v2687 = vld [vmem:[#allocation6 + $0x18] sm:$0xff]
          %v2688 = vld [vmem:[#allocation6 + $0x20] sm:$0xff]
          %v2689 = vld [vmem:[#allocation6 + $0x28] sm:$0xff]
          %v2690 = vld [vmem:[#allocation6 + $0x30] sm:$0xff]
          %v2691 = vld [vmem:[#allocation6 + $0x38] sm:$0xff]
          %v2692 = vld [vmem:[#allocation6 + $0x40] sm:$0xff]
          %v2693 = vld [vmem:[#allocation6 + $0x48] sm:$0xff]
          %v2694 = vld [vmem:[#allocation6 + $0x50] sm:$0xff]
          %v2695 = vld [vmem:[#allocation6 + $0x58] sm:$0xff]
          %v2696 = vld [vmem:[#allocation6 + $0x60] sm:$0xff]
          %v2697 = vld [vmem:[#allocation6 + $0x68] sm:$0xff]
          %v2698 = vld [vmem:[#allocation6 + $0x70] sm:$0xff]
          %v2699 = vld [vmem:[#allocation6 + $0x78] sm:$0xff]
          %v2700 = vld [vmem:[#allocation5] sm:$0xff]
          %v2701 = vld [vmem:[#allocation5 + $0x8] sm:$0xff]
          %v2702 = vld [vmem:[#allocation5 + $0x10] sm:$0xff]
          %v2703 = vld [vmem:[#allocation5 + $0x18] sm:$0xff]
          %v2704 = vld [vmem:[#allocation5 + $0x20] sm:$0xff]
          %v2705 = vld [vmem:[#allocation5 + $0x28] sm:$0xff]
          %v2706 = vld [vmem:[#allocation5 + $0x30] sm:$0xff]
          %v2707 = vld [vmem:[#allocation5 + $0x38] sm:$0xff]
          %v2708 = vld [vmem:[#allocation5 + $0x40] sm:$0xff]
          %v2709 = vld [vmem:[#allocation5 + $0x48] sm:$0xff]
          %v2710 = vld [vmem:[#allocation5 + $0x50] sm:$0xff]
          %v2711 = vld [vmem:[#allocation5 + $0x58] sm:$0xff]
          %v2712 = vld [vmem:[#allocation5 + $0x60] sm:$0xff]
          %v2713 = vld [vmem:[#allocation5 + $0x68] sm:$0xff]
          %v2714 = vld [vmem:[#allocation5 + $0x70] sm:$0xff]
          %v2715 = vld [vmem:[#allocation5 + $0x78] sm:$0xff]
          %v2716 = vrcp.pop %v2700
          %v2717 = vmul.f32 %v2684, %v2716
          %v2718 = vrcp.pop %v2701
          %v2719 = vmul.f32 %v2685, %v2718
          %v2720 = vrcp.pop %v2702
          %v2721 = vmul.f32 %v2686, %v2720
          %v2722 = vrcp.pop %v2703
          %v2723 = vmul.f32 %v2687, %v2722
          %v2724 = vrcp.pop %v2704
          %v2725 = vmul.f32 %v2688, %v2724
          %v2726 = vrcp.pop %v2705
          %v2727 = vmul.f32 %v2689, %v2726
          %v2728 = vrcp.pop %v2706
          %v2729 = vmul.f32 %v2690, %v2728
          %v2730 = vrcp.pop %v2707
          %v2731 = vmul.f32 %v2691, %v2730
          %v2732 = vrcp.pop %v2708
          %v2733 = vmul.f32 %v2692, %v2732
          %v2734 = vrcp.pop %v2709
          %v2735 = vmul.f32 %v2693, %v2734
          %v2736 = vrcp.pop %v2710
          %v2737 = vmul.f32 %v2694, %v2736
          %v2738 = vrcp.pop %v2711
          %v2739 = vmul.f32 %v2695, %v2738
          %v2740 = vrcp.pop %v2712
          %v2741 = vmul.f32 %v2696, %v2740
          %v2742 = vrcp.pop %v2713
          %v2743 = vmul.f32 %v2697, %v2742
          %v2744 = vrcp.pop %v2714
          %v2745 = vmul.f32 %v2698, %v2744
          %v2746 = vrcp.pop %v2715
          %v2747 = vmul.f32 %v2699, %v2746
          %v2748 = vpack.c.bf16 %v2719, %v2717
          %v2749 = vpack.c.bf16 %v2723, %v2721
          %v2750 = vpack.c.bf16 %v2727, %v2725
          %v2751 = vpack.c.bf16 %v2731, %v2729
          %v2752 = vpack.c.bf16 %v2735, %v2733
          %v2753 = vpack.c.bf16 %v2739, %v2737
          %v2754 = vpack.c.bf16 %v2743, %v2741
          %v2755 = vpack.c.bf16 %v2747, %v2745
          %v2756 = vld [vmem:[%s7] sm:$0xf]
          %v2757 = vld [vmem:[%s7 + $0x4] sm:$0xf]
          %v2758 = vld [vmem:[%s7 + $0x8] sm:$0xf]
          %v2759 = vld [vmem:[%s7 + $0xc] sm:$0xf]
          %v2760 = vld [vmem:[%s7 + $0x10] sm:$0xf]
          %v2761 = vld [vmem:[%s7 + $0x14] sm:$0xf]
          %v2762 = vld [vmem:[%s7 + $0x18] sm:$0xf]
          %v2763 = vld [vmem:[%s7 + $0x1c] sm:$0xf]
          %v2764 = vld [vmem:[%s8] sm:$0x1]
          %v2766 = vlaneseq
          %v2767 = vshrl.u32 %v2766, 7
          %v2768 = vsub.s32 0, %v2767
          %v2769 = vrot.slane %v2764, %v2768
          %v2779 = vunpack.c.l.b16 %v2756
          %v2780 = vunpack.c.l.b16 %v2757
          %v2781 = vunpack.c.l.b16 %v2758
          %v2782 = vunpack.c.l.b16 %v2759
          %v2783 = vunpack.c.l.b16 %v2760
          %v2784 = vunpack.c.l.b16 %v2761
          %v2785 = vunpack.c.l.b16 %v2762
          %v2786 = vunpack.c.l.b16 %v2763
          %v2787 = vpack.c.b16 %v2780, %v2779
          %v2788 = vpack.c.b16 %v2782, %v2781
          %v2789 = vpack.c.b16 %v2784, %v2783
          %v2790 = vpack.c.b16 %v2786, %v2785
          %v2796 = vsel %vm2439, %v2748, 0
          %v2799 = vsel %vm2439, %v2749, 0
          %v2802 = vsel %vm2439, %v2750, 0
          %v2805 = vsel %vm2439, %v2751, 0
          %v2808 = vsel %vm2439, %v2752, 0
          %v2811 = vsel %vm2439, %v2753, 0
          %v2814 = vsel %vm2439, %v2754, 0
          %v2817 = vsel %vm2439, %v2755, 0
          %2819 = vmatprep.subr.bf16.mxu0 0
          %2820 = vmatpush1.bf16.msra.mxu0 %v2787
          %2821 = vmatprep.subr.bf16.mxu0 0
          %2822 = vmatpush1.bf16.msra.mxu0 %v2788
          %2823 = vmatprep.subr.bf16.mxu0 0
          %2824 = vmatpush1.bf16.msra.mxu0 %v2789
          %2825 = vmatprep.subr.bf16.mxu0 0
          %2826 = vmatpush1.bf16.msra.mxu0 %v2790
          %2827 = vmatprep.subr.bf16.mxu0 0
          %2828 = vmatpush1.bf16.msra.mxu0 0
          %2829 = vmatprep.subr.bf16.mxu0 0
          %2830 = vmatpush1.bf16.msra.mxu0 0
          %2831 = vmatprep.subr.bf16.mxu0 0
          %2832 = vmatpush1.bf16.msra.mxu0 0
          %2833 = vmatprep.subr.bf16.mxu0 0
          %2834 = vmatpush1.bf16.msra.mxu0 0
          %2835 = vmatprep.subr.bf16.mxu0 0
          %2836 = vmatpush1.bf16.msra.mxu0 0
          %2837 = vmatprep.subr.bf16.mxu0 0
          %2838 = vmatpush1.bf16.msra.mxu0 0
          %2839 = vmatprep.subr.bf16.mxu0 0
          %2840 = vmatpush1.bf16.msra.mxu0 0
          %2841 = vmatprep.subr.bf16.mxu0 0
          %2842 = vmatpush1.bf16.msra.mxu0 0
          %2843 = vmatprep.subr.bf16.mxu0 0
          %2844 = vmatpush1.bf16.msra.mxu0 0
          %2845 = vmatprep.subr.bf16.mxu0 0
          %2846 = vmatpush1.bf16.msra.mxu0 0
          %2847 = vmatprep.subr.bf16.mxu0 0
          %2848 = vmatpush1.bf16.msra.mxu0 0
          %2849 = vmatprep.subr.bf16.mxu0 0
          %2850 = vmatpush1.bf16.msra.mxu0 0
          %2851 = vmatprep.mubr.bf16.mxu0 0
          %2852 = vmatmul.mubr.bf16.gmra.mrb[0].mxu0 %v2796
          %v2853 = vpop.f32.mrb[0].mxu0
          %v2854 = vadd.f32 %v2769, %v2853
          %v2855 = vpop.f32.mrb[0].mxu0
          %v2856 = vpop.f32.mrb[0].mxu0
          %v2857 = vadd.f32 %v2769, %v2856
          %v2858 = vpop.f32.mrb[0].mxu0
          %2859 = vmatprep.mubr.bf16.mxu0 0
          %2860 = vmatmul.mubr.bf16.gmra.mrb[0].mxu0 %v2799
          %v2861 = vpop.f32.mrb[0].mxu0
          %v2862 = vadd.f32 %v2769, %v2861
          %v2863 = vpop.f32.mrb[0].mxu0
          %v2864 = vpop.f32.mrb[0].mxu0
          %v2865 = vadd.f32 %v2769, %v2864
          %v2866 = vpop.f32.mrb[0].mxu0
          %2867 = vmatprep.mubr.bf16.mxu0 0
          %2868 = vmatmul.mubr.bf16.gmra.mrb[0].mxu0 %v2802
          %v2869 = vpop.f32.mrb[0].mxu0
          %v2870 = vadd.f32 %v2769, %v2869
          %v2871 = vpop.f32.mrb[0].mxu0
          %v2872 = vpop.f32.mrb[0].mxu0
          %v2873 = vadd.f32 %v2769, %v2872
          %v2874 = vpop.f32.mrb[0].mxu0
          %2875 = vmatprep.mubr.bf16.mxu0 0
          %2876 = vmatmul.mubr.bf16.gmra.mrb[0].mxu0 %v2805
          %v2877 = vpop.f32.mrb[0].mxu0
          %v2878 = vadd.f32 %v2769, %v2877
          %v2879 = vpop.f32.mrb[0].mxu0
          %v2880 = vpop.f32.mrb[0].mxu0
          %v2881 = vadd.f32 %v2769, %v2880
          %v2882 = vpop.f32.mrb[0].mxu0
          %2883 = vmatprep.mubr.bf16.mxu0 0
          %2884 = vmatmul.mubr.bf16.gmra.mrb[0].mxu0 %v2808
          %v2885 = vpop.f32.mrb[0].mxu0
          %v2886 = vadd.f32 %v2769, %v2885
          %v2887 = vpop.f32.mrb[0].mxu0
          %v2888 = vpop.f32.mrb[0].mxu0
          %v2889 = vadd.f32 %v2769, %v2888
          %v2890 = vpop.f32.mrb[0].mxu0
          %2891 = vmatprep.mubr.bf16.mxu0 0
          %2892 = vmatmul.mubr.bf16.gmra.mrb[0].mxu0 %v2811
          %v2893 = vpop.f32.mrb[0].mxu0
          %v2894 = vadd.f32 %v2769, %v2893
          %v2895 = vpop.f32.mrb[0].mxu0
          %v2896 = vpop.f32.mrb[0].mxu0
          %v2897 = vadd.f32 %v2769, %v2896
          %v2898 = vpop.f32.mrb[0].mxu0
          %2899 = vmatprep.mubr.bf16.mxu0 0
          %2900 = vmatmul.mubr.bf16.gmra.mrb[0].mxu0 %v2814
          %v2901 = vpop.f32.mrb[0].mxu0
          %v2902 = vadd.f32 %v2769, %v2901
          %v2903 = vpop.f32.mrb[0].mxu0
          %v2904 = vpop.f32.mrb[0].mxu0
          %v2905 = vadd.f32 %v2769, %v2904
          %v2906 = vpop.f32.mrb[0].mxu0
          %2907 = vmatprep.mubr.bf16.mxu0 0
          %2908 = vmatmul.mubr.bf16.gmra.mrb[0].mxu0 %v2817
          %v2909 = vpop.f32.mrb[0].mxu0
          %v2910 = vadd.f32 %v2769, %v2909
          %v2911 = vpop.f32.mrb[0].mxu0
          %v2912 = vpop.f32.mrb[0].mxu0
          %v2913 = vadd.f32 %v2769, %v2912
          %v2914 = vpop.f32.mrb[0].mxu0
          %2915 = vdwg.mxu0
          %v2916 = vld [vmem:[#allocation3] sm:$0xff]
          %v2917 = vld [vmem:[#allocation3 + $0x8] sm:$0xff]
          %v2918 = vld [vmem:[#allocation3 + $0x10] sm:$0xff]
          %v2919 = vld [vmem:[#allocation3 + $0x18] sm:$0xff]
          %v2920 = vld [vmem:[#allocation3 + $0x20] sm:$0xff]
          %v2921 = vld [vmem:[#allocation3 + $0x28] sm:$0xff]
          %v2922 = vld [vmem:[#allocation3 + $0x30] sm:$0xff]
          %v2923 = vld [vmem:[#allocation3 + $0x38] sm:$0xff]
          %v2924 = vld [vmem:[#allocation3 + $0x40] sm:$0xff]
          %v2925 = vld [vmem:[#allocation3 + $0x48] sm:$0xff]
          %v2926 = vld [vmem:[#allocation3 + $0x50] sm:$0xff]
          %v2927 = vld [vmem:[#allocation3 + $0x58] sm:$0xff]
          %v2928 = vld [vmem:[#allocation3 + $0x60] sm:$0xff]
          %v2929 = vld [vmem:[#allocation3 + $0x68] sm:$0xff]
          %v2930 = vld [vmem:[#allocation3 + $0x70] sm:$0xff]
          %v2931 = vld [vmem:[#allocation3 + $0x78] sm:$0xff]
          %v2932 = vmul.f32 %v2854, %v2916
          %v2933 = vmul.f32 %v2857, %v2917
          %v2934 = vmul.f32 %v2862, %v2918
          %v2935 = vmul.f32 %v2865, %v2919
          %v2936 = vmul.f32 %v2870, %v2920
          %v2937 = vmul.f32 %v2873, %v2921
          %v2938 = vmul.f32 %v2878, %v2922
          %v2939 = vmul.f32 %v2881, %v2923
          %v2940 = vmul.f32 %v2886, %v2924
          %v2941 = vmul.f32 %v2889, %v2925
          %v2942 = vmul.f32 %v2894, %v2926
          %v2943 = vmul.f32 %v2897, %v2927
          %v2944 = vmul.f32 %v2902, %v2928
          %v2945 = vmul.f32 %v2905, %v2929
          %v2946 = vmul.f32 %v2910, %v2930
          %v2947 = vmul.f32 %v2913, %v2931
          %2948 = vst.msk [vmem:[%s648] sm:$0xff] %vm2439, %v2932
          %2949 = vst.msk [vmem:[%s648 + $0x8] sm:$0xff] %vm2439, %v2933
          %2950 = vst.msk [vmem:[%s648 + $0x10] sm:$0xff] %vm2439, %v2934
          %2951 = vst.msk [vmem:[%s648 + $0x18] sm:$0xff] %vm2439, %v2935
          %2952 = vst.msk [vmem:[%s648 + $0x20] sm:$0xff] %vm2439, %v2936
          %2953 = vst.msk [vmem:[%s648 + $0x28] sm:$0xff] %vm2439, %v2937
          %2954 = vst.msk [vmem:[%s648 + $0x30] sm:$0xff] %vm2439, %v2938
          %2955 = vst.msk [vmem:[%s648 + $0x38] sm:$0xff] %vm2439, %v2939
          %2956 = vst.msk [vmem:[%s648 + $0x40] sm:$0xff] %vm2439, %v2940
          %2957 = vst.msk [vmem:[%s648 + $0x48] sm:$0xff] %vm2439, %v2941
          %2958 = vst.msk [vmem:[%s648 + $0x50] sm:$0xff] %vm2439, %v2942
          %2959 = vst.msk [vmem:[%s648 + $0x58] sm:$0xff] %vm2439, %v2943
          %2960 = vst.msk [vmem:[%s648 + $0x60] sm:$0xff] %vm2439, %v2944
          %2961 = vst.msk [vmem:[%s648 + $0x68] sm:$0xff] %vm2439, %v2945
          %2962 = vst.msk [vmem:[%s648 + $0x70] sm:$0xff] %vm2439, %v2946
          %2963 = vst.msk [vmem:[%s648 + $0x78] sm:$0xff] %vm2439, %v2947
        $region146: #{attention_with_pair_bias.1} parent=129 // pred_fallthru
          _
        %s2964 = smul.u32 16, %s24
        %p2965 = scmp.lt.s32.totalorder %s2964, 31
        %s2966 = scalar_select %p2965, %s2964, 31
        %s2967 = smul.addr %s2966, 8
        %s2968 = scalar_lea.vmem %s9, %s2967
        // Predicated region
        $region147: #{attention_with_pair_bias.1} parent=129 // pred_check
          %p2969 = pneg %p261
        $region148: #{attention_with_pair_bias.1} parent=129 // pred_check_branch
          %2971 = sbr.rel (%p2969) target = $region150
        $region149: #{attention_with_pair_bias.1} parent=129 // pred_region
          %s2972 = smul.u32 16, %s24
        $region150: #{attention_with_pair_bias.1} parent=129 // pred_fallthru
          _
      $region130: #{attention_with_pair_bias.1} parent=5 // pred_fallthru
        _
      %p2973 = scmp.le.s32.totalorder 2, %s15
      // Predicated region
      $region151: #{attention_with_pair_bias.1} parent=5 // pred_check
        %p2974 = pneg %p2973
      $region152: #{attention_with_pair_bias.1} parent=5 // pred_check_branch
        %2976 = sbr.rel (%p2974) target = $region154
      $region153: #{attention_with_pair_bias.1} parent=5 // pred_region
        %s2977 = ssub.s32 %s15, 2
        // Predicated region
        $region155: #{attention_with_pair_bias.1} parent=153 // pred_check
          %p2978 = pneg %p267
        $region156: #{attention_with_pair_bias.1} parent=153 // pred_check_branch
          %2980 = sbr.rel (%p2978) target = $region158
        $region157: #{attention_with_pair_bias.1} parent=153 // pred_region
          %s2981 = smul.u32 16, %s26
          %p2982 = scmp.lt.s32.totalorder %s2981, 31
          %s2983 = scalar_select %p2982, %s2981, 31
          %s2984 = smul.addr %s2983, 8
          %s2985 = scalar_lea.vmem %s9, %s2984
        $region158: #{attention_with_pair_bias.1} parent=153 // pred_fallthru
          _
      $region154: #{attention_with_pair_bias.1} parent=5 // pred_fallthru
        _
    $region6: #{attention_with_pair_bias.1} parent=1 // loop_footer
      %s19 = sadd.s32 1, %s15
    $region7: #{attention_with_pair_bias.1} parent=1 // loop_footer_branch
      %14 = sbr.rel target = $region3
    $region8: #{attention_with_pair_bias.1} parent=1 // loop_exit
      _

</llo_original>
